<compile_context>
chip_gen: v6e
topology: v6e:2x2x1
jax: 0.10.0
libtpu: 0.0.40
codegen_flags: <defaults>
</compile_context>

<pallas_src>
import functools

import jax
import jax.numpy as jnp
import numpy as np
from jax.experimental import pallas as pl
from jax.experimental.pallas import tpu as pltpu

_LANE = 128


def _round_up(x, m):
    return (x + m - 1) // m * m


def _vlml_kernel(memT_ref, outmemT_ref, z_ref, seq_ref, w_ref, b_ref,
                 attn_ref, out_ref, *, hops, approx_recip, mxu_precision):
    """One batch tile (batch on lanes), all hops (hops is static -> unrolled).

    memT_ref:    [L, D, TB]    memory matrix M, batch-last (bf16 or f32)
    outmemT_ref: [L, D, TB]    output memory C, batch-last
    z_ref:       [D, TB]       initial query z = user_query + item_query (f32)
    seq_ref:     [1, TB]       int32 sequence lengths
    w_ref:       [n_lin, D, D] nn.Linear weights, PyTorch (out, in) layout (f32)
    b_ref:       [n_lin, D, 1] nn.Linear biases (f32)
    attn_ref:    [hops, L, TB] attention weights per hop (f32, lane-dense)
    out_ref:     [hops, D, TB] weighted outputs per hop (f32, lane-dense)
    """
    f32 = jnp.float32
    neg_cap = jnp.finfo(f32).min          # same clamp value the PyTorch mask_mod uses
    L, D, tb = memT_ref.shape

    pos = jax.lax.broadcasted_iota(jnp.int32, (L, tb), 0)
    valid = pos < seq_ref[...]            # [L, TB]

    z = z_ref[...]                        # [D, TB] f32 (small; fine to keep live)
    prev = None

    for hop in range(hops):
        if hop > 0:
            # z <- relu(W z + b + prev).  Batch rides the matmul N dimension, so
            # this is ONE MXU matmul per hop (not TB degenerate M=1 matmuls).
            lin = jnp.dot(w_ref[hop - 1], z, preferred_element_type=f32,
                          precision=mxu_precision)
            z = jnp.maximum(lin + b_ref[hop - 1] + prev, 0.0)

        # scores[l, b] = <memory[b, l, :], z[b, :]>  -- VPU multiply + sublane reduce,
        # one [D, TB] slab at a time (bf16 stream upcast slab-by-slab; f32 math).
        rows = []
        for l in range(L):
            m_l = memT_ref[l].astype(f32)                          # [D, TB]
            rows.append(jnp.sum(m_l * z, axis=0, keepdims=True))   # [1, TB]
        s = jnp.concatenate(rows, axis=0)                          # [L, TB]

        # mask_mod: masked positions clamp to float32 min (exp underflows to exactly 0)
        s = jnp.where(valid, s, neg_cap)

        # softmax over L (sublane axis), numerically stabilized, f32 throughout.
        m = jnp.max(s, axis=0, keepdims=True)
        e = jnp.exp(s - m)
        denom = jnp.sum(e, axis=0, keepdims=True)
        if approx_recip:
            attn = e * pl.reciprocal(denom, approx=True)
        else:
            attn = e / denom                                       # [L, TB]
        # NOTE: fully-masked rows (seq==0 batch-padding rows) come out uniform 1/L;
        # the wrapper slices them away and they must never be consumed downstream.

        # weighted[d, b] = sum_l attn[l, b] * output_memory[b, l, d]  -- VPU again,
        # reading output_memory slab-by-slab from the ref (no hoisted full tile).
        acc = jnp.zeros((D, tb), f32)
        for l in range(L):
            acc = acc + outmemT_ref[l].astype(f32) * attn[l:l + 1, :]

        attn_ref[hop] = attn        # [L, TB]  lane-dense store (TB % 128 == 0)
        out_ref[hop] = acc          # [D, TB]  lane-dense store
        prev = acc


def vlml_forward(user_query, item_query, memory, output_memory, seq_length,
                 weights, biases, *, hops, maxlen=32, batch_block=512,
                 memory_dtype=jnp.bfloat16, approx_softmax_recip=False,
                 mxu_precision=None, vmem_limit_bytes=48 * 1024 * 1024,
                 vmem_tile_budget_bytes=24 * 1024 * 1024):
    """Mirrors VariableLengthMemoryLayer.forward; returns a list of hop dicts.

    Intentional differences from the PyTorch module:
      * no host-side cur_max sync / slice: attention weights come back at the full
        padded length L with exact zeros at positions >= seq_length; slice
        [:, :cur_max] outside if the truncated shape is needed.
      * `weights` are the nn.Linear weights in PyTorch (out, in) layout and are used
        as-is (the kernel computes W @ z with batch on the matmul N dimension).
    Fully jittable (hops / shapes / dtypes are static).
    """
    del maxlen  # L is taken from memory.shape; the mask covers all padded positions.
    B, L, D = memory.shape
    n_lin = weights.shape[0]
    hops = int(hops)

    # ---- wrapper-side layout plumbing: batch rides the lane (last) axis ----------
    memT = jnp.transpose(memory.astype(memory_dtype), (1, 2, 0))           # [L, D, B]
    outmemT = jnp.transpose(output_memory.astype(memory_dtype), (1, 2, 0)) # [L, D, B]
    z0 = jnp.transpose((user_query + item_query).astype(jnp.float32))      # [D, B]
    seq = seq_length.astype(jnp.int32).reshape(1, B)                       # [1, B]
    w = weights.astype(jnp.float32)                                        # (out, in)
    b = biases.astype(jnp.float32).reshape(n_lin, D)[..., None]            # [n_lin, D, 1]

    # ---- batch-tile selection (lane-dense, VMEM-budgeted, >=2 steps if possible) --
    Bp = _round_up(B, _LANE)
    mem_item = jnp.dtype(memory_dtype).itemsize

    def tile_bytes(tb):
        stream = 2 * L * D * tb * mem_item            # memT + outmemT tiles
        outs = hops * (L + D) * tb * 4                # attn + weighted tiles (f32)
        small = (D + 1) * tb * 4                      # z0 + seq tiles
        return 2 * (stream + outs + small)            # x2: double-buffered pipeline

    cap = max(_LANE, int(batch_block))
    tb = _LANE
    while (Bp % (tb * 2) == 0 and tb * 2 <= cap
           and tile_bytes(tb * 2) <= vmem_tile_budget_bytes):
        tb *= 2
    if Bp // tb < 2 and Bp >= 2 * _LANE:   # keep >=2 grid steps for v7x's two TCs
        tb //= 2

    if Bp != B:
        pad = Bp - B
        memT = jnp.pad(memT, ((0, 0), (0, 0), (0, pad)))
        outmemT = jnp.pad(outmemT, ((0, 0), (0, 0), (0, pad)))
        z0 = jnp.pad(z0, ((0, 0), (0, pad)))
        seq = jnp.pad(seq, ((0, 0), (0, pad)))        # seq=0 rows are sliced away below

    kernel = functools.partial(_vlml_kernel, hops=hops,
                               approx_recip=approx_softmax_recip,
                               mxu_precision=mxu_precision)

    attnT, outT = pl.pallas_call(
        kernel,
        out_shape=(
            jax.ShapeDtypeStruct((hops, L, Bp), jnp.float32),
            jax.ShapeDtypeStruct((hops, D, Bp), jnp.float32),
        ),
        grid_spec=pltpu.PrefetchScalarGridSpec(
            num_scalar_prefetch=0,
            grid=(Bp // tb,),
            in_specs=[
                pl.BlockSpec((L, D, tb), lambda i: (0, 0, i)),       # memory (streamed)
                pl.BlockSpec((L, D, tb), lambda i: (0, 0, i)),       # output memory
                pl.BlockSpec((D, tb), lambda i: (0, i)),             # z0
                pl.BlockSpec((1, tb), lambda i: (0, i)),             # seq lengths
                pl.BlockSpec((n_lin, D, D), lambda i: (0, 0, 0)),    # weights (resident)
                pl.BlockSpec((n_lin, D, 1), lambda i: (0, 0, 0)),    # biases (resident)
            ],
            out_specs=(
                pl.BlockSpec((hops, L, tb), lambda i: (0, 0, i)),    # lane-dense
                pl.BlockSpec((hops, D, tb), lambda i: (0, 0, i)),    # lane-dense
            ),
        ),
        compiler_params=pltpu.CompilerParams(
            dimension_semantics=("parallel",),
            vmem_limit_bytes=vmem_limit_bytes,
        ),
    )(memT, outmemT, z0, seq, w, b)

    attn = jnp.transpose(attnT, (0, 2, 1))[:, :B]     # [hops, B, L]
    outs = jnp.transpose(outT, (0, 2, 1))[:, :B]      # [hops, B, D]
    return [{'weight': attn[k], 'output': outs[k]} for k in range(hops)]


def reference_forward(user_query, item_query, memory, output_memory, seq_length,
                      weights, biases, *, hops, maxlen=32):
    """Pure-numpy reference with identical semantics to the PyTorch module."""
    uq = np.asarray(user_query, np.float32)
    iq = np.asarray(item_query, np.float32)
    mem_full = np.asarray(memory, np.float32)
    outmem_full = np.asarray(output_memory, np.float32)
    sl = np.asarray(seq_length, np.int32)
    W = np.asarray(weights, np.float32)
    Bv = np.asarray(biases, np.float32).reshape(W.shape[0], -1)

    cur_max = int(sl.max())
    mem = mem_full[:, :cur_max]
    outmem = outmem_full[:, :cur_max]
    finfo = np.finfo(np.float32)

    kept = (np.arange(maxlen)[None, :] < sl[:, None]).astype(np.float32)
    lower_bound = (finfo.max * kept + finfo.min * (1.0 - kept))[:, :cur_max]

    def attend(z):
        scores = np.sum(mem * z[:, None, :], axis=2)
        scores = np.minimum(scores, lower_bound)
        m = scores.max(axis=-1, keepdims=True)
        e = np.exp(scores - m)
        attn = e / e.sum(axis=-1, keepdims=True)
        out = np.sum(outmem * attn[:, :, None], axis=1)
        return attn, out

    z = uq + iq
    results, prev = [], None
    for hop in range(hops):
        if hop > 0:
            z = np.maximum(z @ W[hop - 1].T + Bv[hop - 1] + prev, 0.0)
        attn, out = attend(z)
        results.append({'weight': attn, 'output': out})
        prev = out
    return results


if __name__ == "__main__":
    B, D, MAXLEN, HOPS = 2, 32, 8, 3

    key = jax.random.PRNGKey(0)
    k_uq, k_iq, k_mem, k_out, k_w = jax.random.split(key, 5)

    user_query = jax.random.normal(k_uq, (B, D), jnp.float32)
    item_query = jax.random.normal(k_iq, (B, D), jnp.float32)
    memory = jax.random.normal(k_mem, (B, MAXLEN, D), jnp.float32)
    output_memory = jax.random.normal(k_out, (B, MAXLEN, D), jnp.float32)
    seq_length = jnp.array([5, 7], dtype=jnp.int32)

    # Parameters: kaiming_normal_ weights (fan_in=D, gain sqrt(2)), bias = 1.0.
    n_lin = max(HOPS - 1, 1)
    weights = jax.random.normal(k_w, (n_lin, D, D), jnp.float32) * jnp.sqrt(2.0 / D)
    biases = jnp.ones((n_lin, 1, D), jnp.float32)

    def run(**overrides):
        fwd = jax.jit(functools.partial(vlml_forward, hops=HOPS, maxlen=MAXLEN,
                                        **overrides))
        outs = fwd(user_query, item_query, memory, output_memory,
                   seq_length, weights, biases)
        for h in outs:
            jax.block_until_ready(h['weight'])
            jax.block_until_ready(h['output'])
        return outs

    ref = reference_forward(user_query, item_query, memory, output_memory,
                            seq_length, weights, biases, hops=HOPS, maxlen=MAXLEN)
    cur_max = int(np.asarray(seq_length).max())

    def check(hop_outputs, tol):
        ok = True
        for got, want in zip(hop_outputs, ref):
            w_got = np.asarray(got['weight'])
            o_got = np.asarray(got['output'])
            # Attention matches PyTorch on the first cur_max positions ...
            ok &= np.allclose(w_got[:, :cur_max], want['weight'], rtol=tol, atol=tol)
            # ... and is exactly zero on the padded tail (mask -> exp underflow to 0).
            ok &= np.allclose(w_got[:, cur_max:], 0.0, atol=1e-6)
            ok &= np.allclose(o_got, want['output'], rtol=tol, atol=tol)
        return ok

    # 1) Verification config: f32 streams + full-precision MXU for the hop Linears.
    try:
        exact = run(memory_dtype=jnp.float32,
                    mxu_precision=jax.lax.Precision.HIGHEST)
        tol_exact = 2e-3
    except Exception:
        # If this Mosaic build rejects the explicit dot precision, fall back to the
        # default MXU precision (bf16 passes) and widen the tolerance accordingly.
        exact = run(memory_dtype=jnp.float32, mxu_precision=None)
        tol_exact = 5e-2
    ok = check(exact, tol_exact)

    # 2) Production defaults: bf16 memory streams + default MXU precision.
    fast = run()
    ok &= check(fast, 1e-1)

    if ok:
        print("KERNEL_OK")
    else:
        raise SystemExit("mismatch vs reference")
</pallas_src>

<mosaic_0001>
module attributes {stable_mosaic.version = 11 : i64} {
  func.func @_vlml_kernel(%arg0: i32, %arg1: memref<8x32x128xf32, #tpu.memory_space<vmem>>, %arg2: memref<8x32x128xf32, #tpu.memory_space<vmem>>, %arg3: memref<32x128xf32, #tpu.memory_space<vmem>>, %arg4: memref<1x128xi32, #tpu.memory_space<vmem>>, %arg5: memref<2x32x32xf32, #tpu.memory_space<vmem>>, %arg6: memref<2x32x1xf32, #tpu.memory_space<vmem>>, %arg7: memref<3x8x128xf32, #tpu.memory_space<vmem>>, %arg8: memref<3x32x128xf32, #tpu.memory_space<vmem>>) attributes {dimension_semantics = [#tpu.dimension_semantics<parallel>], iteration_bounds = array<i64: 1>, scalar_prefetch = 0 : i64, scratch_operands = 0 : i64, tpu.core_type = #tpu.core_type<tc>, window_params = [{transform_indices = @transform_0, window_bounds = array<i64: 8, 32, 128>}, {transform_indices = @transform_1, window_bounds = array<i64: 8, 32, 128>}, {transform_indices = @transform_2, window_bounds = array<i64: 32, 128>}, {transform_indices = @transform_3, window_bounds = array<i64: 1, 128>}, {pipeline_mode = #tpu.pipeline_mode<synchronous>, transform_indices = @transform_4, window_bounds = array<i64: 2, 32, 32>}, {pipeline_mode = #tpu.pipeline_mode<synchronous>, transform_indices = @transform_5, window_bounds = array<i64: 2, 32, 1>}, {transform_indices = @transform_6, window_bounds = array<i64: 3, 8, 128>}, {transform_indices = @transform_7, window_bounds = array<i64: 3, 32, 128>}]} {
    %0 = tpu.iota {dimensions = array<i32: 0>} : vector<8x128xi32>
    %c0 = arith.constant 0 : index
    %c0_0 = arith.constant 0 : index
    %1 = vector.load %arg4[%c0, %c0_0] : memref<1x128xi32, #tpu.memory_space<vmem>>, vector<1x128xi32>
    %2 = vector.broadcast %1 : vector<1x128xi32> to vector<8x128xi32>
    %3 = arith.cmpi slt, %0, %2 : vector<8x128xi32>
    %c0_1 = arith.constant 0 : index
    %c0_2 = arith.constant 0 : index
    %4 = vector.load %arg3[%c0_1, %c0_2] : memref<32x128xf32, #tpu.memory_space<vmem>>, vector<32x128xf32>
    %c0_3 = arith.constant 0 : index
    %c0_4 = arith.constant 0 : index
    %c0_5 = arith.constant 0 : index
    %5 = vector.load %arg1[%c0_3, %c0_4, %c0_5] : memref<8x32x128xf32, #tpu.memory_space<vmem>>, vector<1x32x128xf32>
    %6 = vector.shape_cast %5 : vector<1x32x128xf32> to vector<32x128xf32>
    %7 = arith.mulf %6, %4 : vector<32x128xf32>
    %cst = arith.constant dense<0.000000e+00> : vector<128xf32>
    %8 = vector.multi_reduction <add>, %7, %cst [0] : vector<32x128xf32> to vector<128xf32>
    %9 = vector.shape_cast %8 : vector<128xf32> to vector<1x128xf32>
    %c1 = arith.constant 1 : index
    %c0_6 = arith.constant 0 : index
    %c0_7 = arith.constant 0 : index
    %10 = vector.load %arg1[%c1, %c0_6, %c0_7] : memref<8x32x128xf32, #tpu.memory_space<vmem>>, vector<1x32x128xf32>
    %11 = vector.shape_cast %10 : vector<1x32x128xf32> to vector<32x128xf32>
    %12 = arith.mulf %11, %4 : vector<32x128xf32>
    %cst_8 = arith.constant dense<0.000000e+00> : vector<128xf32>
    %13 = vector.multi_reduction <add>, %12, %cst_8 [0] : vector<32x128xf32> to vector<128xf32>
    %14 = vector.shape_cast %13 : vector<128xf32> to vector<1x128xf32>
    %c2 = arith.constant 2 : index
    %c0_9 = arith.constant 0 : index
    %c0_10 = arith.constant 0 : index
    %15 = vector.load %arg1[%c2, %c0_9, %c0_10] : memref<8x32x128xf32, #tpu.memory_space<vmem>>, vector<1x32x128xf32>
    %16 = vector.shape_cast %15 : vector<1x32x128xf32> to vector<32x128xf32>
    %17 = arith.mulf %16, %4 : vector<32x128xf32>
    %cst_11 = arith.constant dense<0.000000e+00> : vector<128xf32>
    %18 = vector.multi_reduction <add>, %17, %cst_11 [0] : vector<32x128xf32> to vector<128xf32>
    %19 = vector.shape_cast %18 : vector<128xf32> to vector<1x128xf32>
    %c3 = arith.constant 3 : index
    %c0_12 = arith.constant 0 : index
    %c0_13 = arith.constant 0 : index
    %20 = vector.load %arg1[%c3, %c0_12, %c0_13] : memref<8x32x128xf32, #tpu.memory_space<vmem>>, vector<1x32x128xf32>
    %21 = vector.shape_cast %20 : vector<1x32x128xf32> to vector<32x128xf32>
    %22 = arith.mulf %21, %4 : vector<32x128xf32>
    %cst_14 = arith.constant dense<0.000000e+00> : vector<128xf32>
    %23 = vector.multi_reduction <add>, %22, %cst_14 [0] : vector<32x128xf32> to vector<128xf32>
    %24 = vector.shape_cast %23 : vector<128xf32> to vector<1x128xf32>
    %c4 = arith.constant 4 : index
    %c0_15 = arith.constant 0 : index
    %c0_16 = arith.constant 0 : index
    %25 = vector.load %arg1[%c4, %c0_15, %c0_16] : memref<8x32x128xf32, #tpu.memory_space<vmem>>, vector<1x32x128xf32>
    %26 = vector.shape_cast %25 : vector<1x32x128xf32> to vector<32x128xf32>
    %27 = arith.mulf %26, %4 : vector<32x128xf32>
    %cst_17 = arith.constant dense<0.000000e+00> : vector<128xf32>
    %28 = vector.multi_reduction <add>, %27, %cst_17 [0] : vector<32x128xf32> to vector<128xf32>
    %29 = vector.shape_cast %28 : vector<128xf32> to vector<1x128xf32>
    %c5 = arith.constant 5 : index
    %c0_18 = arith.constant 0 : index
    %c0_19 = arith.constant 0 : index
    %30 = vector.load %arg1[%c5, %c0_18, %c0_19] : memref<8x32x128xf32, #tpu.memory_space<vmem>>, vector<1x32x128xf32>
    %31 = vector.shape_cast %30 : vector<1x32x128xf32> to vector<32x128xf32>
    %32 = arith.mulf %31, %4 : vector<32x128xf32>
    %cst_20 = arith.constant dense<0.000000e+00> : vector<128xf32>
    %33 = vector.multi_reduction <add>, %32, %cst_20 [0] : vector<32x128xf32> to vector<128xf32>
    %34 = vector.shape_cast %33 : vector<128xf32> to vector<1x128xf32>
    %c6 = arith.constant 6 : index
    %c0_21 = arith.constant 0 : index
    %c0_22 = arith.constant 0 : index
    %35 = vector.load %arg1[%c6, %c0_21, %c0_22] : memref<8x32x128xf32, #tpu.memory_space<vmem>>, vector<1x32x128xf32>
    %36 = vector.shape_cast %35 : vector<1x32x128xf32> to vector<32x128xf32>
    %37 = arith.mulf %36, %4 : vector<32x128xf32>
    %cst_23 = arith.constant dense<0.000000e+00> : vector<128xf32>
    %38 = vector.multi_reduction <add>, %37, %cst_23 [0] : vector<32x128xf32> to vector<128xf32>
    %39 = vector.shape_cast %38 : vector<128xf32> to vector<1x128xf32>
    %c7 = arith.constant 7 : index
    %c0_24 = arith.constant 0 : index
    %c0_25 = arith.constant 0 : index
    %40 = vector.load %arg1[%c7, %c0_24, %c0_25] : memref<8x32x128xf32, #tpu.memory_space<vmem>>, vector<1x32x128xf32>
    %41 = vector.shape_cast %40 : vector<1x32x128xf32> to vector<32x128xf32>
    %42 = arith.mulf %41, %4 : vector<32x128xf32>
    %cst_26 = arith.constant dense<0.000000e+00> : vector<128xf32>
    %43 = vector.multi_reduction <add>, %42, %cst_26 [0] : vector<32x128xf32> to vector<128xf32>
    %44 = vector.shape_cast %43 : vector<128xf32> to vector<1x128xf32>
    %45 = tpu.concatenate %9, %14, %19, %24, %29, %34, %39, %44 in 0 : vector<1x128xf32>, vector<1x128xf32>, vector<1x128xf32>, vector<1x128xf32>, vector<1x128xf32>, vector<1x128xf32>, vector<1x128xf32>, vector<1x128xf32> -> vector<8x128xf32>
    %cst_27 = arith.constant -3.40282347E+38 : f32
    %46 = vector.broadcast %cst_27 : f32 to vector<8x128xf32>
    %47 = arith.select %3, %45, %46 : vector<8x128xi1>, vector<8x128xf32>
    %cst_28 = arith.constant dense<0xFF800000> : vector<128xf32>
    %48 = vector.multi_reduction <maximumf>, %47, %cst_28 [0] : vector<8x128xf32> to vector<128xf32>
    %49 = vector.shape_cast %48 : vector<128xf32> to vector<1x128xf32>
    %50 = vector.broadcast %49 : vector<1x128xf32> to vector<8x128xf32>
    %51 = arith.subf %47, %50 : vector<8x128xf32>
    %52 = math.exp %51 : vector<8x128xf32>
    %cst_29 = arith.constant dense<0.000000e+00> : vector<128xf32>
    %53 = vector.multi_reduction <add>, %52, %cst_29 [0] : vector<8x128xf32> to vector<128xf32>
    %54 = vector.shape_cast %53 : vector<128xf32> to vector<1x128xf32>
    %55 = vector.broadcast %54 : vector<1x128xf32> to vector<8x128xf32>
    %56 = arith.divf %52, %55 : vector<8x128xf32>
    %cst_30 = arith.constant 0.000000e+00 : f32
    %57 = vector.broadcast %cst_30 : f32 to vector<32x128xf32>
    %c0_31 = arith.constant 0 : index
    %c0_32 = arith.constant 0 : index
    %c0_33 = arith.constant 0 : index
    %58 = vector.load %arg2[%c0_31, %c0_32, %c0_33] : memref<8x32x128xf32, #tpu.memory_space<vmem>>, vector<1x32x128xf32>
    %59 = vector.shape_cast %58 : vector<1x32x128xf32> to vector<32x128xf32>
    %60 = vector.extract_strided_slice %56 {offsets = [0, 0], sizes = [1, 128], strides = [1, 1]} : vector<8x128xf32> to vector<1x128xf32>
    %61 = vector.broadcast %60 : vector<1x128xf32> to vector<32x128xf32>
    %62 = arith.mulf %59, %61 : vector<32x128xf32>
    %63 = arith.addf %57, %62 : vector<32x128xf32>
    %c1_34 = arith.constant 1 : index
    %c0_35 = arith.constant 0 : index
    %c0_36 = arith.constant 0 : index
    %64 = vector.load %arg2[%c1_34, %c0_35, %c0_36] : memref<8x32x128xf32, #tpu.memory_space<vmem>>, vector<1x32x128xf32>
    %65 = vector.shape_cast %64 : vector<1x32x128xf32> to vector<32x128xf32>
    %66 = vector.extract_strided_slice %56 {offsets = [1, 0], sizes = [1, 128], strides = [1, 1]} : vector<8x128xf32> to vector<1x128xf32>
    %67 = vector.broadcast %66 : vector<1x128xf32> to vector<32x128xf32>
    %68 = arith.mulf %65, %67 : vector<32x128xf32>
    %69 = arith.addf %63, %68 : vector<32x128xf32>
    %c2_37 = arith.constant 2 : index
    %c0_38 = arith.constant 0 : index
    %c0_39 = arith.constant 0 : index
    %70 = vector.load %arg2[%c2_37, %c0_38, %c0_39] : memref<8x32x128xf32, #tpu.memory_space<vmem>>, vector<1x32x128xf32>
    %71 = vector.shape_cast %70 : vector<1x32x128xf32> to vector<32x128xf32>
    %72 = vector.extract_strided_slice %56 {offsets = [2, 0], sizes = [1, 128], strides = [1, 1]} : vector<8x128xf32> to vector<1x128xf32>
    %73 = vector.broadcast %72 : vector<1x128xf32> to vector<32x128xf32>
    %74 = arith.mulf %71, %73 : vector<32x128xf32>
    %75 = arith.addf %69, %74 : vector<32x128xf32>
    %c3_40 = arith.constant 3 : index
    %c0_41 = arith.constant 0 : index
    %c0_42 = arith.constant 0 : index
    %76 = vector.load %arg2[%c3_40, %c0_41, %c0_42] : memref<8x32x128xf32, #tpu.memory_space<vmem>>, vector<1x32x128xf32>
    %77 = vector.shape_cast %76 : vector<1x32x128xf32> to vector<32x128xf32>
    %78 = vector.extract_strided_slice %56 {offsets = [3, 0], sizes = [1, 128], strides = [1, 1]} : vector<8x128xf32> to vector<1x128xf32>
    %79 = vector.broadcast %78 : vector<1x128xf32> to vector<32x128xf32>
    %80 = arith.mulf %77, %79 : vector<32x128xf32>
    %81 = arith.addf %75, %80 : vector<32x128xf32>
    %c4_43 = arith.constant 4 : index
    %c0_44 = arith.constant 0 : index
    %c0_45 = arith.constant 0 : index
    %82 = vector.load %arg2[%c4_43, %c0_44, %c0_45] : memref<8x32x128xf32, #tpu.memory_space<vmem>>, vector<1x32x128xf32>
    %83 = vector.shape_cast %82 : vector<1x32x128xf32> to vector<32x128xf32>
    %84 = vector.extract_strided_slice %56 {offsets = [4, 0], sizes = [1, 128], strides = [1, 1]} : vector<8x128xf32> to vector<1x128xf32>
    %85 = vector.broadcast %84 : vector<1x128xf32> to vector<32x128xf32>
    %86 = arith.mulf %83, %85 : vector<32x128xf32>
    %87 = arith.addf %81, %86 : vector<32x128xf32>
    %c5_46 = arith.constant 5 : index
    %c0_47 = arith.constant 0 : index
    %c0_48 = arith.constant 0 : index
    %88 = vector.load %arg2[%c5_46, %c0_47, %c0_48] : memref<8x32x128xf32, #tpu.memory_space<vmem>>, vector<1x32x128xf32>
    %89 = vector.shape_cast %88 : vector<1x32x128xf32> to vector<32x128xf32>
    %90 = vector.extract_strided_slice %56 {offsets = [5, 0], sizes = [1, 128], strides = [1, 1]} : vector<8x128xf32> to vector<1x128xf32>
    %91 = vector.broadcast %90 : vector<1x128xf32> to vector<32x128xf32>
    %92 = arith.mulf %89, %91 : vector<32x128xf32>
    %93 = arith.addf %87, %92 : vector<32x128xf32>
    %c6_49 = arith.constant 6 : index
    %c0_50 = arith.constant 0 : index
    %c0_51 = arith.constant 0 : index
    %94 = vector.load %arg2[%c6_49, %c0_50, %c0_51] : memref<8x32x128xf32, #tpu.memory_space<vmem>>, vector<1x32x128xf32>
    %95 = vector.shape_cast %94 : vector<1x32x128xf32> to vector<32x128xf32>
    %96 = vector.extract_strided_slice %56 {offsets = [6, 0], sizes = [1, 128], strides = [1, 1]} : vector<8x128xf32> to vector<1x128xf32>
    %97 = vector.broadcast %96 : vector<1x128xf32> to vector<32x128xf32>
    %98 = arith.mulf %95, %97 : vector<32x128xf32>
    %99 = arith.addf %93, %98 : vector<32x128xf32>
    %c7_52 = arith.constant 7 : index
    %c0_53 = arith.constant 0 : index
    %c0_54 = arith.constant 0 : index
    %100 = vector.load %arg2[%c7_52, %c0_53, %c0_54] : memref<8x32x128xf32, #tpu.memory_space<vmem>>, vector<1x32x128xf32>
    %101 = vector.shape_cast %100 : vector<1x32x128xf32> to vector<32x128xf32>
    %102 = vector.extract_strided_slice %56 {offsets = [7, 0], sizes = [1, 128], strides = [1, 1]} : vector<8x128xf32> to vector<1x128xf32>
    %103 = vector.broadcast %102 : vector<1x128xf32> to vector<32x128xf32>
    %104 = arith.mulf %101, %103 : vector<32x128xf32>
    %105 = arith.addf %99, %104 : vector<32x128xf32>
    %c0_55 = arith.constant 0 : index
    %c0_56 = arith.constant 0 : index
    %c0_57 = arith.constant 0 : index
    %106 = vector.load %arg7[%c0_55, %c0_56, %c0_57] : memref<3x8x128xf32, #tpu.memory_space<vmem>>, vector<1x8x128xf32>
    %107 = vector.shape_cast %106 : vector<1x8x128xf32> to vector<8x128xf32>
    %108 = vector.shape_cast %56 : vector<8x128xf32> to vector<1x8x128xf32>
    tpu.vector_store %arg7[%c0_55, %c0_56, %c0_57], %108 {strides = array<i32>} : memref<3x8x128xf32, #tpu.memory_space<vmem>>, vector<1x8x128xf32>,
    %c0_58 = arith.constant 0 : index
    %c0_59 = arith.constant 0 : index
    %c0_60 = arith.constant 0 : index
    %109 = vector.load %arg8[%c0_58, %c0_59, %c0_60] : memref<3x32x128xf32, #tpu.memory_space<vmem>>, vector<1x32x128xf32>
    %110 = vector.shape_cast %109 : vector<1x32x128xf32> to vector<32x128xf32>
    %111 = vector.shape_cast %105 : vector<32x128xf32> to vector<1x32x128xf32>
    tpu.vector_store %arg8[%c0_58, %c0_59, %c0_60], %111 {strides = array<i32>} : memref<3x32x128xf32, #tpu.memory_space<vmem>>, vector<1x32x128xf32>,
    %c0_61 = arith.constant 0 : index
    %c0_62 = arith.constant 0 : index
    %c0_63 = arith.constant 0 : index
    %112 = vector.load %arg5[%c0_61, %c0_62, %c0_63] : memref<2x32x32xf32, #tpu.memory_space<vmem>>, vector<1x32x32xf32>
    %113 = vector.shape_cast %112 : vector<1x32x32xf32> to vector<32x32xf32>
    %cst_64 = arith.constant dense<0.000000e+00> : vector<32x128xf32>
    %114 = tpu.matmul %113, %4, %cst_64 {dimension_numbers = #tpu.dot_dimension_numbers<[1], [0], [0], [1], [0, 0, 1, 1], [], []>, precision = #tpu.contract_precision<fp32>} : vector<32x32xf32>, vector<32x128xf32>, vector<32x128xf32> -> vector<32x128xf32>
    %c0_65 = arith.constant 0 : index
    %c0_66 = arith.constant 0 : index
    %c0_67 = arith.constant 0 : index
    %115 = vector.load %arg6[%c0_65, %c0_66, %c0_67] : memref<2x32x1xf32, #tpu.memory_space<vmem>>, vector<1x32x1xf32>
    %116 = vector.shape_cast %115 : vector<1x32x1xf32> to vector<32x1xf32>
    %117 = vector.broadcast %116 : vector<32x1xf32> to vector<32x128xf32>
    %118 = arith.addf %114, %117 : vector<32x128xf32>
    %119 = arith.addf %118, %105 : vector<32x128xf32>
    %cst_68 = arith.constant 0.000000e+00 : f32
    %120 = vector.broadcast %cst_68 : f32 to vector<32x128xf32>
    %121 = arith.maximumf %119, %120 : vector<32x128xf32>
    %c0_69 = arith.constant 0 : index
    %c0_70 = arith.constant 0 : index
    %c0_71 = arith.constant 0 : index
    %122 = vector.load %arg1[%c0_69, %c0_70, %c0_71] : memref<8x32x128xf32, #tpu.memory_space<vmem>>, vector<1x32x128xf32>
    %123 = vector.shape_cast %122 : vector<1x32x128xf32> to vector<32x128xf32>
    %124 = arith.mulf %123, %121 : vector<32x128xf32>
    %cst_72 = arith.constant dense<0.000000e+00> : vector<128xf32>
    %125 = vector.multi_reduction <add>, %124, %cst_72 [0] : vector<32x128xf32> to vector<128xf32>
    %126 = vector.shape_cast %125 : vector<128xf32> to vector<1x128xf32>
    %c1_73 = arith.constant 1 : index
    %c0_74 = arith.constant 0 : index
    %c0_75 = arith.constant 0 : index
    %127 = vector.load %arg1[%c1_73, %c0_74, %c0_75] : memref<8x32x128xf32, #tpu.memory_space<vmem>>, vector<1x32x128xf32>
    %128 = vector.shape_cast %127 : vector<1x32x128xf32> to vector<32x128xf32>
    %129 = arith.mulf %128, %121 : vector<32x128xf32>
    %cst_76 = arith.constant dense<0.000000e+00> : vector<128xf32>
    %130 = vector.multi_reduction <add>, %129, %cst_76 [0] : vector<32x128xf32> to vector<128xf32>
    %131 = vector.shape_cast %130 : vector<128xf32> to vector<1x128xf32>
    %c2_77 = arith.constant 2 : index
    %c0_78 = arith.constant 0 : index
    %c0_79 = arith.constant 0 : index
    %132 = vector.load %arg1[%c2_77, %c0_78, %c0_79] : memref<8x32x128xf32, #tpu.memory_space<vmem>>, vector<1x32x128xf32>
    %133 = vector.shape_cast %132 : vector<1x32x128xf32> to vector<32x128xf32>
    %134 = arith.mulf %133, %121 : vector<32x128xf32>
    %cst_80 = arith.constant dense<0.000000e+00> : vector<128xf32>
    %135 = vector.multi_reduction <add>, %134, %cst_80 [0] : vector<32x128xf32> to vector<128xf32>
    %136 = vector.shape_cast %135 : vector<128xf32> to vector<1x128xf32>
    %c3_81 = arith.constant 3 : index
    %c0_82 = arith.constant 0 : index
    %c0_83 = arith.constant 0 : index
    %137 = vector.load %arg1[%c3_81, %c0_82, %c0_83] : memref<8x32x128xf32, #tpu.memory_space<vmem>>, vector<1x32x128xf32>
    %138 = vector.shape_cast %137 : vector<1x32x128xf32> to vector<32x128xf32>
    %139 = arith.mulf %138, %121 : vector<32x128xf32>
    %cst_84 = arith.constant dense<0.000000e+00> : vector<128xf32>
    %140 = vector.multi_reduction <add>, %139, %cst_84 [0] : vector<32x128xf32> to vector<128xf32>
    %141 = vector.shape_cast %140 : vector<128xf32> to vector<1x128xf32>
    %c4_85 = arith.constant 4 : index
    %c0_86 = arith.constant 0 : index
    %c0_87 = arith.constant 0 : index
    %142 = vector.load %arg1[%c4_85, %c0_86, %c0_87] : memref<8x32x128xf32, #tpu.memory_space<vmem>>, vector<1x32x128xf32>
    %143 = vector.shape_cast %142 : vector<1x32x128xf32> to vector<32x128xf32>
    %144 = arith.mulf %143, %121 : vector<32x128xf32>
    %cst_88 = arith.constant dense<0.000000e+00> : vector<128xf32>
    %145 = vector.multi_reduction <add>, %144, %cst_88 [0] : vector<32x128xf32> to vector<128xf32>
    %146 = vector.shape_cast %145 : vector<128xf32> to vector<1x128xf32>
    %c5_89 = arith.constant 5 : index
    %c0_90 = arith.constant 0 : index
    %c0_91 = arith.constant 0 : index
    %147 = vector.load %arg1[%c5_89, %c0_90, %c0_91] : memref<8x32x128xf32, #tpu.memory_space<vmem>>, vector<1x32x128xf32>
    %148 = vector.shape_cast %147 : vector<1x32x128xf32> to vector<32x128xf32>
    %149 = arith.mulf %148, %121 : vector<32x128xf32>
    %cst_92 = arith.constant dense<0.000000e+00> : vector<128xf32>
    %150 = vector.multi_reduction <add>, %149, %cst_92 [0] : vector<32x128xf32> to vector<128xf32>
    %151 = vector.shape_cast %150 : vector<128xf32> to vector<1x128xf32>
    %c6_93 = arith.constant 6 : index
    %c0_94 = arith.constant 0 : index
    %c0_95 = arith.constant 0 : index
    %152 = vector.load %arg1[%c6_93, %c0_94, %c0_95] : memref<8x32x128xf32, #tpu.memory_space<vmem>>, vector<1x32x128xf32>
    %153 = vector.shape_cast %152 : vector<1x32x128xf32> to vector<32x128xf32>
    %154 = arith.mulf %153, %121 : vector<32x128xf32>
    %cst_96 = arith.constant dense<0.000000e+00> : vector<128xf32>
    %155 = vector.multi_reduction <add>, %154, %cst_96 [0] : vector<32x128xf32> to vector<128xf32>
    %156 = vector.shape_cast %155 : vector<128xf32> to vector<1x128xf32>
    %c7_97 = arith.constant 7 : index
    %c0_98 = arith.constant 0 : index
    %c0_99 = arith.constant 0 : index
    %157 = vector.load %arg1[%c7_97, %c0_98, %c0_99] : memref<8x32x128xf32, #tpu.memory_space<vmem>>, vector<1x32x128xf32>
    %158 = vector.shape_cast %157 : vector<1x32x128xf32> to vector<32x128xf32>
    %159 = arith.mulf %158, %121 : vector<32x128xf32>
    %cst_100 = arith.constant dense<0.000000e+00> : vector<128xf32>
    %160 = vector.multi_reduction <add>, %159, %cst_100 [0] : vector<32x128xf32> to vector<128xf32>
    %161 = vector.shape_cast %160 : vector<128xf32> to vector<1x128xf32>
    %162 = tpu.concatenate %126, %131, %136, %141, %146, %151, %156, %161 in 0 : vector<1x128xf32>, vector<1x128xf32>, vector<1x128xf32>, vector<1x128xf32>, vector<1x128xf32>, vector<1x128xf32>, vector<1x128xf32>, vector<1x128xf32> -> vector<8x128xf32>
    %cst_101 = arith.constant -3.40282347E+38 : f32
    %163 = vector.broadcast %cst_101 : f32 to vector<8x128xf32>
    %164 = arith.select %3, %162, %163 : vector<8x128xi1>, vector<8x128xf32>
    %cst_102 = arith.constant dense<0xFF800000> : vector<128xf32>
    %165 = vector.multi_reduction <maximumf>, %164, %cst_102 [0] : vector<8x128xf32> to vector<128xf32>
    %166 = vector.shape_cast %165 : vector<128xf32> to vector<1x128xf32>
    %167 = vector.broadcast %166 : vector<1x128xf32> to vector<8x128xf32>
    %168 = arith.subf %164, %167 : vector<8x128xf32>
    %169 = math.exp %168 : vector<8x128xf32>
    %cst_103 = arith.constant dense<0.000000e+00> : vector<128xf32>
    %170 = vector.multi_reduction <add>, %169, %cst_103 [0] : vector<8x128xf32> to vector<128xf32>
    %171 = vector.shape_cast %170 : vector<128xf32> to vector<1x128xf32>
    %172 = vector.broadcast %171 : vector<1x128xf32> to vector<8x128xf32>
    %173 = arith.divf %169, %172 : vector<8x128xf32>
    %cst_104 = arith.constant 0.000000e+00 : f32
    %174 = vector.broadcast %cst_104 : f32 to vector<32x128xf32>
    %c0_105 = arith.constant 0 : index
    %c0_106 = arith.constant 0 : index
    %c0_107 = arith.constant 0 : index
    %175 = vector.load %arg2[%c0_105, %c0_106, %c0_107] : memref<8x32x128xf32, #tpu.memory_space<vmem>>, vector<1x32x128xf32>
    %176 = vector.shape_cast %175 : vector<1x32x128xf32> to vector<32x128xf32>
    %177 = vector.extract_strided_slice %173 {offsets = [0, 0], sizes = [1, 128], strides = [1, 1]} : vector<8x128xf32> to vector<1x128xf32>
    %178 = vector.broadcast %177 : vector<1x128xf32> to vector<32x128xf32>
    %179 = arith.mulf %176, %178 : vector<32x128xf32>
    %180 = arith.addf %174, %179 : vector<32x128xf32>
    %c1_108 = arith.constant 1 : index
    %c0_109 = arith.constant 0 : index
    %c0_110 = arith.constant 0 : index
    %181 = vector.load %arg2[%c1_108, %c0_109, %c0_110] : memref<8x32x128xf32, #tpu.memory_space<vmem>>, vector<1x32x128xf32>
    %182 = vector.shape_cast %181 : vector<1x32x128xf32> to vector<32x128xf32>
    %183 = vector.extract_strided_slice %173 {offsets = [1, 0], sizes = [1, 128], strides = [1, 1]} : vector<8x128xf32> to vector<1x128xf32>
    %184 = vector.broadcast %183 : vector<1x128xf32> to vector<32x128xf32>
    %185 = arith.mulf %182, %184 : vector<32x128xf32>
    %186 = arith.addf %180, %185 : vector<32x128xf32>
    %c2_111 = arith.constant 2 : index
    %c0_112 = arith.constant 0 : index
    %c0_113 = arith.constant 0 : index
    %187 = vector.load %arg2[%c2_111, %c0_112, %c0_113] : memref<8x32x128xf32, #tpu.memory_space<vmem>>, vector<1x32x128xf32>
    %188 = vector.shape_cast %187 : vector<1x32x128xf32> to vector<32x128xf32>
    %189 = vector.extract_strided_slice %173 {offsets = [2, 0], sizes = [1, 128], strides = [1, 1]} : vector<8x128xf32> to vector<1x128xf32>
    %190 = vector.broadcast %189 : vector<1x128xf32> to vector<32x128xf32>
    %191 = arith.mulf %188, %190 : vector<32x128xf32>
    %192 = arith.addf %186, %191 : vector<32x128xf32>
    %c3_114 = arith.constant 3 : index
    %c0_115 = arith.constant 0 : index
    %c0_116 = arith.constant 0 : index
    %193 = vector.load %arg2[%c3_114, %c0_115, %c0_116] : memref<8x32x128xf32, #tpu.memory_space<vmem>>, vector<1x32x128xf32>
    %194 = vector.shape_cast %193 : vector<1x32x128xf32> to vector<32x128xf32>
    %195 = vector.extract_strided_slice %173 {offsets = [3, 0], sizes = [1, 128], strides = [1, 1]} : vector<8x128xf32> to vector<1x128xf32>
    %196 = vector.broadcast %195 : vector<1x128xf32> to vector<32x128xf32>
    %197 = arith.mulf %194, %196 : vector<32x128xf32>
    %198 = arith.addf %192, %197 : vector<32x128xf32>
    %c4_117 = arith.constant 4 : index
    %c0_118 = arith.constant 0 : index
    %c0_119 = arith.constant 0 : index
    %199 = vector.load %arg2[%c4_117, %c0_118, %c0_119] : memref<8x32x128xf32, #tpu.memory_space<vmem>>, vector<1x32x128xf32>
    %200 = vector.shape_cast %199 : vector<1x32x128xf32> to vector<32x128xf32>
    %201 = vector.extract_strided_slice %173 {offsets = [4, 0], sizes = [1, 128], strides = [1, 1]} : vector<8x128xf32> to vector<1x128xf32>
    %202 = vector.broadcast %201 : vector<1x128xf32> to vector<32x128xf32>
    %203 = arith.mulf %200, %202 : vector<32x128xf32>
    %204 = arith.addf %198, %203 : vector<32x128xf32>
    %c5_120 = arith.constant 5 : index
    %c0_121 = arith.constant 0 : index
    %c0_122 = arith.constant 0 : index
    %205 = vector.load %arg2[%c5_120, %c0_121, %c0_122] : memref<8x32x128xf32, #tpu.memory_space<vmem>>, vector<1x32x128xf32>
    %206 = vector.shape_cast %205 : vector<1x32x128xf32> to vector<32x128xf32>
    %207 = vector.extract_strided_slice %173 {offsets = [5, 0], sizes = [1, 128], strides = [1, 1]} : vector<8x128xf32> to vector<1x128xf32>
    %208 = vector.broadcast %207 : vector<1x128xf32> to vector<32x128xf32>
    %209 = arith.mulf %206, %208 : vector<32x128xf32>
    %210 = arith.addf %204, %209 : vector<32x128xf32>
    %c6_123 = arith.constant 6 : index
    %c0_124 = arith.constant 0 : index
    %c0_125 = arith.constant 0 : index
    %211 = vector.load %arg2[%c6_123, %c0_124, %c0_125] : memref<8x32x128xf32, #tpu.memory_space<vmem>>, vector<1x32x128xf32>
    %212 = vector.shape_cast %211 : vector<1x32x128xf32> to vector<32x128xf32>
    %213 = vector.extract_strided_slice %173 {offsets = [6, 0], sizes = [1, 128], strides = [1, 1]} : vector<8x128xf32> to vector<1x128xf32>
    %214 = vector.broadcast %213 : vector<1x128xf32> to vector<32x128xf32>
    %215 = arith.mulf %212, %214 : vector<32x128xf32>
    %216 = arith.addf %210, %215 : vector<32x128xf32>
    %c7_126 = arith.constant 7 : index
    %c0_127 = arith.constant 0 : index
    %c0_128 = arith.constant 0 : index
    %217 = vector.load %arg2[%c7_126, %c0_127, %c0_128] : memref<8x32x128xf32, #tpu.memory_space<vmem>>, vector<1x32x128xf32>
    %218 = vector.shape_cast %217 : vector<1x32x128xf32> to vector<32x128xf32>
    %219 = vector.extract_strided_slice %173 {offsets = [7, 0], sizes = [1, 128], strides = [1, 1]} : vector<8x128xf32> to vector<1x128xf32>
    %220 = vector.broadcast %219 : vector<1x128xf32> to vector<32x128xf32>
    %221 = arith.mulf %218, %220 : vector<32x128xf32>
    %222 = arith.addf %216, %221 : vector<32x128xf32>
    %c1_129 = arith.constant 1 : index
    %c0_130 = arith.constant 0 : index
    %c0_131 = arith.constant 0 : index
    %223 = vector.load %arg7[%c1_129, %c0_130, %c0_131] : memref<3x8x128xf32, #tpu.memory_space<vmem>>, vector<1x8x128xf32>
    %224 = vector.shape_cast %223 : vector<1x8x128xf32> to vector<8x128xf32>
    %225 = vector.shape_cast %173 : vector<8x128xf32> to vector<1x8x128xf32>
    tpu.vector_store %arg7[%c1_129, %c0_130, %c0_131], %225 {strides = array<i32>} : memref<3x8x128xf32, #tpu.memory_space<vmem>>, vector<1x8x128xf32>,
    %c1_132 = arith.constant 1 : index
    %c0_133 = arith.constant 0 : index
    %c0_134 = arith.constant 0 : index
    %226 = vector.load %arg8[%c1_132, %c0_133, %c0_134] : memref<3x32x128xf32, #tpu.memory_space<vmem>>, vector<1x32x128xf32>
    %227 = vector.shape_cast %226 : vector<1x32x128xf32> to vector<32x128xf32>
    %228 = vector.shape_cast %222 : vector<32x128xf32> to vector<1x32x128xf32>
    tpu.vector_store %arg8[%c1_132, %c0_133, %c0_134], %228 {strides = array<i32>} : memref<3x32x128xf32, #tpu.memory_space<vmem>>, vector<1x32x128xf32>,
    %c1_135 = arith.constant 1 : index
    %c0_136 = arith.constant 0 : index
    %c0_137 = arith.constant 0 : index
    %229 = vector.load %arg5[%c1_135, %c0_136, %c0_137] : memref<2x32x32xf32, #tpu.memory_space<vmem>>, vector<1x32x32xf32>
    %230 = vector.shape_cast %229 : vector<1x32x32xf32> to vector<32x32xf32>
    %cst_138 = arith.constant dense<0.000000e+00> : vector<32x128xf32>
    %231 = tpu.matmul %230, %121, %cst_138 {dimension_numbers = #tpu.dot_dimension_numbers<[1], [0], [0], [1], [0, 0, 1, 1], [], []>, precision = #tpu.contract_precision<fp32>} : vector<32x32xf32>, vector<32x128xf32>, vector<32x128xf32> -> vector<32x128xf32>
    %c1_139 = arith.constant 1 : index
    %c0_140 = arith.constant 0 : index
    %c0_141 = arith.constant 0 : index
    %232 = vector.load %arg6[%c1_139, %c0_140, %c0_141] : memref<2x32x1xf32, #tpu.memory_space<vmem>>, vector<1x32x1xf32>
    %233 = vector.shape_cast %232 : vector<1x32x1xf32> to vector<32x1xf32>
    %234 = vector.broadcast %233 : vector<32x1xf32> to vector<32x128xf32>
    %235 = arith.addf %231, %234 : vector<32x128xf32>
    %236 = arith.addf %235, %222 : vector<32x128xf32>
    %cst_142 = arith.constant 0.000000e+00 : f32
    %237 = vector.broadcast %cst_142 : f32 to vector<32x128xf32>
    %238 = arith.maximumf %236, %237 : vector<32x128xf32>
    %c0_143 = arith.constant 0 : index
    %c0_144 = arith.constant 0 : index
    %c0_145 = arith.constant 0 : index
    %239 = vector.load %arg1[%c0_143, %c0_144, %c0_145] : memref<8x32x128xf32, #tpu.memory_space<vmem>>, vector<1x32x128xf32>
    %240 = vector.shape_cast %239 : vector<1x32x128xf32> to vector<32x128xf32>
    %241 = arith.mulf %240, %238 : vector<32x128xf32>
    %cst_146 = arith.constant dense<0.000000e+00> : vector<128xf32>
    %242 = vector.multi_reduction <add>, %241, %cst_146 [0] : vector<32x128xf32> to vector<128xf32>
    %243 = vector.shape_cast %242 : vector<128xf32> to vector<1x128xf32>
    %c1_147 = arith.constant 1 : index
    %c0_148 = arith.constant 0 : index
    %c0_149 = arith.constant 0 : index
    %244 = vector.load %arg1[%c1_147, %c0_148, %c0_149] : memref<8x32x128xf32, #tpu.memory_space<vmem>>, vector<1x32x128xf32>
    %245 = vector.shape_cast %244 : vector<1x32x128xf32> to vector<32x128xf32>
    %246 = arith.mulf %245, %238 : vector<32x128xf32>
    %cst_150 = arith.constant dense<0.000000e+00> : vector<128xf32>
    %247 = vector.multi_reduction <add>, %246, %cst_150 [0] : vector<32x128xf32> to vector<128xf32>
    %248 = vector.shape_cast %247 : vector<128xf32> to vector<1x128xf32>
    %c2_151 = arith.constant 2 : index
    %c0_152 = arith.constant 0 : index
    %c0_153 = arith.constant 0 : index
    %249 = vector.load %arg1[%c2_151, %c0_152, %c0_153] : memref<8x32x128xf32, #tpu.memory_space<vmem>>, vector<1x32x128xf32>
    %250 = vector.shape_cast %249 : vector<1x32x128xf32> to vector<32x128xf32>
    %251 = arith.mulf %250, %238 : vector<32x128xf32>
    %cst_154 = arith.constant dense<0.000000e+00> : vector<128xf32>
    %252 = vector.multi_reduction <add>, %251, %cst_154 [0] : vector<32x128xf32> to vector<128xf32>
    %253 = vector.shape_cast %252 : vector<128xf32> to vector<1x128xf32>
    %c3_155 = arith.constant 3 : index
    %c0_156 = arith.constant 0 : index
    %c0_157 = arith.constant 0 : index
    %254 = vector.load %arg1[%c3_155, %c0_156, %c0_157] : memref<8x32x128xf32, #tpu.memory_space<vmem>>, vector<1x32x128xf32>
    %255 = vector.shape_cast %254 : vector<1x32x128xf32> to vector<32x128xf32>
    %256 = arith.mulf %255, %238 : vector<32x128xf32>
    %cst_158 = arith.constant dense<0.000000e+00> : vector<128xf32>
    %257 = vector.multi_reduction <add>, %256, %cst_158 [0] : vector<32x128xf32> to vector<128xf32>
    %258 = vector.shape_cast %257 : vector<128xf32> to vector<1x128xf32>
    %c4_159 = arith.constant 4 : index
    %c0_160 = arith.constant 0 : index
    %c0_161 = arith.constant 0 : index
    %259 = vector.load %arg1[%c4_159, %c0_160, %c0_161] : memref<8x32x128xf32, #tpu.memory_space<vmem>>, vector<1x32x128xf32>
    %260 = vector.shape_cast %259 : vector<1x32x128xf32> to vector<32x128xf32>
    %261 = arith.mulf %260, %238 : vector<32x128xf32>
    %cst_162 = arith.constant dense<0.000000e+00> : vector<128xf32>
    %262 = vector.multi_reduction <add>, %261, %cst_162 [0] : vector<32x128xf32> to vector<128xf32>
    %263 = vector.shape_cast %262 : vector<128xf32> to vector<1x128xf32>
    %c5_163 = arith.constant 5 : index
    %c0_164 = arith.constant 0 : index
    %c0_165 = arith.constant 0 : index
    %264 = vector.load %arg1[%c5_163, %c0_164, %c0_165] : memref<8x32x128xf32, #tpu.memory_space<vmem>>, vector<1x32x128xf32>
    %265 = vector.shape_cast %264 : vector<1x32x128xf32> to vector<32x128xf32>
    %266 = arith.mulf %265, %238 : vector<32x128xf32>
    %cst_166 = arith.constant dense<0.000000e+00> : vector<128xf32>
    %267 = vector.multi_reduction <add>, %266, %cst_166 [0] : vector<32x128xf32> to vector<128xf32>
    %268 = vector.shape_cast %267 : vector<128xf32> to vector<1x128xf32>
    %c6_167 = arith.constant 6 : index
    %c0_168 = arith.constant 0 : index
    %c0_169 = arith.constant 0 : index
    %269 = vector.load %arg1[%c6_167, %c0_168, %c0_169] : memref<8x32x128xf32, #tpu.memory_space<vmem>>, vector<1x32x128xf32>
    %270 = vector.shape_cast %269 : vector<1x32x128xf32> to vector<32x128xf32>
    %271 = arith.mulf %270, %238 : vector<32x128xf32>
    %cst_170 = arith.constant dense<0.000000e+00> : vector<128xf32>
    %272 = vector.multi_reduction <add>, %271, %cst_170 [0] : vector<32x128xf32> to vector<128xf32>
    %273 = vector.shape_cast %272 : vector<128xf32> to vector<1x128xf32>
    %c7_171 = arith.constant 7 : index
    %c0_172 = arith.constant 0 : index
    %c0_173 = arith.constant 0 : index
    %274 = vector.load %arg1[%c7_171, %c0_172, %c0_173] : memref<8x32x128xf32, #tpu.memory_space<vmem>>, vector<1x32x128xf32>
    %275 = vector.shape_cast %274 : vector<1x32x128xf32> to vector<32x128xf32>
    %276 = arith.mulf %275, %238 : vector<32x128xf32>
    %cst_174 = arith.constant dense<0.000000e+00> : vector<128xf32>
    %277 = vector.multi_reduction <add>, %276, %cst_174 [0] : vector<32x128xf32> to vector<128xf32>
    %278 = vector.shape_cast %277 : vector<128xf32> to vector<1x128xf32>
    %279 = tpu.concatenate %243, %248, %253, %258, %263, %268, %273, %278 in 0 : vector<1x128xf32>, vector<1x128xf32>, vector<1x128xf32>, vector<1x128xf32>, vector<1x128xf32>, vector<1x128xf32>, vector<1x128xf32>, vector<1x128xf32> -> vector<8x128xf32>
    %cst_175 = arith.constant -3.40282347E+38 : f32
    %280 = vector.broadcast %cst_175 : f32 to vector<8x128xf32>
    %281 = arith.select %3, %279, %280 : vector<8x128xi1>, vector<8x128xf32>
    %cst_176 = arith.constant dense<0xFF800000> : vector<128xf32>
    %282 = vector.multi_reduction <maximumf>, %281, %cst_176 [0] : vector<8x128xf32> to vector<128xf32>
    %283 = vector.shape_cast %282 : vector<128xf32> to vector<1x128xf32>
    %284 = vector.broadcast %283 : vector<1x128xf32> to vector<8x128xf32>
    %285 = arith.subf %281, %284 : vector<8x128xf32>
    %286 = math.exp %285 : vector<8x128xf32>
    %cst_177 = arith.constant dense<0.000000e+00> : vector<128xf32>
    %287 = vector.multi_reduction <add>, %286, %cst_177 [0] : vector<8x128xf32> to vector<128xf32>
    %288 = vector.shape_cast %287 : vector<128xf32> to vector<1x128xf32>
    %289 = vector.broadcast %288 : vector<1x128xf32> to vector<8x128xf32>
    %290 = arith.divf %286, %289 : vector<8x128xf32>
    %cst_178 = arith.constant 0.000000e+00 : f32
    %291 = vector.broadcast %cst_178 : f32 to vector<32x128xf32>
    %c0_179 = arith.constant 0 : index
    %c0_180 = arith.constant 0 : index
    %c0_181 = arith.constant 0 : index
    %292 = vector.load %arg2[%c0_179, %c0_180, %c0_181] : memref<8x32x128xf32, #tpu.memory_space<vmem>>, vector<1x32x128xf32>
    %293 = vector.shape_cast %292 : vector<1x32x128xf32> to vector<32x128xf32>
    %294 = vector.extract_strided_slice %290 {offsets = [0, 0], sizes = [1, 128], strides = [1, 1]} : vector<8x128xf32> to vector<1x128xf32>
    %295 = vector.broadcast %294 : vector<1x128xf32> to vector<32x128xf32>
    %296 = arith.mulf %293, %295 : vector<32x128xf32>
    %297 = arith.addf %291, %296 : vector<32x128xf32>
    %c1_182 = arith.constant 1 : index
    %c0_183 = arith.constant 0 : index
    %c0_184 = arith.constant 0 : index
    %298 = vector.load %arg2[%c1_182, %c0_183, %c0_184] : memref<8x32x128xf32, #tpu.memory_space<vmem>>, vector<1x32x128xf32>
    %299 = vector.shape_cast %298 : vector<1x32x128xf32> to vector<32x128xf32>
    %300 = vector.extract_strided_slice %290 {offsets = [1, 0], sizes = [1, 128], strides = [1, 1]} : vector<8x128xf32> to vector<1x128xf32>
    %301 = vector.broadcast %300 : vector<1x128xf32> to vector<32x128xf32>
    %302 = arith.mulf %299, %301 : vector<32x128xf32>
    %303 = arith.addf %297, %302 : vector<32x128xf32>
    %c2_185 = arith.constant 2 : index
    %c0_186 = arith.constant 0 : index
    %c0_187 = arith.constant 0 : index
    %304 = vector.load %arg2[%c2_185, %c0_186, %c0_187] : memref<8x32x128xf32, #tpu.memory_space<vmem>>, vector<1x32x128xf32>
    %305 = vector.shape_cast %304 : vector<1x32x128xf32> to vector<32x128xf32>
    %306 = vector.extract_strided_slice %290 {offsets = [2, 0], sizes = [1, 128], strides = [1, 1]} : vector<8x128xf32> to vector<1x128xf32>
    %307 = vector.broadcast %306 : vector<1x128xf32> to vector<32x128xf32>
    %308 = arith.mulf %305, %307 : vector<32x128xf32>
    %309 = arith.addf %303, %308 : vector<32x128xf32>
    %c3_188 = arith.constant 3 : index
    %c0_189 = arith.constant 0 : index
    %c0_190 = arith.constant 0 : index
    %310 = vector.load %arg2[%c3_188, %c0_189, %c0_190] : memref<8x32x128xf32, #tpu.memory_space<vmem>>, vector<1x32x128xf32>
    %311 = vector.shape_cast %310 : vector<1x32x128xf32> to vector<32x128xf32>
    %312 = vector.extract_strided_slice %290 {offsets = [3, 0], sizes = [1, 128], strides = [1, 1]} : vector<8x128xf32> to vector<1x128xf32>
    %313 = vector.broadcast %312 : vector<1x128xf32> to vector<32x128xf32>
    %314 = arith.mulf %311, %313 : vector<32x128xf32>
    %315 = arith.addf %309, %314 : vector<32x128xf32>
    %c4_191 = arith.constant 4 : index
    %c0_192 = arith.constant 0 : index
    %c0_193 = arith.constant 0 : index
    %316 = vector.load %arg2[%c4_191, %c0_192, %c0_193] : memref<8x32x128xf32, #tpu.memory_space<vmem>>, vector<1x32x128xf32>
    %317 = vector.shape_cast %316 : vector<1x32x128xf32> to vector<32x128xf32>
    %318 = vector.extract_strided_slice %290 {offsets = [4, 0], sizes = [1, 128], strides = [1, 1]} : vector<8x128xf32> to vector<1x128xf32>
    %319 = vector.broadcast %318 : vector<1x128xf32> to vector<32x128xf32>
    %320 = arith.mulf %317, %319 : vector<32x128xf32>
    %321 = arith.addf %315, %320 : vector<32x128xf32>
    %c5_194 = arith.constant 5 : index
    %c0_195 = arith.constant 0 : index
    %c0_196 = arith.constant 0 : index
    %322 = vector.load %arg2[%c5_194, %c0_195, %c0_196] : memref<8x32x128xf32, #tpu.memory_space<vmem>>, vector<1x32x128xf32>
    %323 = vector.shape_cast %322 : vector<1x32x128xf32> to vector<32x128xf32>
    %324 = vector.extract_strided_slice %290 {offsets = [5, 0], sizes = [1, 128], strides = [1, 1]} : vector<8x128xf32> to vector<1x128xf32>
    %325 = vector.broadcast %324 : vector<1x128xf32> to vector<32x128xf32>
    %326 = arith.mulf %323, %325 : vector<32x128xf32>
    %327 = arith.addf %321, %326 : vector<32x128xf32>
    %c6_197 = arith.constant 6 : index
    %c0_198 = arith.constant 0 : index
    %c0_199 = arith.constant 0 : index
    %328 = vector.load %arg2[%c6_197, %c0_198, %c0_199] : memref<8x32x128xf32, #tpu.memory_space<vmem>>, vector<1x32x128xf32>
    %329 = vector.shape_cast %328 : vector<1x32x128xf32> to vector<32x128xf32>
    %330 = vector.extract_strided_slice %290 {offsets = [6, 0], sizes = [1, 128], strides = [1, 1]} : vector<8x128xf32> to vector<1x128xf32>
    %331 = vector.broadcast %330 : vector<1x128xf32> to vector<32x128xf32>
    %332 = arith.mulf %329, %331 : vector<32x128xf32>
    %333 = arith.addf %327, %332 : vector<32x128xf32>
    %c7_200 = arith.constant 7 : index
    %c0_201 = arith.constant 0 : index
    %c0_202 = arith.constant 0 : index
    %334 = vector.load %arg2[%c7_200, %c0_201, %c0_202] : memref<8x32x128xf32, #tpu.memory_space<vmem>>, vector<1x32x128xf32>
    %335 = vector.shape_cast %334 : vector<1x32x128xf32> to vector<32x128xf32>
    %336 = vector.extract_strided_slice %290 {offsets = [7, 0], sizes = [1, 128], strides = [1, 1]} : vector<8x128xf32> to vector<1x128xf32>
    %337 = vector.broadcast %336 : vector<1x128xf32> to vector<32x128xf32>
    %338 = arith.mulf %335, %337 : vector<32x128xf32>
    %339 = arith.addf %333, %338 : vector<32x128xf32>
    %c2_203 = arith.constant 2 : index
    %c0_204 = arith.constant 0 : index
    %c0_205 = arith.constant 0 : index
    %340 = vector.load %arg7[%c2_203, %c0_204, %c0_205] : memref<3x8x128xf32, #tpu.memory_space<vmem>>, vector<1x8x128xf32>
    %341 = vector.shape_cast %340 : vector<1x8x128xf32> to vector<8x128xf32>
    %342 = vector.shape_cast %290 : vector<8x128xf32> to vector<1x8x128xf32>
    tpu.vector_store %arg7[%c2_203, %c0_204, %c0_205], %342 {strides = array<i32>} : memref<3x8x128xf32, #tpu.memory_space<vmem>>, vector<1x8x128xf32>,
    %c2_206 = arith.constant 2 : index
    %c0_207 = arith.constant 0 : index
    %c0_208 = arith.constant 0 : index
    %343 = vector.load %arg8[%c2_206, %c0_207, %c0_208] : memref<3x32x128xf32, #tpu.memory_space<vmem>>, vector<1x32x128xf32>
    %344 = vector.shape_cast %343 : vector<1x32x128xf32> to vector<32x128xf32>
    %345 = vector.shape_cast %339 : vector<32x128xf32> to vector<1x32x128xf32>
    tpu.vector_store %arg8[%c2_206, %c0_207, %c0_208], %345 {strides = array<i32>} : memref<3x32x128xf32, #tpu.memory_space<vmem>>, vector<1x32x128xf32>,
    return
  }
  func.func @transform_0(%arg0: i32) -> (i32, i32, i32) {
    %c0_i32 = arith.constant 0 : i32
    %c0_i32_0 = arith.constant 0 : i32
    %c0_i32_1 = arith.constant 0 : i32
    return %c0_i32, %c0_i32_0, %arg0 : i32, i32, i32
  }
  func.func @transform_1(%arg0: i32) -> (i32, i32, i32) {
    %c0_i32 = arith.constant 0 : i32
    %c0_i32_0 = arith.constant 0 : i32
    %c0_i32_1 = arith.constant 0 : i32
    return %c0_i32, %c0_i32_0, %arg0 : i32, i32, i32
  }
  func.func @transform_2(%arg0: i32) -> (i32, i32) {
    %c0_i32 = arith.constant 0 : i32
    %c0_i32_0 = arith.constant 0 : i32
    return %c0_i32, %arg0 : i32, i32
  }
  func.func @transform_3(%arg0: i32) -> (i32, i32) {
    %c0_i32 = arith.constant 0 : i32
    %c0_i32_0 = arith.constant 0 : i32
    return %c0_i32, %arg0 : i32, i32
  }
  func.func @transform_4(%arg0: i32) -> (i32, i32, i32) {
    %c0_i32 = arith.constant 0 : i32
    %c0_i32_0 = arith.constant 0 : i32
    %c0_i32_1 = arith.constant 0 : i32
    %c0_i32_2 = arith.constant 0 : i32
    return %c0_i32, %c0_i32_0, %c0_i32_1 : i32, i32, i32
  }
  func.func @transform_5(%arg0: i32) -> (i32, i32, i32) {
    %c0_i32 = arith.constant 0 : i32
    %c0_i32_0 = arith.constant 0 : i32
    %c0_i32_1 = arith.constant 0 : i32
    %c0_i32_2 = arith.constant 0 : i32
    return %c0_i32, %c0_i32_0, %c0_i32_1 : i32, i32, i32
  }
  func.func @transform_6(%arg0: i32) -> (i32, i32, i32) {
    %c0_i32 = arith.constant 0 : i32
    %c0_i32_0 = arith.constant 0 : i32
    %c0_i32_1 = arith.constant 0 : i32
    return %c0_i32, %c0_i32_0, %arg0 : i32, i32, i32
  }
  func.func @transform_7(%arg0: i32) -> (i32, i32, i32) {
    %c0_i32 = arith.constant 0 : i32
    %c0_i32_0 = arith.constant 0 : i32
    %c0_i32_1 = arith.constant 0 : i32
    return %c0_i32, %c0_i32_0, %arg0 : i32, i32, i32
  }
}

module attributes {stable_mosaic.version = 11 : i64} {
  func.func @_vlml_kernel(%arg0: i32, %arg1: memref<8x32x128xf32, #tpu.memory_space<vmem>>, %arg2: memref<8x32x128xf32, #tpu.memory_space<vmem>>, %arg3: memref<32x128xf32, #tpu.memory_space<vmem>>, %arg4: memref<1x128xi32, #tpu.memory_space<vmem>>, %arg5: memref<2x32x32xf32, #tpu.memory_space<vmem>>, %arg6: memref<2x32x1xf32, #tpu.memory_space<vmem>>, %arg7: memref<3x8x128xf32, #tpu.memory_space<vmem>>, %arg8: memref<3x32x128xf32, #tpu.memory_space<vmem>>) attributes {dimension_semantics = [#tpu.dimension_semantics<parallel>], iteration_bounds = array<i64: 1>, scalar_prefetch = 0 : i64, scratch_operands = 0 : i64, tpu.core_type = #tpu.core_type<tc>, window_params = [{transform_indices = @transform_0, window_bounds = array<i64: 8, 32, 128>}, {transform_indices = @transform_1, window_bounds = array<i64: 8, 32, 128>}, {transform_indices = @transform_2, window_bounds = array<i64: 32, 128>}, {transform_indices = @transform_3, window_bounds = array<i64: 1, 128>}, {pipeline_mode = #tpu.pipeline_mode<synchronous>, transform_indices = @transform_4, window_bounds = array<i64: 2, 32, 32>}, {pipeline_mode = #tpu.pipeline_mode<synchronous>, transform_indices = @transform_5, window_bounds = array<i64: 2, 32, 1>}, {transform_indices = @transform_6, window_bounds = array<i64: 3, 8, 128>}, {transform_indices = @transform_7, window_bounds = array<i64: 3, 32, 128>}]} {
    %0 = tpu.iota {dimensions = array<i32: 0>} : vector<8x128xi32>
    %c0 = arith.constant 0 : index
    %c0_0 = arith.constant 0 : index
    %1 = vector.load %arg4[%c0, %c0_0] : memref<1x128xi32, #tpu.memory_space<vmem>>, vector<1x128xi32>
    %2 = vector.broadcast %1 : vector<1x128xi32> to vector<8x128xi32>
    %3 = arith.cmpi slt, %0, %2 : vector<8x128xi32>
    %c0_1 = arith.constant 0 : index
    %c0_2 = arith.constant 0 : index
    %4 = vector.load %arg3[%c0_1, %c0_2] : memref<32x128xf32, #tpu.memory_space<vmem>>, vector<32x128xf32>
    %c0_3 = arith.constant 0 : index
    %c0_4 = arith.constant 0 : index
    %c0_5 = arith.constant 0 : index
    %5 = vector.load %arg1[%c0_3, %c0_4, %c0_5] : memref<8x32x128xf32, #tpu.memory_space<vmem>>, vector<1x32x128xf32>
    %6 = vector.shape_cast %5 : vector<1x32x128xf32> to vector<32x128xf32>
    %7 = arith.mulf %6, %4 : vector<32x128xf32>
    %cst = arith.constant dense<0.000000e+00> : vector<128xf32>
    %8 = vector.multi_reduction <add>, %7, %cst [0] : vector<32x128xf32> to vector<128xf32>
    %9 = vector.shape_cast %8 : vector<128xf32> to vector<1x128xf32>
    %c1 = arith.constant 1 : index
    %c0_6 = arith.constant 0 : index
    %c0_7 = arith.constant 0 : index
    %10 = vector.load %arg1[%c1, %c0_6, %c0_7] : memref<8x32x128xf32, #tpu.memory_space<vmem>>, vector<1x32x128xf32>
    %11 = vector.shape_cast %10 : vector<1x32x128xf32> to vector<32x128xf32>
    %12 = arith.mulf %11, %4 : vector<32x128xf32>
    %cst_8 = arith.constant dense<0.000000e+00> : vector<128xf32>
    %13 = vector.multi_reduction <add>, %12, %cst_8 [0] : vector<32x128xf32> to vector<128xf32>
    %14 = vector.shape_cast %13 : vector<128xf32> to vector<1x128xf32>
    %c2 = arith.constant 2 : index
    %c0_9 = arith.constant 0 : index
    %c0_10 = arith.constant 0 : index
    %15 = vector.load %arg1[%c2, %c0_9, %c0_10] : memref<8x32x128xf32, #tpu.memory_space<vmem>>, vector<1x32x128xf32>
    %16 = vector.shape_cast %15 : vector<1x32x128xf32> to vector<32x128xf32>
    %17 = arith.mulf %16, %4 : vector<32x128xf32>
    %cst_11 = arith.constant dense<0.000000e+00> : vector<128xf32>
    %18 = vector.multi_reduction <add>, %17, %cst_11 [0] : vector<32x128xf32> to vector<128xf32>
    %19 = vector.shape_cast %18 : vector<128xf32> to vector<1x128xf32>
    %c3 = arith.constant 3 : index
    %c0_12 = arith.constant 0 : index
    %c0_13 = arith.constant 0 : index
    %20 = vector.load %arg1[%c3, %c0_12, %c0_13] : memref<8x32x128xf32, #tpu.memory_space<vmem>>, vector<1x32x128xf32>
    %21 = vector.shape_cast %20 : vector<1x32x128xf32> to vector<32x128xf32>
    %22 = arith.mulf %21, %4 : vector<32x128xf32>
    %cst_14 = arith.constant dense<0.000000e+00> : vector<128xf32>
    %23 = vector.multi_reduction <add>, %22, %cst_14 [0] : vector<32x128xf32> to vector<128xf32>
    %24 = vector.shape_cast %23 : vector<128xf32> to vector<1x128xf32>
    %c4 = arith.constant 4 : index
    %c0_15 = arith.constant 0 : index
    %c0_16 = arith.constant 0 : index
    %25 = vector.load %arg1[%c4, %c0_15, %c0_16] : memref<8x32x128xf32, #tpu.memory_space<vmem>>, vector<1x32x128xf32>
    %26 = vector.shape_cast %25 : vector<1x32x128xf32> to vector<32x128xf32>
    %27 = arith.mulf %26, %4 : vector<32x128xf32>
    %cst_17 = arith.constant dense<0.000000e+00> : vector<128xf32>
    %28 = vector.multi_reduction <add>, %27, %cst_17 [0] : vector<32x128xf32> to vector<128xf32>
    %29 = vector.shape_cast %28 : vector<128xf32> to vector<1x128xf32>
    %c5 = arith.constant 5 : index
    %c0_18 = arith.constant 0 : index
    %c0_19 = arith.constant 0 : index
    %30 = vector.load %arg1[%c5, %c0_18, %c0_19] : memref<8x32x128xf32, #tpu.memory_space<vmem>>, vector<1x32x128xf32>
    %31 = vector.shape_cast %30 : vector<1x32x128xf32> to vector<32x128xf32>
    %32 = arith.mulf %31, %4 : vector<32x128xf32>
    %cst_20 = arith.constant dense<0.000000e+00> : vector<128xf32>
    %33 = vector.multi_reduction <add>, %32, %cst_20 [0] : vector<32x128xf32> to vector<128xf32>
    %34 = vector.shape_cast %33 : vector<128xf32> to vector<1x128xf32>
    %c6 = arith.constant 6 : index
    %c0_21 = arith.constant 0 : index
    %c0_22 = arith.constant 0 : index
    %35 = vector.load %arg1[%c6, %c0_21, %c0_22] : memref<8x32x128xf32, #tpu.memory_space<vmem>>, vector<1x32x128xf32>
    %36 = vector.shape_cast %35 : vector<1x32x128xf32> to vector<32x128xf32>
    %37 = arith.mulf %36, %4 : vector<32x128xf32>
    %cst_23 = arith.constant dense<0.000000e+00> : vector<128xf32>
    %38 = vector.multi_reduction <add>, %37, %cst_23 [0] : vector<32x128xf32> to vector<128xf32>
    %39 = vector.shape_cast %38 : vector<128xf32> to vector<1x128xf32>
    %c7 = arith.constant 7 : index
    %c0_24 = arith.constant 0 : index
    %c0_25 = arith.constant 0 : index
    %40 = vector.load %arg1[%c7, %c0_24, %c0_25] : memref<8x32x128xf32, #tpu.memory_space<vmem>>, vector<1x32x128xf32>
    %41 = vector.shape_cast %40 : vector<1x32x128xf32> to vector<32x128xf32>
    %42 = arith.mulf %41, %4 : vector<32x128xf32>
    %cst_26 = arith.constant dense<0.000000e+00> : vector<128xf32>
    %43 = vector.multi_reduction <add>, %42, %cst_26 [0] : vector<32x128xf32> to vector<128xf32>
    %44 = vector.shape_cast %43 : vector<128xf32> to vector<1x128xf32>
    %45 = tpu.concatenate %9, %14, %19, %24, %29, %34, %39, %44 in 0 : vector<1x128xf32>, vector<1x128xf32>, vector<1x128xf32>, vector<1x128xf32>, vector<1x128xf32>, vector<1x128xf32>, vector<1x128xf32>, vector<1x128xf32> -> vector<8x128xf32>
    %cst_27 = arith.constant -3.40282347E+38 : f32
    %46 = vector.broadcast %cst_27 : f32 to vector<8x128xf32>
    %47 = arith.select %3, %45, %46 : vector<8x128xi1>, vector<8x128xf32>
    %cst_28 = arith.constant dense<0xFF800000> : vector<128xf32>
    %48 = vector.multi_reduction <maximumf>, %47, %cst_28 [0] : vector<8x128xf32> to vector<128xf32>
    %49 = vector.shape_cast %48 : vector<128xf32> to vector<1x128xf32>
    %50 = vector.broadcast %49 : vector<1x128xf32> to vector<8x128xf32>
    %51 = arith.subf %47, %50 : vector<8x128xf32>
    %52 = math.exp %51 : vector<8x128xf32>
    %cst_29 = arith.constant dense<0.000000e+00> : vector<128xf32>
    %53 = vector.multi_reduction <add>, %52, %cst_29 [0] : vector<8x128xf32> to vector<128xf32>
    %54 = vector.shape_cast %53 : vector<128xf32> to vector<1x128xf32>
    %55 = vector.broadcast %54 : vector<1x128xf32> to vector<8x128xf32>
    %56 = arith.divf %52, %55 : vector<8x128xf32>
    %cst_30 = arith.constant 0.000000e+00 : f32
    %57 = vector.broadcast %cst_30 : f32 to vector<32x128xf32>
    %c0_31 = arith.constant 0 : index
    %c0_32 = arith.constant 0 : index
    %c0_33 = arith.constant 0 : index
    %58 = vector.load %arg2[%c0_31, %c0_32, %c0_33] : memref<8x32x128xf32, #tpu.memory_space<vmem>>, vector<1x32x128xf32>
    %59 = vector.shape_cast %58 : vector<1x32x128xf32> to vector<32x128xf32>
    %60 = vector.extract_strided_slice %56 {offsets = [0, 0], sizes = [1, 128], strides = [1, 1]} : vector<8x128xf32> to vector<1x128xf32>
    %61 = vector.broadcast %60 : vector<1x128xf32> to vector<32x128xf32>
    %62 = arith.mulf %59, %61 : vector<32x128xf32>
    %63 = arith.addf %57, %62 : vector<32x128xf32>
    %c1_34 = arith.constant 1 : index
    %c0_35 = arith.constant 0 : index
    %c0_36 = arith.constant 0 : index
    %64 = vector.load %arg2[%c1_34, %c0_35, %c0_36] : memref<8x32x128xf32, #tpu.memory_space<vmem>>, vector<1x32x128xf32>
    %65 = vector.shape_cast %64 : vector<1x32x128xf32> to vector<32x128xf32>
    %66 = vector.extract_strided_slice %56 {offsets = [1, 0], sizes = [1, 128], strides = [1, 1]} : vector<8x128xf32> to vector<1x128xf32>
    %67 = vector.broadcast %66 : vector<1x128xf32> to vector<32x128xf32>
    %68 = arith.mulf %65, %67 : vector<32x128xf32>
    %69 = arith.addf %63, %68 : vector<32x128xf32>
    %c2_37 = arith.constant 2 : index
    %c0_38 = arith.constant 0 : index
    %c0_39 = arith.constant 0 : index
    %70 = vector.load %arg2[%c2_37, %c0_38, %c0_39] : memref<8x32x128xf32, #tpu.memory_space<vmem>>, vector<1x32x128xf32>
    %71 = vector.shape_cast %70 : vector<1x32x128xf32> to vector<32x128xf32>
    %72 = vector.extract_strided_slice %56 {offsets = [2, 0], sizes = [1, 128], strides = [1, 1]} : vector<8x128xf32> to vector<1x128xf32>
    %73 = vector.broadcast %72 : vector<1x128xf32> to vector<32x128xf32>
    %74 = arith.mulf %71, %73 : vector<32x128xf32>
    %75 = arith.addf %69, %74 : vector<32x128xf32>
    %c3_40 = arith.constant 3 : index
    %c0_41 = arith.constant 0 : index
    %c0_42 = arith.constant 0 : index
    %76 = vector.load %arg2[%c3_40, %c0_41, %c0_42] : memref<8x32x128xf32, #tpu.memory_space<vmem>>, vector<1x32x128xf32>
    %77 = vector.shape_cast %76 : vector<1x32x128xf32> to vector<32x128xf32>
    %78 = vector.extract_strided_slice %56 {offsets = [3, 0], sizes = [1, 128], strides = [1, 1]} : vector<8x128xf32> to vector<1x128xf32>
    %79 = vector.broadcast %78 : vector<1x128xf32> to vector<32x128xf32>
    %80 = arith.mulf %77, %79 : vector<32x128xf32>
    %81 = arith.addf %75, %80 : vector<32x128xf32>
    %c4_43 = arith.constant 4 : index
    %c0_44 = arith.constant 0 : index
    %c0_45 = arith.constant 0 : index
    %82 = vector.load %arg2[%c4_43, %c0_44, %c0_45] : memref<8x32x128xf32, #tpu.memory_space<vmem>>, vector<1x32x128xf32>
    %83 = vector.shape_cast %82 : vector<1x32x128xf32> to vector<32x128xf32>
    %84 = vector.extract_strided_slice %56 {offsets = [4, 0], sizes = [1, 128], strides = [1, 1]} : vector<8x128xf32> to vector<1x128xf32>
    %85 = vector.broadcast %84 : vector<1x128xf32> to vector<32x128xf32>
    %86 = arith.mulf %83, %85 : vector<32x128xf32>
    %87 = arith.addf %81, %86 : vector<32x128xf32>
    %c5_46 = arith.constant 5 : index
    %c0_47 = arith.constant 0 : index
    %c0_48 = arith.constant 0 : index
    %88 = vector.load %arg2[%c5_46, %c0_47, %c0_48] : memref<8x32x128xf32, #tpu.memory_space<vmem>>, vector<1x32x128xf32>
    %89 = vector.shape_cast %88 : vector<1x32x128xf32> to vector<32x128xf32>
    %90 = vector.extract_strided_slice %56 {offsets = [5, 0], sizes = [1, 128], strides = [1, 1]} : vector<8x128xf32> to vector<1x128xf32>
    %91 = vector.broadcast %90 : vector<1x128xf32> to vector<32x128xf32>
    %92 = arith.mulf %89, %91 : vector<32x128xf32>
    %93 = arith.addf %87, %92 : vector<32x128xf32>
    %c6_49 = arith.constant 6 : index
    %c0_50 = arith.constant 0 : index
    %c0_51 = arith.constant 0 : index
    %94 = vector.load %arg2[%c6_49, %c0_50, %c0_51] : memref<8x32x128xf32, #tpu.memory_space<vmem>>, vector<1x32x128xf32>
    %95 = vector.shape_cast %94 : vector<1x32x128xf32> to vector<32x128xf32>
    %96 = vector.extract_strided_slice %56 {offsets = [6, 0], sizes = [1, 128], strides = [1, 1]} : vector<8x128xf32> to vector<1x128xf32>
    %97 = vector.broadcast %96 : vector<1x128xf32> to vector<32x128xf32>
    %98 = arith.mulf %95, %97 : vector<32x128xf32>
    %99 = arith.addf %93, %98 : vector<32x128xf32>
    %c7_52 = arith.constant 7 : index
    %c0_53 = arith.constant 0 : index
    %c0_54 = arith.constant 0 : index
    %100 = vector.load %arg2[%c7_52, %c0_53, %c0_54] : memref<8x32x128xf32, #tpu.memory_space<vmem>>, vector<1x32x128xf32>
    %101 = vector.shape_cast %100 : vector<1x32x128xf32> to vector<32x128xf32>
    %102 = vector.extract_strided_slice %56 {offsets = [7, 0], sizes = [1, 128], strides = [1, 1]} : vector<8x128xf32> to vector<1x128xf32>
    %103 = vector.broadcast %102 : vector<1x128xf32> to vector<32x128xf32>
    %104 = arith.mulf %101, %103 : vector<32x128xf32>
    %105 = arith.addf %99, %104 : vector<32x128xf32>
    %c0_55 = arith.constant 0 : index
    %c0_56 = arith.constant 0 : index
    %c0_57 = arith.constant 0 : index
    %106 = vector.load %arg7[%c0_55, %c0_56, %c0_57] : memref<3x8x128xf32, #tpu.memory_space<vmem>>, vector<1x8x128xf32>
    %107 = vector.shape_cast %106 : vector<1x8x128xf32> to vector<8x128xf32>
    %108 = vector.shape_cast %56 : vector<8x128xf32> to vector<1x8x128xf32>
    tpu.vector_store %arg7[%c0_55, %c0_56, %c0_57], %108 {strides = array<i32>} : memref<3x8x128xf32, #tpu.memory_space<vmem>>, vector<1x8x128xf32>,
    %c0_58 = arith.constant 0 : index
    %c0_59 = arith.constant 0 : index
    %c0_60 = arith.constant 0 : index
    %109 = vector.load %arg8[%c0_58, %c0_59, %c0_60] : memref<3x32x128xf32, #tpu.memory_space<vmem>>, vector<1x32x128xf32>
    %110 = vector.shape_cast %109 : vector<1x32x128xf32> to vector<32x128xf32>
    %111 = vector.shape_cast %105 : vector<32x128xf32> to vector<1x32x128xf32>
    tpu.vector_store %arg8[%c0_58, %c0_59, %c0_60], %111 {strides = array<i32>} : memref<3x32x128xf32, #tpu.memory_space<vmem>>, vector<1x32x128xf32>,
    %c0_61 = arith.constant 0 : index
    %c0_62 = arith.constant 0 : index
    %c0_63 = arith.constant 0 : index
    %112 = vector.load %arg5[%c0_61, %c0_62, %c0_63] : memref<2x32x32xf32, #tpu.memory_space<vmem>>, vector<1x32x32xf32>
    %113 = vector.shape_cast %112 : vector<1x32x32xf32> to vector<32x32xf32>
    %cst_64 = arith.constant dense<0.000000e+00> : vector<32x128xf32>
    %114 = tpu.matmul %113, %4, %cst_64 {dimension_numbers = #tpu.dot_dimension_numbers<[1], [0], [0], [1], [0, 0, 1, 1], [], []>} : vector<32x32xf32>, vector<32x128xf32>, vector<32x128xf32> -> vector<32x128xf32>
    %c0_65 = arith.constant 0 : index
    %c0_66 = arith.constant 0 : index
    %c0_67 = arith.constant 0 : index
    %115 = vector.load %arg6[%c0_65, %c0_66, %c0_67] : memref<2x32x1xf32, #tpu.memory_space<vmem>>, vector<1x32x1xf32>
    %116 = vector.shape_cast %115 : vector<1x32x1xf32> to vector<32x1xf32>
    %117 = vector.broadcast %116 : vector<32x1xf32> to vector<32x128xf32>
    %118 = arith.addf %114, %117 : vector<32x128xf32>
    %119 = arith.addf %118, %105 : vector<32x128xf32>
    %cst_68 = arith.constant 0.000000e+00 : f32
    %120 = vector.broadcast %cst_68 : f32 to vector<32x128xf32>
    %121 = arith.maximumf %119, %120 : vector<32x128xf32>
    %c0_69 = arith.constant 0 : index
    %c0_70 = arith.constant 0 : index
    %c0_71 = arith.constant 0 : index
    %122 = vector.load %arg1[%c0_69, %c0_70, %c0_71] : memref<8x32x128xf32, #tpu.memory_space<vmem>>, vector<1x32x128xf32>
    %123 = vector.shape_cast %122 : vector<1x32x128xf32> to vector<32x128xf32>
    %124 = arith.mulf %123, %121 : vector<32x128xf32>
    %cst_72 = arith.constant dense<0.000000e+00> : vector<128xf32>
    %125 = vector.multi_reduction <add>, %124, %cst_72 [0] : vector<32x128xf32> to vector<128xf32>
    %126 = vector.shape_cast %125 : vector<128xf32> to vector<1x128xf32>
    %c1_73 = arith.constant 1 : index
    %c0_74 = arith.constant 0 : index
    %c0_75 = arith.constant 0 : index
    %127 = vector.load %arg1[%c1_73, %c0_74, %c0_75] : memref<8x32x128xf32, #tpu.memory_space<vmem>>, vector<1x32x128xf32>
    %128 = vector.shape_cast %127 : vector<1x32x128xf32> to vector<32x128xf32>
    %129 = arith.mulf %128, %121 : vector<32x128xf32>
    %cst_76 = arith.constant dense<0.000000e+00> : vector<128xf32>
    %130 = vector.multi_reduction <add>, %129, %cst_76 [0] : vector<32x128xf32> to vector<128xf32>
    %131 = vector.shape_cast %130 : vector<128xf32> to vector<1x128xf32>
    %c2_77 = arith.constant 2 : index
    %c0_78 = arith.constant 0 : index
    %c0_79 = arith.constant 0 : index
    %132 = vector.load %arg1[%c2_77, %c0_78, %c0_79] : memref<8x32x128xf32, #tpu.memory_space<vmem>>, vector<1x32x128xf32>
    %133 = vector.shape_cast %132 : vector<1x32x128xf32> to vector<32x128xf32>
    %134 = arith.mulf %133, %121 : vector<32x128xf32>
    %cst_80 = arith.constant dense<0.000000e+00> : vector<128xf32>
    %135 = vector.multi_reduction <add>, %134, %cst_80 [0] : vector<32x128xf32> to vector<128xf32>
    %136 = vector.shape_cast %135 : vector<128xf32> to vector<1x128xf32>
    %c3_81 = arith.constant 3 : index
    %c0_82 = arith.constant 0 : index
    %c0_83 = arith.constant 0 : index
    %137 = vector.load %arg1[%c3_81, %c0_82, %c0_83] : memref<8x32x128xf32, #tpu.memory_space<vmem>>, vector<1x32x128xf32>
    %138 = vector.shape_cast %137 : vector<1x32x128xf32> to vector<32x128xf32>
    %139 = arith.mulf %138, %121 : vector<32x128xf32>
    %cst_84 = arith.constant dense<0.000000e+00> : vector<128xf32>
    %140 = vector.multi_reduction <add>, %139, %cst_84 [0] : vector<32x128xf32> to vector<128xf32>
    %141 = vector.shape_cast %140 : vector<128xf32> to vector<1x128xf32>
    %c4_85 = arith.constant 4 : index
    %c0_86 = arith.constant 0 : index
    %c0_87 = arith.constant 0 : index
    %142 = vector.load %arg1[%c4_85, %c0_86, %c0_87] : memref<8x32x128xf32, #tpu.memory_space<vmem>>, vector<1x32x128xf32>
    %143 = vector.shape_cast %142 : vector<1x32x128xf32> to vector<32x128xf32>
    %144 = arith.mulf %143, %121 : vector<32x128xf32>
    %cst_88 = arith.constant dense<0.000000e+00> : vector<128xf32>
    %145 = vector.multi_reduction <add>, %144, %cst_88 [0] : vector<32x128xf32> to vector<128xf32>
    %146 = vector.shape_cast %145 : vector<128xf32> to vector<1x128xf32>
    %c5_89 = arith.constant 5 : index
    %c0_90 = arith.constant 0 : index
    %c0_91 = arith.constant 0 : index
    %147 = vector.load %arg1[%c5_89, %c0_90, %c0_91] : memref<8x32x128xf32, #tpu.memory_space<vmem>>, vector<1x32x128xf32>
    %148 = vector.shape_cast %147 : vector<1x32x128xf32> to vector<32x128xf32>
    %149 = arith.mulf %148, %121 : vector<32x128xf32>
    %cst_92 = arith.constant dense<0.000000e+00> : vector<128xf32>
    %150 = vector.multi_reduction <add>, %149, %cst_92 [0] : vector<32x128xf32> to vector<128xf32>
    %151 = vector.shape_cast %150 : vector<128xf32> to vector<1x128xf32>
    %c6_93 = arith.constant 6 : index
    %c0_94 = arith.constant 0 : index
    %c0_95 = arith.constant 0 : index
    %152 = vector.load %arg1[%c6_93, %c0_94, %c0_95] : memref<8x32x128xf32, #tpu.memory_space<vmem>>, vector<1x32x128xf32>
    %153 = vector.shape_cast %152 : vector<1x32x128xf32> to vector<32x128xf32>
    %154 = arith.mulf %153, %121 : vector<32x128xf32>
    %cst_96 = arith.constant dense<0.000000e+00> : vector<128xf32>
    %155 = vector.multi_reduction <add>, %154, %cst_96 [0] : vector<32x128xf32> to vector<128xf32>
    %156 = vector.shape_cast %155 : vector<128xf32> to vector<1x128xf32>
    %c7_97 = arith.constant 7 : index
    %c0_98 = arith.constant 0 : index
    %c0_99 = arith.constant 0 : index
    %157 = vector.load %arg1[%c7_97, %c0_98, %c0_99] : memref<8x32x128xf32, #tpu.memory_space<vmem>>, vector<1x32x128xf32>
    %158 = vector.shape_cast %157 : vector<1x32x128xf32> to vector<32x128xf32>
    %159 = arith.mulf %158, %121 : vector<32x128xf32>
    %cst_100 = arith.constant dense<0.000000e+00> : vector<128xf32>
    %160 = vector.multi_reduction <add>, %159, %cst_100 [0] : vector<32x128xf32> to vector<128xf32>
    %161 = vector.shape_cast %160 : vector<128xf32> to vector<1x128xf32>
    %162 = tpu.concatenate %126, %131, %136, %141, %146, %151, %156, %161 in 0 : vector<1x128xf32>, vector<1x128xf32>, vector<1x128xf32>, vector<1x128xf32>, vector<1x128xf32>, vector<1x128xf32>, vector<1x128xf32>, vector<1x128xf32> -> vector<8x128xf32>
    %cst_101 = arith.constant -3.40282347E+38 : f32
    %163 = vector.broadcast %cst_101 : f32 to vector<8x128xf32>
    %164 = arith.select %3, %162, %163 : vector<8x128xi1>, vector<8x128xf32>
    %cst_102 = arith.constant dense<0xFF800000> : vector<128xf32>
    %165 = vector.multi_reduction <maximumf>, %164, %cst_102 [0] : vector<8x128xf32> to vector<128xf32>
    %166 = vector.shape_cast %165 : vector<128xf32> to vector<1x128xf32>
    %167 = vector.broadcast %166 : vector<1x128xf32> to vector<8x128xf32>
    %168 = arith.subf %164, %167 : vector<8x128xf32>
    %169 = math.exp %168 : vector<8x128xf32>
    %cst_103 = arith.constant dense<0.000000e+00> : vector<128xf32>
    %170 = vector.multi_reduction <add>, %169, %cst_103 [0] : vector<8x128xf32> to vector<128xf32>
    %171 = vector.shape_cast %170 : vector<128xf32> to vector<1x128xf32>
    %172 = vector.broadcast %171 : vector<1x128xf32> to vector<8x128xf32>
    %173 = arith.divf %169, %172 : vector<8x128xf32>
    %cst_104 = arith.constant 0.000000e+00 : f32
    %174 = vector.broadcast %cst_104 : f32 to vector<32x128xf32>
    %c0_105 = arith.constant 0 : index
    %c0_106 = arith.constant 0 : index
    %c0_107 = arith.constant 0 : index
    %175 = vector.load %arg2[%c0_105, %c0_106, %c0_107] : memref<8x32x128xf32, #tpu.memory_space<vmem>>, vector<1x32x128xf32>
    %176 = vector.shape_cast %175 : vector<1x32x128xf32> to vector<32x128xf32>
    %177 = vector.extract_strided_slice %173 {offsets = [0, 0], sizes = [1, 128], strides = [1, 1]} : vector<8x128xf32> to vector<1x128xf32>
    %178 = vector.broadcast %177 : vector<1x128xf32> to vector<32x128xf32>
    %179 = arith.mulf %176, %178 : vector<32x128xf32>
    %180 = arith.addf %174, %179 : vector<32x128xf32>
    %c1_108 = arith.constant 1 : index
    %c0_109 = arith.constant 0 : index
    %c0_110 = arith.constant 0 : index
    %181 = vector.load %arg2[%c1_108, %c0_109, %c0_110] : memref<8x32x128xf32, #tpu.memory_space<vmem>>, vector<1x32x128xf32>
    %182 = vector.shape_cast %181 : vector<1x32x128xf32> to vector<32x128xf32>
    %183 = vector.extract_strided_slice %173 {offsets = [1, 0], sizes = [1, 128], strides = [1, 1]} : vector<8x128xf32> to vector<1x128xf32>
    %184 = vector.broadcast %183 : vector<1x128xf32> to vector<32x128xf32>
    %185 = arith.mulf %182, %184 : vector<32x128xf32>
    %186 = arith.addf %180, %185 : vector<32x128xf32>
    %c2_111 = arith.constant 2 : index
    %c0_112 = arith.constant 0 : index
    %c0_113 = arith.constant 0 : index
    %187 = vector.load %arg2[%c2_111, %c0_112, %c0_113] : memref<8x32x128xf32, #tpu.memory_space<vmem>>, vector<1x32x128xf32>
    %188 = vector.shape_cast %187 : vector<1x32x128xf32> to vector<32x128xf32>
    %189 = vector.extract_strided_slice %173 {offsets = [2, 0], sizes = [1, 128], strides = [1, 1]} : vector<8x128xf32> to vector<1x128xf32>
    %190 = vector.broadcast %189 : vector<1x128xf32> to vector<32x128xf32>
    %191 = arith.mulf %188, %190 : vector<32x128xf32>
    %192 = arith.addf %186, %191 : vector<32x128xf32>
    %c3_114 = arith.constant 3 : index
    %c0_115 = arith.constant 0 : index
    %c0_116 = arith.constant 0 : index
    %193 = vector.load %arg2[%c3_114, %c0_115, %c0_116] : memref<8x32x128xf32, #tpu.memory_space<vmem>>, vector<1x32x128xf32>
    %194 = vector.shape_cast %193 : vector<1x32x128xf32> to vector<32x128xf32>
    %195 = vector.extract_strided_slice %173 {offsets = [3, 0], sizes = [1, 128], strides = [1, 1]} : vector<8x128xf32> to vector<1x128xf32>
    %196 = vector.broadcast %195 : vector<1x128xf32> to vector<32x128xf32>
    %197 = arith.mulf %194, %196 : vector<32x128xf32>
    %198 = arith.addf %192, %197 : vector<32x128xf32>
    %c4_117 = arith.constant 4 : index
    %c0_118 = arith.constant 0 : index
    %c0_119 = arith.constant 0 : index
    %199 = vector.load %arg2[%c4_117, %c0_118, %c0_119] : memref<8x32x128xf32, #tpu.memory_space<vmem>>, vector<1x32x128xf32>
    %200 = vector.shape_cast %199 : vector<1x32x128xf32> to vector<32x128xf32>
    %201 = vector.extract_strided_slice %173 {offsets = [4, 0], sizes = [1, 128], strides = [1, 1]} : vector<8x128xf32> to vector<1x128xf32>
    %202 = vector.broadcast %201 : vector<1x128xf32> to vector<32x128xf32>
    %203 = arith.mulf %200, %202 : vector<32x128xf32>
    %204 = arith.addf %198, %203 : vector<32x128xf32>
    %c5_120 = arith.constant 5 : index
    %c0_121 = arith.constant 0 : index
    %c0_122 = arith.constant 0 : index
    %205 = vector.load %arg2[%c5_120, %c0_121, %c0_122] : memref<8x32x128xf32, #tpu.memory_space<vmem>>, vector<1x32x128xf32>
    %206 = vector.shape_cast %205 : vector<1x32x128xf32> to vector<32x128xf32>
    %207 = vector.extract_strided_slice %173 {offsets = [5, 0], sizes = [1, 128], strides = [1, 1]} : vector<8x128xf32> to vector<1x128xf32>
    %208 = vector.broadcast %207 : vector<1x128xf32> to vector<32x128xf32>
    %209 = arith.mulf %206, %208 : vector<32x128xf32>
    %210 = arith.addf %204, %209 : vector<32x128xf32>
    %c6_123 = arith.constant 6 : index
    %c0_124 = arith.constant 0 : index
    %c0_125 = arith.constant 0 : index
    %211 = vector.load %arg2[%c6_123, %c0_124, %c0_125] : memref<8x32x128xf32, #tpu.memory_space<vmem>>, vector<1x32x128xf32>
    %212 = vector.shape_cast %211 : vector<1x32x128xf32> to vector<32x128xf32>
    %213 = vector.extract_strided_slice %173 {offsets = [6, 0], sizes = [1, 128], strides = [1, 1]} : vector<8x128xf32> to vector<1x128xf32>
    %214 = vector.broadcast %213 : vector<1x128xf32> to vector<32x128xf32>
    %215 = arith.mulf %212, %214 : vector<32x128xf32>
    %216 = arith.addf %210, %215 : vector<32x128xf32>
    %c7_126 = arith.constant 7 : index
    %c0_127 = arith.constant 0 : index
    %c0_128 = arith.constant 0 : index
    %217 = vector.load %arg2[%c7_126, %c0_127, %c0_128] : memref<8x32x128xf32, #tpu.memory_space<vmem>>, vector<1x32x128xf32>
    %218 = vector.shape_cast %217 : vector<1x32x128xf32> to vector<32x128xf32>
    %219 = vector.extract_strided_slice %173 {offsets = [7, 0], sizes = [1, 128], strides = [1, 1]} : vector<8x128xf32> to vector<1x128xf32>
    %220 = vector.broadcast %219 : vector<1x128xf32> to vector<32x128xf32>
    %221 = arith.mulf %218, %220 : vector<32x128xf32>
    %222 = arith.addf %216, %221 : vector<32x128xf32>
    %c1_129 = arith.constant 1 : index
    %c0_130 = arith.constant 0 : index
    %c0_131 = arith.constant 0 : index
    %223 = vector.load %arg7[%c1_129, %c0_130, %c0_131] : memref<3x8x128xf32, #tpu.memory_space<vmem>>, vector<1x8x128xf32>
    %224 = vector.shape_cast %223 : vector<1x8x128xf32> to vector<8x128xf32>
    %225 = vector.shape_cast %173 : vector<8x128xf32> to vector<1x8x128xf32>
    tpu.vector_store %arg7[%c1_129, %c0_130, %c0_131], %225 {strides = array<i32>} : memref<3x8x128xf32, #tpu.memory_space<vmem>>, vector<1x8x128xf32>,
    %c1_132 = arith.constant 1 : index
    %c0_133 = arith.constant 0 : index
    %c0_134 = arith.constant 0 : index
    %226 = vector.load %arg8[%c1_132, %c0_133, %c0_134] : memref<3x32x128xf32, #tpu.memory_space<vmem>>, vector<1x32x128xf32>
    %227 = vector.shape_cast %226 : vector<1x32x128xf32> to vector<32x128xf32>
    %228 = vector.shape_cast %222 : vector<32x128xf32> to vector<1x32x128xf32>
    tpu.vector_store %arg8[%c1_132, %c0_133, %c0_134], %228 {strides = array<i32>} : memref<3x32x128xf32, #tpu.memory_space<vmem>>, vector<1x32x128xf32>,
    %c1_135 = arith.constant 1 : index
    %c0_136 = arith.constant 0 : index
    %c0_137 = arith.constant 0 : index
    %229 = vector.load %arg5[%c1_135, %c0_136, %c0_137] : memref<2x32x32xf32, #tpu.memory_space<vmem>>, vector<1x32x32xf32>
    %230 = vector.shape_cast %229 : vector<1x32x32xf32> to vector<32x32xf32>
    %cst_138 = arith.constant dense<0.000000e+00> : vector<32x128xf32>
    %231 = tpu.matmul %230, %121, %cst_138 {dimension_numbers = #tpu.dot_dimension_numbers<[1], [0], [0], [1], [0, 0, 1, 1], [], []>} : vector<32x32xf32>, vector<32x128xf32>, vector<32x128xf32> -> vector<32x128xf32>
    %c1_139 = arith.constant 1 : index
    %c0_140 = arith.constant 0 : index
    %c0_141 = arith.constant 0 : index
    %232 = vector.load %arg6[%c1_139, %c0_140, %c0_141] : memref<2x32x1xf32, #tpu.memory_space<vmem>>, vector<1x32x1xf32>
    %233 = vector.shape_cast %232 : vector<1x32x1xf32> to vector<32x1xf32>
    %234 = vector.broadcast %233 : vector<32x1xf32> to vector<32x128xf32>
    %235 = arith.addf %231, %234 : vector<32x128xf32>
    %236 = arith.addf %235, %222 : vector<32x128xf32>
    %cst_142 = arith.constant 0.000000e+00 : f32
    %237 = vector.broadcast %cst_142 : f32 to vector<32x128xf32>
    %238 = arith.maximumf %236, %237 : vector<32x128xf32>
    %c0_143 = arith.constant 0 : index
    %c0_144 = arith.constant 0 : index
    %c0_145 = arith.constant 0 : index
    %239 = vector.load %arg1[%c0_143, %c0_144, %c0_145] : memref<8x32x128xf32, #tpu.memory_space<vmem>>, vector<1x32x128xf32>
    %240 = vector.shape_cast %239 : vector<1x32x128xf32> to vector<32x128xf32>
    %241 = arith.mulf %240, %238 : vector<32x128xf32>
    %cst_146 = arith.constant dense<0.000000e+00> : vector<128xf32>
    %242 = vector.multi_reduction <add>, %241, %cst_146 [0] : vector<32x128xf32> to vector<128xf32>
    %243 = vector.shape_cast %242 : vector<128xf32> to vector<1x128xf32>
    %c1_147 = arith.constant 1 : index
    %c0_148 = arith.constant 0 : index
    %c0_149 = arith.constant 0 : index
    %244 = vector.load %arg1[%c1_147, %c0_148, %c0_149] : memref<8x32x128xf32, #tpu.memory_space<vmem>>, vector<1x32x128xf32>
    %245 = vector.shape_cast %244 : vector<1x32x128xf32> to vector<32x128xf32>
    %246 = arith.mulf %245, %238 : vector<32x128xf32>
    %cst_150 = arith.constant dense<0.000000e+00> : vector<128xf32>
    %247 = vector.multi_reduction <add>, %246, %cst_150 [0] : vector<32x128xf32> to vector<128xf32>
    %248 = vector.shape_cast %247 : vector<128xf32> to vector<1x128xf32>
    %c2_151 = arith.constant 2 : index
    %c0_152 = arith.constant 0 : index
    %c0_153 = arith.constant 0 : index
    %249 = vector.load %arg1[%c2_151, %c0_152, %c0_153] : memref<8x32x128xf32, #tpu.memory_space<vmem>>, vector<1x32x128xf32>
    %250 = vector.shape_cast %249 : vector<1x32x128xf32> to vector<32x128xf32>
    %251 = arith.mulf %250, %238 : vector<32x128xf32>
    %cst_154 = arith.constant dense<0.000000e+00> : vector<128xf32>
    %252 = vector.multi_reduction <add>, %251, %cst_154 [0] : vector<32x128xf32> to vector<128xf32>
    %253 = vector.shape_cast %252 : vector<128xf32> to vector<1x128xf32>
    %c3_155 = arith.constant 3 : index
    %c0_156 = arith.constant 0 : index
    %c0_157 = arith.constant 0 : index
    %254 = vector.load %arg1[%c3_155, %c0_156, %c0_157] : memref<8x32x128xf32, #tpu.memory_space<vmem>>, vector<1x32x128xf32>
    %255 = vector.shape_cast %254 : vector<1x32x128xf32> to vector<32x128xf32>
    %256 = arith.mulf %255, %238 : vector<32x128xf32>
    %cst_158 = arith.constant dense<0.000000e+00> : vector<128xf32>
    %257 = vector.multi_reduction <add>, %256, %cst_158 [0] : vector<32x128xf32> to vector<128xf32>
    %258 = vector.shape_cast %257 : vector<128xf32> to vector<1x128xf32>
    %c4_159 = arith.constant 4 : index
    %c0_160 = arith.constant 0 : index
    %c0_161 = arith.constant 0 : index
    %259 = vector.load %arg1[%c4_159, %c0_160, %c0_161] : memref<8x32x128xf32, #tpu.memory_space<vmem>>, vector<1x32x128xf32>
    %260 = vector.shape_cast %259 : vector<1x32x128xf32> to vector<32x128xf32>
    %261 = arith.mulf %260, %238 : vector<32x128xf32>
    %cst_162 = arith.constant dense<0.000000e+00> : vector<128xf32>
    %262 = vector.multi_reduction <add>, %261, %cst_162 [0] : vector<32x128xf32> to vector<128xf32>
    %263 = vector.shape_cast %262 : vector<128xf32> to vector<1x128xf32>
    %c5_163 = arith.constant 5 : index
    %c0_164 = arith.constant 0 : index
    %c0_165 = arith.constant 0 : index
    %264 = vector.load %arg1[%c5_163, %c0_164, %c0_165] : memref<8x32x128xf32, #tpu.memory_space<vmem>>, vector<1x32x128xf32>
    %265 = vector.shape_cast %264 : vector<1x32x128xf32> to vector<32x128xf32>
    %266 = arith.mulf %265, %238 : vector<32x128xf32>
    %cst_166 = arith.constant dense<0.000000e+00> : vector<128xf32>
    %267 = vector.multi_reduction <add>, %266, %cst_166 [0] : vector<32x128xf32> to vector<128xf32>
    %268 = vector.shape_cast %267 : vector<128xf32> to vector<1x128xf32>
    %c6_167 = arith.constant 6 : index
    %c0_168 = arith.constant 0 : index
    %c0_169 = arith.constant 0 : index
    %269 = vector.load %arg1[%c6_167, %c0_168, %c0_169] : memref<8x32x128xf32, #tpu.memory_space<vmem>>, vector<1x32x128xf32>
    %270 = vector.shape_cast %269 : vector<1x32x128xf32> to vector<32x128xf32>
    %271 = arith.mulf %270, %238 : vector<32x128xf32>
    %cst_170 = arith.constant dense<0.000000e+00> : vector<128xf32>
    %272 = vector.multi_reduction <add>, %271, %cst_170 [0] : vector<32x128xf32> to vector<128xf32>
    %273 = vector.shape_cast %272 : vector<128xf32> to vector<1x128xf32>
    %c7_171 = arith.constant 7 : index
    %c0_172 = arith.constant 0 : index
    %c0_173 = arith.constant 0 : index
    %274 = vector.load %arg1[%c7_171, %c0_172, %c0_173] : memref<8x32x128xf32, #tpu.memory_space<vmem>>, vector<1x32x128xf32>
    %275 = vector.shape_cast %274 : vector<1x32x128xf32> to vector<32x128xf32>
    %276 = arith.mulf %275, %238 : vector<32x128xf32>
    %cst_174 = arith.constant dense<0.000000e+00> : vector<128xf32>
    %277 = vector.multi_reduction <add>, %276, %cst_174 [0] : vector<32x128xf32> to vector<128xf32>
    %278 = vector.shape_cast %277 : vector<128xf32> to vector<1x128xf32>
    %279 = tpu.concatenate %243, %248, %253, %258, %263, %268, %273, %278 in 0 : vector<1x128xf32>, vector<1x128xf32>, vector<1x128xf32>, vector<1x128xf32>, vector<1x128xf32>, vector<1x128xf32>, vector<1x128xf32>, vector<1x128xf32> -> vector<8x128xf32>
    %cst_175 = arith.constant -3.40282347E+38 : f32
    %280 = vector.broadcast %cst_175 : f32 to vector<8x128xf32>
    %281 = arith.select %3, %279, %280 : vector<8x128xi1>, vector<8x128xf32>
    %cst_176 = arith.constant dense<0xFF800000> : vector<128xf32>
    %282 = vector.multi_reduction <maximumf>, %281, %cst_176 [0] : vector<8x128xf32> to vector<128xf32>
    %283 = vector.shape_cast %282 : vector<128xf32> to vector<1x128xf32>
    %284 = vector.broadcast %283 : vector<1x128xf32> to vector<8x128xf32>
    %285 = arith.subf %281, %284 : vector<8x128xf32>
    %286 = math.exp %285 : vector<8x128xf32>
    %cst_177 = arith.constant dense<0.000000e+00> : vector<128xf32>
    %287 = vector.multi_reduction <add>, %286, %cst_177 [0] : vector<8x128xf32> to vector<128xf32>
    %288 = vector.shape_cast %287 : vector<128xf32> to vector<1x128xf32>
    %289 = vector.broadcast %288 : vector<1x128xf32> to vector<8x128xf32>
    %290 = arith.divf %286, %289 : vector<8x128xf32>
    %cst_178 = arith.constant 0.000000e+00 : f32
    %291 = vector.broadcast %cst_178 : f32 to vector<32x128xf32>
    %c0_179 = arith.constant 0 : index
    %c0_180 = arith.constant 0 : index
    %c0_181 = arith.constant 0 : index
    %292 = vector.load %arg2[%c0_179, %c0_180, %c0_181] : memref<8x32x128xf32, #tpu.memory_space<vmem>>, vector<1x32x128xf32>
    %293 = vector.shape_cast %292 : vector<1x32x128xf32> to vector<32x128xf32>
    %294 = vector.extract_strided_slice %290 {offsets = [0, 0], sizes = [1, 128], strides = [1, 1]} : vector<8x128xf32> to vector<1x128xf32>
    %295 = vector.broadcast %294 : vector<1x128xf32> to vector<32x128xf32>
    %296 = arith.mulf %293, %295 : vector<32x128xf32>
    %297 = arith.addf %291, %296 : vector<32x128xf32>
    %c1_182 = arith.constant 1 : index
    %c0_183 = arith.constant 0 : index
    %c0_184 = arith.constant 0 : index
    %298 = vector.load %arg2[%c1_182, %c0_183, %c0_184] : memref<8x32x128xf32, #tpu.memory_space<vmem>>, vector<1x32x128xf32>
    %299 = vector.shape_cast %298 : vector<1x32x128xf32> to vector<32x128xf32>
    %300 = vector.extract_strided_slice %290 {offsets = [1, 0], sizes = [1, 128], strides = [1, 1]} : vector<8x128xf32> to vector<1x128xf32>
    %301 = vector.broadcast %300 : vector<1x128xf32> to vector<32x128xf32>
    %302 = arith.mulf %299, %301 : vector<32x128xf32>
    %303 = arith.addf %297, %302 : vector<32x128xf32>
    %c2_185 = arith.constant 2 : index
    %c0_186 = arith.constant 0 : index
    %c0_187 = arith.constant 0 : index
    %304 = vector.load %arg2[%c2_185, %c0_186, %c0_187] : memref<8x32x128xf32, #tpu.memory_space<vmem>>, vector<1x32x128xf32>
    %305 = vector.shape_cast %304 : vector<1x32x128xf32> to vector<32x128xf32>
    %306 = vector.extract_strided_slice %290 {offsets = [2, 0], sizes = [1, 128], strides = [1, 1]} : vector<8x128xf32> to vector<1x128xf32>
    %307 = vector.broadcast %306 : vector<1x128xf32> to vector<32x128xf32>
    %308 = arith.mulf %305, %307 : vector<32x128xf32>
    %309 = arith.addf %303, %308 : vector<32x128xf32>
    %c3_188 = arith.constant 3 : index
    %c0_189 = arith.constant 0 : index
    %c0_190 = arith.constant 0 : index
    %310 = vector.load %arg2[%c3_188, %c0_189, %c0_190] : memref<8x32x128xf32, #tpu.memory_space<vmem>>, vector<1x32x128xf32>
    %311 = vector.shape_cast %310 : vector<1x32x128xf32> to vector<32x128xf32>
    %312 = vector.extract_strided_slice %290 {offsets = [3, 0], sizes = [1, 128], strides = [1, 1]} : vector<8x128xf32> to vector<1x128xf32>
    %313 = vector.broadcast %312 : vector<1x128xf32> to vector<32x128xf32>
    %314 = arith.mulf %311, %313 : vector<32x128xf32>
    %315 = arith.addf %309, %314 : vector<32x128xf32>
    %c4_191 = arith.constant 4 : index
    %c0_192 = arith.constant 0 : index
    %c0_193 = arith.constant 0 : index
    %316 = vector.load %arg2[%c4_191, %c0_192, %c0_193] : memref<8x32x128xf32, #tpu.memory_space<vmem>>, vector<1x32x128xf32>
    %317 = vector.shape_cast %316 : vector<1x32x128xf32> to vector<32x128xf32>
    %318 = vector.extract_strided_slice %290 {offsets = [4, 0], sizes = [1, 128], strides = [1, 1]} : vector<8x128xf32> to vector<1x128xf32>
    %319 = vector.broadcast %318 : vector<1x128xf32> to vector<32x128xf32>
    %320 = arith.mulf %317, %319 : vector<32x128xf32>
    %321 = arith.addf %315, %320 : vector<32x128xf32>
    %c5_194 = arith.constant 5 : index
    %c0_195 = arith.constant 0 : index
    %c0_196 = arith.constant 0 : index
    %322 = vector.load %arg2[%c5_194, %c0_195, %c0_196] : memref<8x32x128xf32, #tpu.memory_space<vmem>>, vector<1x32x128xf32>
    %323 = vector.shape_cast %322 : vector<1x32x128xf32> to vector<32x128xf32>
    %324 = vector.extract_strided_slice %290 {offsets = [5, 0], sizes = [1, 128], strides = [1, 1]} : vector<8x128xf32> to vector<1x128xf32>
    %325 = vector.broadcast %324 : vector<1x128xf32> to vector<32x128xf32>
    %326 = arith.mulf %323, %325 : vector<32x128xf32>
    %327 = arith.addf %321, %326 : vector<32x128xf32>
    %c6_197 = arith.constant 6 : index
    %c0_198 = arith.constant 0 : index
    %c0_199 = arith.constant 0 : index
    %328 = vector.load %arg2[%c6_197, %c0_198, %c0_199] : memref<8x32x128xf32, #tpu.memory_space<vmem>>, vector<1x32x128xf32>
    %329 = vector.shape_cast %328 : vector<1x32x128xf32> to vector<32x128xf32>
    %330 = vector.extract_strided_slice %290 {offsets = [6, 0], sizes = [1, 128], strides = [1, 1]} : vector<8x128xf32> to vector<1x128xf32>
    %331 = vector.broadcast %330 : vector<1x128xf32> to vector<32x128xf32>
    %332 = arith.mulf %329, %331 : vector<32x128xf32>
    %333 = arith.addf %327, %332 : vector<32x128xf32>
    %c7_200 = arith.constant 7 : index
    %c0_201 = arith.constant 0 : index
    %c0_202 = arith.constant 0 : index
    %334 = vector.load %arg2[%c7_200, %c0_201, %c0_202] : memref<8x32x128xf32, #tpu.memory_space<vmem>>, vector<1x32x128xf32>
    %335 = vector.shape_cast %334 : vector<1x32x128xf32> to vector<32x128xf32>
    %336 = vector.extract_strided_slice %290 {offsets = [7, 0], sizes = [1, 128], strides = [1, 1]} : vector<8x128xf32> to vector<1x128xf32>
    %337 = vector.broadcast %336 : vector<1x128xf32> to vector<32x128xf32>
    %338 = arith.mulf %335, %337 : vector<32x128xf32>
    %339 = arith.addf %333, %338 : vector<32x128xf32>
    %c2_203 = arith.constant 2 : index
    %c0_204 = arith.constant 0 : index
    %c0_205 = arith.constant 0 : index
    %340 = vector.load %arg7[%c2_203, %c0_204, %c0_205] : memref<3x8x128xf32, #tpu.memory_space<vmem>>, vector<1x8x128xf32>
    %341 = vector.shape_cast %340 : vector<1x8x128xf32> to vector<8x128xf32>
    %342 = vector.shape_cast %290 : vector<8x128xf32> to vector<1x8x128xf32>
    tpu.vector_store %arg7[%c2_203, %c0_204, %c0_205], %342 {strides = array<i32>} : memref<3x8x128xf32, #tpu.memory_space<vmem>>, vector<1x8x128xf32>,
    %c2_206 = arith.constant 2 : index
    %c0_207 = arith.constant 0 : index
    %c0_208 = arith.constant 0 : index
    %343 = vector.load %arg8[%c2_206, %c0_207, %c0_208] : memref<3x32x128xf32, #tpu.memory_space<vmem>>, vector<1x32x128xf32>
    %344 = vector.shape_cast %343 : vector<1x32x128xf32> to vector<32x128xf32>
    %345 = vector.shape_cast %339 : vector<32x128xf32> to vector<1x32x128xf32>
    tpu.vector_store %arg8[%c2_206, %c0_207, %c0_208], %345 {strides = array<i32>} : memref<3x32x128xf32, #tpu.memory_space<vmem>>, vector<1x32x128xf32>,
    return
  }
  func.func @transform_0(%arg0: i32) -> (i32, i32, i32) {
    %c0_i32 = arith.constant 0 : i32
    %c0_i32_0 = arith.constant 0 : i32
    %c0_i32_1 = arith.constant 0 : i32
    return %c0_i32, %c0_i32_0, %arg0 : i32, i32, i32
  }
  func.func @transform_1(%arg0: i32) -> (i32, i32, i32) {
    %c0_i32 = arith.constant 0 : i32
    %c0_i32_0 = arith.constant 0 : i32
    %c0_i32_1 = arith.constant 0 : i32
    return %c0_i32, %c0_i32_0, %arg0 : i32, i32, i32
  }
  func.func @transform_2(%arg0: i32) -> (i32, i32) {
    %c0_i32 = arith.constant 0 : i32
    %c0_i32_0 = arith.constant 0 : i32
    return %c0_i32, %arg0 : i32, i32
  }
  func.func @transform_3(%arg0: i32) -> (i32, i32) {
    %c0_i32 = arith.constant 0 : i32
    %c0_i32_0 = arith.constant 0 : i32
    return %c0_i32, %arg0 : i32, i32
  }
  func.func @transform_4(%arg0: i32) -> (i32, i32, i32) {
    %c0_i32 = arith.constant 0 : i32
    %c0_i32_0 = arith.constant 0 : i32
    %c0_i32_1 = arith.constant 0 : i32
    %c0_i32_2 = arith.constant 0 : i32
    return %c0_i32, %c0_i32_0, %c0_i32_1 : i32, i32, i32
  }
  func.func @transform_5(%arg0: i32) -> (i32, i32, i32) {
    %c0_i32 = arith.constant 0 : i32
    %c0_i32_0 = arith.constant 0 : i32
    %c0_i32_1 = arith.constant 0 : i32
    %c0_i32_2 = arith.constant 0 : i32
    return %c0_i32, %c0_i32_0, %c0_i32_1 : i32, i32, i32
  }
  func.func @transform_6(%arg0: i32) -> (i32, i32, i32) {
    %c0_i32 = arith.constant 0 : i32
    %c0_i32_0 = arith.constant 0 : i32
    %c0_i32_1 = arith.constant 0 : i32
    return %c0_i32, %c0_i32_0, %arg0 : i32, i32, i32
  }
  func.func @transform_7(%arg0: i32) -> (i32, i32, i32) {
    %c0_i32 = arith.constant 0 : i32
    %c0_i32_0 = arith.constant 0 : i32
    %c0_i32_1 = arith.constant 0 : i32
    return %c0_i32, %c0_i32_0, %arg0 : i32, i32, i32
  }
}

</mosaic_0001>

<llo_original>
// kernel: vlml_forward.1
$region0: #{vlml_forward.1}
  #allocation0 [shape = 'u32[]', space=smem, size = 0x4, offset = 0x4, fixed_abs, tag = 'smem constant byte address 0x4 - core index']
  #allocation1 [shape = 'u32[144,128]{1,0:T(1,128)}', space=vmem, size = 0x12000, scoped, tag = 'internal scratch']
  %s0 = inlined_call_operand.vmem [shape: f32[8,32,128], index: 0, kind: input, shape index: {}]
  %s1 = inlined_call_operand.vmem [shape: f32[8,32,128], index: 1, kind: input, shape index: {}]
  %s2 = inlined_call_operand.vmem [shape: f32[32,128], index: 2, kind: input, shape index: {}]
  %s3 = inlined_call_operand.vmem [shape: s32[1,128], index: 3, kind: input, shape index: {}]
  %s4 = inlined_call_operand.vmem [shape: f32[2,32,32], index: 4, kind: input, shape index: {}]
  %s5 = inlined_call_operand.vmem [shape: f32[2,32,1], index: 5, kind: input, shape index: {}]
  %s6 = inlined_call_operand.vmem [shape: f32[3,8,128], index: 6, kind: output, shape index: {0}]
  %s7 = inlined_call_operand.vmem [shape: f32[3,32,128], index: 7, kind: output, shape index: {1}]
  %8 = xla_tuple %s6, %s7
  %s9 = sld [smem:[#allocation0]]
  $region42: #{vlml_forward.1} parent=0
    _
  %s11 = ssub.s32 1, %s9
  %s12 = scalar_select 0, %s11, %s9
  // Predicated region
  $region2: #{vlml_forward.1} parent=0 // pred_check
    _
  $region3: #{vlml_forward.1} parent=0 // pred_check_branch
    %14 = sbr.rel (0) target = $region5
  $region4: #{vlml_forward.1} parent=0 // pred_region
    _
  $region5: #{vlml_forward.1} parent=0 // pred_fallthru
    _
  // Predicated region
  $region6: #{vlml_forward.1} parent=0 // pred_check
    _
  $region7: #{vlml_forward.1} parent=0 // pred_check_branch
    %16 = sbr.rel (0) target = $region9
  $region8: #{vlml_forward.1} parent=0 // pred_region
    _
  $region9: #{vlml_forward.1} parent=0 // pred_fallthru
    _
  // Predicated region
  $region10: #{vlml_forward.1} parent=0 // pred_check
    _
  $region11: #{vlml_forward.1} parent=0 // pred_check_branch
    %18 = sbr.rel (0) target = $region13
  $region12: #{vlml_forward.1} parent=0 // pred_region
    _
  $region13: #{vlml_forward.1} parent=0 // pred_fallthru
    _
  // Predicated region
  $region14: #{vlml_forward.1} parent=0 // pred_check
    _
  $region15: #{vlml_forward.1} parent=0 // pred_check_branch
    %20 = sbr.rel (0) target = $region17
  $region16: #{vlml_forward.1} parent=0 // pred_region
    _
  $region17: #{vlml_forward.1} parent=0 // pred_fallthru
    _
  // Predicated region
  $region18: #{vlml_forward.1} parent=0 // pred_check
    _
  $region19: #{vlml_forward.1} parent=0 // pred_check_branch
    %22 = sbr.rel (0) target = $region21
  $region20: #{vlml_forward.1} parent=0 // pred_region
    _
  $region21: #{vlml_forward.1} parent=0 // pred_fallthru
    _
  // Predicated region
  $region22: #{vlml_forward.1} parent=0 // pred_check
    _
  $region23: #{vlml_forward.1} parent=0 // pred_check_branch
    %24 = sbr.rel (0) target = $region25
  $region24: #{vlml_forward.1} parent=0 // pred_region
    _
  $region25: #{vlml_forward.1} parent=0 // pred_fallthru
    _
  %v25 = vlaneseq
  %v26 = vshrl.u32 %v25, 7
  %v27 = vld [vmem:[%s3] sm:$0x1]
  %v28 = vlaneseq
  %v29 = vshrl.u32 %v28, 7
  %v30 = vsub.s32 0, %v29
  %v31 = vrot.slane %v27, %v30
  %vm32 = vcmp.lt.s32.totalorder %v26, %v31
  %v33 = vld [vmem:[%s2] sm:$0xff]
  %v34 = vld [vmem:[%s2 + $0x8] sm:$0xff]
  %v35 = vld [vmem:[%s2 + $0x10] sm:$0xff]
  %v36 = vld [vmem:[%s2 + $0x18] sm:$0xff]
  %v37 = vld [vmem:[%s0] sm:$0xff]
  %v38 = vld [vmem:[%s0 + $0x8] sm:$0xff]
  %v39 = vld [vmem:[%s0 + $0x10] sm:$0xff]
  %v40 = vld [vmem:[%s0 + $0x18] sm:$0xff]
  %v41 = vmul.f32 %v37, %v33
  %v42 = vmul.f32 %v38, %v34
  %v43 = vmul.f32 %v39, %v35
  %v44 = vmul.f32 %v40, %v36
  %v45 = vadd.f32 %v41, %v42
  %v46 = vadd.f32 %v45, %v43
  %v47 = vadd.f32 %v46, %v44
  %v48 = vrot.slane %v47, 4
  %v49 = vadd.f32 %v47, %v48
  %v50 = vrot.slane %v49, 2
  %v51 = vadd.f32 %v49, %v50
  %v52 = vrot.slane %v51, 1
  %v53 = vadd.f32 %v51, %v52
  %s54 = scalar_lea.vmem %s0, 32
  %v55 = vld [vmem:[%s54] sm:$0xff]
  %v56 = vld [vmem:[%s54 + $0x8] sm:$0xff]
  %v57 = vld [vmem:[%s54 + $0x10] sm:$0xff]
  %v58 = vld [vmem:[%s54 + $0x18] sm:$0xff]
  %v59 = vmul.f32 %v55, %v33
  %v60 = vmul.f32 %v56, %v34
  %v61 = vmul.f32 %v57, %v35
  %v62 = vmul.f32 %v58, %v36
  %v63 = vadd.f32 %v59, %v60
  %v64 = vadd.f32 %v63, %v61
  %v65 = vadd.f32 %v64, %v62
  %v66 = vrot.slane %v65, 4
  %v67 = vadd.f32 %v65, %v66
  %v68 = vrot.slane %v67, 2
  %v69 = vadd.f32 %v67, %v68
  %v70 = vrot.slane %v69, 1
  %v71 = vadd.f32 %v69, %v70
  %s72 = scalar_lea.vmem %s0, 64
  %v73 = vld [vmem:[%s72] sm:$0xff]
  %v74 = vld [vmem:[%s72 + $0x8] sm:$0xff]
  %v75 = vld [vmem:[%s72 + $0x10] sm:$0xff]
  %v76 = vld [vmem:[%s72 + $0x18] sm:$0xff]
  %v77 = vmul.f32 %v73, %v33
  %v78 = vmul.f32 %v74, %v34
  %v79 = vmul.f32 %v75, %v35
  %v80 = vmul.f32 %v76, %v36
  %v81 = vadd.f32 %v77, %v78
  %v82 = vadd.f32 %v81, %v79
  %v83 = vadd.f32 %v82, %v80
  %v84 = vrot.slane %v83, 4
  %v85 = vadd.f32 %v83, %v84
  %v86 = vrot.slane %v85, 2
  %v87 = vadd.f32 %v85, %v86
  %v88 = vrot.slane %v87, 1
  %v89 = vadd.f32 %v87, %v88
  %s90 = scalar_lea.vmem %s0, 96
  %v91 = vld [vmem:[%s90] sm:$0xff]
  %v92 = vld [vmem:[%s90 + $0x8] sm:$0xff]
  %v93 = vld [vmem:[%s90 + $0x10] sm:$0xff]
  %v94 = vld [vmem:[%s90 + $0x18] sm:$0xff]
  %v95 = vmul.f32 %v91, %v33
  %v96 = vmul.f32 %v92, %v34
  %v97 = vmul.f32 %v93, %v35
  %v98 = vmul.f32 %v94, %v36
  %v99 = vadd.f32 %v95, %v96
  %v100 = vadd.f32 %v99, %v97
  %v101 = vadd.f32 %v100, %v98
  %v102 = vrot.slane %v101, 4
  %v103 = vadd.f32 %v101, %v102
  %v104 = vrot.slane %v103, 2
  %v105 = vadd.f32 %v103, %v104
  %v106 = vrot.slane %v105, 1
  %v107 = vadd.f32 %v105, %v106
  %s108 = scalar_lea.vmem %s0, 128
  %v109 = vld [vmem:[%s108] sm:$0xff]
  %v110 = vld [vmem:[%s108 + $0x8] sm:$0xff]
  %v111 = vld [vmem:[%s108 + $0x10] sm:$0xff]
  %v112 = vld [vmem:[%s108 + $0x18] sm:$0xff]
  %v113 = vmul.f32 %v109, %v33
  %v114 = vmul.f32 %v110, %v34
  %v115 = vmul.f32 %v111, %v35
  %v116 = vmul.f32 %v112, %v36
  %v117 = vadd.f32 %v113, %v114
  %v118 = vadd.f32 %v117, %v115
  %v119 = vadd.f32 %v118, %v116
  %v120 = vrot.slane %v119, 4
  %v121 = vadd.f32 %v119, %v120
  %v122 = vrot.slane %v121, 2
  %v123 = vadd.f32 %v121, %v122
  %v124 = vrot.slane %v123, 1
  %v125 = vadd.f32 %v123, %v124
  %s126 = scalar_lea.vmem %s0, 160
  %v127 = vld [vmem:[%s126] sm:$0xff]
  %v128 = vld [vmem:[%s126 + $0x8] sm:$0xff]
  %v129 = vld [vmem:[%s126 + $0x10] sm:$0xff]
  %v130 = vld [vmem:[%s126 + $0x18] sm:$0xff]
  %v131 = vmul.f32 %v127, %v33
  %v132 = vmul.f32 %v128, %v34
  %v133 = vmul.f32 %v129, %v35
  %v134 = vmul.f32 %v130, %v36
  %v135 = vadd.f32 %v131, %v132
  %v136 = vadd.f32 %v135, %v133
  %v137 = vadd.f32 %v136, %v134
  %v138 = vrot.slane %v137, 4
  %v139 = vadd.f32 %v137, %v138
  %v140 = vrot.slane %v139, 2
  %v141 = vadd.f32 %v139, %v140
  %v142 = vrot.slane %v141, 1
  %v143 = vadd.f32 %v141, %v142
  %s144 = scalar_lea.vmem %s0, 192
  %v145 = vld [vmem:[%s144] sm:$0xff]
  %v146 = vld [vmem:[%s144 + $0x8] sm:$0xff]
  %v147 = vld [vmem:[%s144 + $0x10] sm:$0xff]
  %v148 = vld [vmem:[%s144 + $0x18] sm:$0xff]
  %v149 = vmul.f32 %v145, %v33
  %v150 = vmul.f32 %v146, %v34
  %v151 = vmul.f32 %v147, %v35
  %v152 = vmul.f32 %v148, %v36
  %v153 = vadd.f32 %v149, %v150
  %v154 = vadd.f32 %v153, %v151
  %v155 = vadd.f32 %v154, %v152
  %v156 = vrot.slane %v155, 4
  %v157 = vadd.f32 %v155, %v156
  %v158 = vrot.slane %v157, 2
  %v159 = vadd.f32 %v157, %v158
  %v160 = vrot.slane %v159, 1
  %v161 = vadd.f32 %v159, %v160
  %s162 = scalar_lea.vmem %s0, 224
  %v163 = vld [vmem:[%s162] sm:$0xff]
  %v164 = vld [vmem:[%s162 + $0x8] sm:$0xff]
  %v165 = vld [vmem:[%s162 + $0x10] sm:$0xff]
  %v166 = vld [vmem:[%s162 + $0x18] sm:$0xff]
  %v167 = vmul.f32 %v163, %v33
  %v168 = vmul.f32 %v164, %v34
  %v169 = vmul.f32 %v165, %v35
  %v170 = vmul.f32 %v166, %v36
  %v171 = vadd.f32 %v167, %v168
  %v172 = vadd.f32 %v171, %v169
  %v173 = vadd.f32 %v172, %v170
  %v174 = vrot.slane %v173, 4
  %v175 = vadd.f32 %v173, %v174
  %v176 = vrot.slane %v175, 2
  %v177 = vadd.f32 %v175, %v176
  %v178 = vrot.slane %v177, 1
  %v179 = vadd.f32 %v177, %v178
  %vm180 = vcmask 1040384
  %v181 = vsel %vm180, %v53, %v71
  %vm182 = vcmask 1041408
  %v183 = vsel %vm182, %v181, %v89
  %vm184 = vcmask 1042432
  %v185 = vsel %vm184, %v183, %v107
  %vm186 = vcmask 1043456
  %v187 = vsel %vm186, %v185, %v125
  %vm188 = vcmask 1044480
  %v189 = vsel %vm188, %v187, %v143
  %vm190 = vcmask 1045504
  %v191 = vsel %vm190, %v189, %v161
  %vm192 = vcmask 1046528
  %v193 = vsel %vm192, %v191, %v179
  %v194 = vsel %vm32, %v193, -3.4028235e+38
  %v195 = vrot.slane %v194, 4
  %v196 = vmax.f32 %v194, %v195
  %v197 = vrot.slane %v196, 2
  %v198 = vmax.f32 %v196, %v197
  %v199 = vrot.slane %v198, 1
  %v200 = vmax.f32 %v198, %v199
  %v201 = vsub.f32 %v194, %v200
  %v202 = vmul.f32 %v201, 1.442695
  %v203 = vpow.pop %v202
  %v204 = vrot.slane %v203, 4
  %v205 = vadd.f32 %v203, %v204
  %v206 = vrot.slane %v205, 2
  %v207 = vadd.f32 %v205, %v206
  %v208 = vrot.slane %v207, 1
  %v209 = vadd.f32 %v207, %v208
  %v210 = vrcp.pop %v209
  %v211 = vmul.f32 %v203, %v210
  %v212 = vld [vmem:[%s1] sm:$0xff]
  %v213 = vld [vmem:[%s1 + $0x8] sm:$0xff]
  %v214 = vld [vmem:[%s1 + $0x10] sm:$0xff]
  %v215 = vld [vmem:[%s1 + $0x18] sm:$0xff]
  %v216 = vlaneseq
  %v217 = vshrl.u32 %v216, 7
  %v218 = vsub.s32 0, %v217
  %v219 = vrot.slane %v211, %v218
  %v220 = vmul.f32 %v212, %v219
  %v221 = vmul.f32 %v213, %v219
  %v222 = vmul.f32 %v214, %v219
  %v223 = vmul.f32 %v215, %v219
  %v224 = vadd.f32 %v220, 0.0
  %v225 = vadd.f32 %v221, 0.0
  %v226 = vadd.f32 %v222, 0.0
  %v227 = vadd.f32 %v223, 0.0
  %s228 = scalar_lea.vmem %s1, 32
  %v229 = vld [vmem:[%s228] sm:$0xff]
  %v230 = vld [vmem:[%s228 + $0x8] sm:$0xff]
  %v231 = vld [vmem:[%s228 + $0x10] sm:$0xff]
  %v232 = vld [vmem:[%s228 + $0x18] sm:$0xff]
  %v233 = vlaneseq
  %v234 = vshrl.u32 %v233, 7
  %v235 = vsub.s32 1, %v234
  %v236 = vrot.slane %v211, %v235
  %v237 = vmul.f32 %v229, %v236
  %v238 = vmul.f32 %v230, %v236
  %v239 = vmul.f32 %v231, %v236
  %v240 = vmul.f32 %v232, %v236
  %v241 = vadd.f32 %v224, %v237
  %v242 = vadd.f32 %v225, %v238
  %v243 = vadd.f32 %v226, %v239
  %v244 = vadd.f32 %v227, %v240
  %s245 = scalar_lea.vmem %s1, 64
  %v246 = vld [vmem:[%s245] sm:$0xff]
  %v247 = vld [vmem:[%s245 + $0x8] sm:$0xff]
  %v248 = vld [vmem:[%s245 + $0x10] sm:$0xff]
  %v249 = vld [vmem:[%s245 + $0x18] sm:$0xff]
  %v250 = vlaneseq
  %v251 = vshrl.u32 %v250, 7
  %v252 = vsub.s32 2, %v251
  %v253 = vrot.slane %v211, %v252
  %v254 = vmul.f32 %v246, %v253
  %v255 = vmul.f32 %v247, %v253
  %v256 = vmul.f32 %v248, %v253
  %v257 = vmul.f32 %v249, %v253
  %v258 = vadd.f32 %v241, %v254
  %v259 = vadd.f32 %v242, %v255
  %v260 = vadd.f32 %v243, %v256
  %v261 = vadd.f32 %v244, %v257
  %s262 = scalar_lea.vmem %s1, 96
  %v263 = vld [vmem:[%s262] sm:$0xff]
  %v264 = vld [vmem:[%s262 + $0x8] sm:$0xff]
  %v265 = vld [vmem:[%s262 + $0x10] sm:$0xff]
  %v266 = vld [vmem:[%s262 + $0x18] sm:$0xff]
  %v267 = vlaneseq
  %v268 = vshrl.u32 %v267, 7
  %v269 = vsub.s32 3, %v268
  %v270 = vrot.slane %v211, %v269
  %v271 = vmul.f32 %v263, %v270
  %v272 = vmul.f32 %v264, %v270
  %v273 = vmul.f32 %v265, %v270
  %v274 = vmul.f32 %v266, %v270
  %v275 = vadd.f32 %v258, %v271
  %v276 = vadd.f32 %v259, %v272
  %v277 = vadd.f32 %v260, %v273
  %v278 = vadd.f32 %v261, %v274
  %s279 = scalar_lea.vmem %s1, 128
  %v280 = vld [vmem:[%s279] sm:$0xff]
  %v281 = vld [vmem:[%s279 + $0x8] sm:$0xff]
  %v282 = vld [vmem:[%s279 + $0x10] sm:$0xff]
  %v283 = vld [vmem:[%s279 + $0x18] sm:$0xff]
  %v284 = vlaneseq
  %v285 = vshrl.u32 %v284, 7
  %v286 = vsub.s32 4, %v285
  %v287 = vrot.slane %v211, %v286
  %v288 = vmul.f32 %v280, %v287
  %v289 = vmul.f32 %v281, %v287
  %v290 = vmul.f32 %v282, %v287
  %v291 = vmul.f32 %v283, %v287
  %v292 = vadd.f32 %v275, %v288
  %v293 = vadd.f32 %v276, %v289
  %v294 = vadd.f32 %v277, %v290
  %v295 = vadd.f32 %v278, %v291
  %s296 = scalar_lea.vmem %s1, 160
  %v297 = vld [vmem:[%s296] sm:$0xff]
  %v298 = vld [vmem:[%s296 + $0x8] sm:$0xff]
  %v299 = vld [vmem:[%s296 + $0x10] sm:$0xff]
  %v300 = vld [vmem:[%s296 + $0x18] sm:$0xff]
  %v301 = vlaneseq
  %v302 = vshrl.u32 %v301, 7
  %v303 = vsub.s32 5, %v302
  %v304 = vrot.slane %v211, %v303
  %v305 = vmul.f32 %v297, %v304
  %v306 = vmul.f32 %v298, %v304
  %v307 = vmul.f32 %v299, %v304
  %v308 = vmul.f32 %v300, %v304
  %v309 = vadd.f32 %v292, %v305
  %v310 = vadd.f32 %v293, %v306
  %v311 = vadd.f32 %v294, %v307
  %v312 = vadd.f32 %v295, %v308
  %s313 = scalar_lea.vmem %s1, 192
  %v314 = vld [vmem:[%s313] sm:$0xff]
  %v315 = vld [vmem:[%s313 + $0x8] sm:$0xff]
  %v316 = vld [vmem:[%s313 + $0x10] sm:$0xff]
  %v317 = vld [vmem:[%s313 + $0x18] sm:$0xff]
  %v318 = vlaneseq
  %v319 = vshrl.u32 %v318, 7
  %v320 = vsub.s32 6, %v319
  %v321 = vrot.slane %v211, %v320
  %v322 = vmul.f32 %v314, %v321
  %v323 = vmul.f32 %v315, %v321
  %v324 = vmul.f32 %v316, %v321
  %v325 = vmul.f32 %v317, %v321
  %v326 = vadd.f32 %v309, %v322
  %v327 = vadd.f32 %v310, %v323
  %v328 = vadd.f32 %v311, %v324
  %v329 = vadd.f32 %v312, %v325
  %s330 = scalar_lea.vmem %s1, 224
  %v331 = vld [vmem:[%s330] sm:$0xff]
  %v332 = vld [vmem:[%s330 + $0x8] sm:$0xff]
  %v333 = vld [vmem:[%s330 + $0x10] sm:$0xff]
  %v334 = vld [vmem:[%s330 + $0x18] sm:$0xff]
  %v335 = vlaneseq
  %v336 = vshrl.u32 %v335, 7
  %v337 = vsub.s32 7, %v336
  %v338 = vrot.slane %v211, %v337
  %v339 = vmul.f32 %v331, %v338
  %v340 = vmul.f32 %v332, %v338
  %v341 = vmul.f32 %v333, %v338
  %v342 = vmul.f32 %v334, %v338
  %v343 = vadd.f32 %v326, %v339
  %v344 = vadd.f32 %v327, %v340
  %v345 = vadd.f32 %v328, %v341
  %v346 = vadd.f32 %v329, %v342
  %347 = vst [vmem:[%s6] sm:$0xff] %v211
  %348 = vst [vmem:[%s7] sm:$0xff] %v343
  %349 = vst [vmem:[%s7 + $0x8] sm:$0xff] %v344
  %350 = vst [vmem:[%s7 + $0x10] sm:$0xff] %v345
  %351 = vst [vmem:[%s7 + $0x18] sm:$0xff] %v346
  %v352 = vld [vmem:[%s4] sm:$0xff]
  %v353 = vld [vmem:[%s4 + $0x8] sm:$0xff]
  %v354 = vld [vmem:[%s4 + $0x10] sm:$0xff]
  %v355 = vld [vmem:[%s4 + $0x18] sm:$0xff]
  %v356 = vld [vmem:[%s5] sm:$0xff]
  %v357 = vld [vmem:[%s5 + $0x8] sm:$0xff]
  %v358 = vld [vmem:[%s5 + $0x10] sm:$0xff]
  %v359 = vld [vmem:[%s5 + $0x18] sm:$0xff]
  %361 = vset.pattern.permute.xlu0 0
  %362 = vperm.xlu0 %361, %v356
  %v363 = vpop.permute.xlu0 %362
  %366 = vset.pattern.permute.xlu0 0
  %367 = vperm.xlu0 %366, %v357
  %v368 = vpop.permute.xlu0 %367
  %371 = vset.pattern.permute.xlu0 0
  %372 = vperm.xlu0 %371, %v358
  %v373 = vpop.permute.xlu0 %372
  %376 = vset.pattern.permute.xlu0 0
  %377 = vperm.xlu0 %376, %v359
  %v378 = vpop.permute.xlu0 %377
  %vm380 = vcmask 261120
  %v382 = vsel %vm380, %v352, 0
  %v385 = vsel %vm380, %v353, 0
  %v388 = vsel %vm380, %v354, 0
  %v391 = vsel %vm380, %v355, 0
  %393 = vmatprep.subr.mxu0 0.0
  %394 = vmatpush1.msra.mxu0 0.0
  %395 = vmatprep.subr.mxu0 0.0
  %396 = vmatpush1.msra.mxu0 0.0
  %397 = vmatprep.subr.mxu0 0.0
  %398 = vmatpush1.msra.mxu0 0.0
  %399 = vmatprep.subr.mxu0 0.0
  %400 = vmatpush1.msra.mxu0 0.0
  %401 = vmatprep.subr.mxu0 0.0
  %402 = vmatpush1.msra.mxu0 0.0
  %403 = vmatprep.subr.mxu0 0.0
  %404 = vmatpush1.msra.mxu0 0.0
  %405 = vmatprep.subr.mxu0 0.0
  %406 = vmatpush1.msra.mxu0 0.0
  %407 = vmatprep.subr.mxu0 0.0
  %408 = vmatpush1.msra.mxu0 0.0
  %409 = vmatprep.subr.mxu0 0.0
  %410 = vmatpush1.msra.mxu0 0.0
  %411 = vmatprep.subr.mxu0 0.0
  %412 = vmatpush1.msra.mxu0 0.0
  %413 = vmatprep.subr.mxu0 0.0
  %414 = vmatpush1.msra.mxu0 0.0
  %415 = vmatprep.subr.mxu0 0.0
  %416 = vmatpush1.msra.mxu0 0.0
  %417 = vmatprep.subr.mxu0 0.0
  %v418 = vand.u32 %v36, 4294901760
  %419 = vmatpush1.msra.mxu0 %v418
  %420 = vmatprep.subr.mxu0 0.0
  %v421 = vand.u32 %v35, 4294901760
  %422 = vmatpush1.msra.mxu0 %v421
  %423 = vmatprep.subr.mxu0 0.0
  %v424 = vand.u32 %v34, 4294901760
  %425 = vmatpush1.msra.mxu0 %v424
  %426 = vmatprep.subr.mxu0 0.0
  %v427 = vand.u32 %v33, 4294901760
  %428 = vmatpush1.msra.mxu0 %v427
  %429 = vmatprep.subr.mxu0 0.0
  %430 = vmatpush2.msra.mxu0 0.0
  %431 = vmatprep.subr.mxu0 0.0
  %432 = vmatpush2.msra.mxu0 0.0
  %433 = vmatprep.subr.mxu0 0.0
  %434 = vmatpush2.msra.mxu0 0.0
  %435 = vmatprep.subr.mxu0 0.0
  %436 = vmatpush2.msra.mxu0 0.0
  %437 = vmatprep.subr.mxu0 0.0
  %438 = vmatpush2.msra.mxu0 0.0
  %439 = vmatprep.subr.mxu0 0.0
  %440 = vmatpush2.msra.mxu0 0.0
  %441 = vmatprep.subr.mxu0 0.0
  %442 = vmatpush2.msra.mxu0 0.0
  %443 = vmatprep.subr.mxu0 0.0
  %444 = vmatpush2.msra.mxu0 0.0
  %445 = vmatprep.subr.mxu0 0.0
  %446 = vmatpush2.msra.mxu0 0.0
  %447 = vmatprep.subr.mxu0 0.0
  %448 = vmatpush2.msra.mxu0 0.0
  %449 = vmatprep.subr.mxu0 0.0
  %450 = vmatpush2.msra.mxu0 0.0
  %451 = vmatprep.subr.mxu0 0.0
  %452 = vmatpush2.msra.mxu0 0.0
  %453 = vmatprep.subr.mxu0 0.0
  %454 = vmatpush2.msra.mxu0 0.0
  %455 = vmatprep.subr.mxu0 0.0
  %456 = vmatpush2.msra.mxu0 0.0
  %457 = vmatprep.subr.mxu0 0.0
  %458 = vmatpush2.msra.mxu0 0.0
  %459 = vmatprep.subr.mxu0 0.0
  %460 = vmatpush2.msra.mxu0 0.0
  %461 = vmatprep.mubr.f32.mxu0 0.0
  %v462 = vand.u32 %v382, 4294901760
  %v463 = vsub.f32 %v382, %v462
  %v464 = vand.u32 %v463, 4294901760
  %v465 = vsub.f32 %v463, %v464
  %v466 = vand.u32 %v465, 4294901760
  %467 = vmatmul.mubr.f32.gmra.mxu0 %v466
  %v468 = vpop.f32.mrf.mxu0
  %v469 = vadd.f32 %v363, %v468
  %v470 = vpop.f32.mrf.mxu0
  %471 = vmatprep.mubr.f32.mxu0 0.0
  %v472 = vand.u32 %v385, 4294901760
  %v473 = vsub.f32 %v385, %v472
  %v474 = vand.u32 %v473, 4294901760
  %v475 = vsub.f32 %v473, %v474
  %v476 = vand.u32 %v475, 4294901760
  %477 = vmatmul.mubr.f32.gmra.mxu0 %v476
  %v478 = vpop.f32.mrf.mxu0
  %v479 = vadd.f32 %v368, %v478
  %v480 = vpop.f32.mrf.mxu0
  %481 = vmatprep.mubr.f32.mxu0 0.0
  %v482 = vand.u32 %v388, 4294901760
  %v483 = vsub.f32 %v388, %v482
  %v484 = vand.u32 %v483, 4294901760
  %v485 = vsub.f32 %v483, %v484
  %v486 = vand.u32 %v485, 4294901760
  %487 = vmatmul.mubr.f32.gmra.mxu0 %v486
  %v488 = vpop.f32.mrf.mxu0
  %v489 = vadd.f32 %v373, %v488
  %v490 = vpop.f32.mrf.mxu0
  %491 = vmatprep.mubr.f32.mxu0 0.0
  %v492 = vand.u32 %v391, 4294901760
  %v493 = vsub.f32 %v391, %v492
  %v494 = vand.u32 %v493, 4294901760
  %v495 = vsub.f32 %v493, %v494
  %v496 = vand.u32 %v495, 4294901760
  %497 = vmatmul.mubr.f32.gmra.mxu0 %v496
  %v498 = vpop.f32.mrf.mxu0
  %v499 = vadd.f32 %v378, %v498
  %v500 = vpop.f32.mrf.mxu0
  %501 = vdwg.mxu0
  %502 = vmatprep.subr.mxu0 0.0
  %503 = vmatpush1.msra.mxu0 0.0
  %504 = vmatprep.subr.mxu0 0.0
  %505 = vmatpush1.msra.mxu0 0.0
  %506 = vmatprep.subr.mxu0 0.0
  %507 = vmatpush1.msra.mxu0 0.0
  %508 = vmatprep.subr.mxu0 0.0
  %509 = vmatpush1.msra.mxu0 0.0
  %510 = vmatprep.subr.mxu0 0.0
  %511 = vmatpush1.msra.mxu0 0.0
  %512 = vmatprep.subr.mxu0 0.0
  %513 = vmatpush1.msra.mxu0 0.0
  %514 = vmatprep.subr.mxu0 0.0
  %515 = vmatpush1.msra.mxu0 0.0
  %516 = vmatprep.subr.mxu0 0.0
  %517 = vmatpush1.msra.mxu0 0.0
  %518 = vmatprep.subr.mxu0 0.0
  %519 = vmatpush1.msra.mxu0 0.0
  %520 = vmatprep.subr.mxu0 0.0
  %521 = vmatpush1.msra.mxu0 0.0
  %522 = vmatprep.subr.mxu0 0.0
  %523 = vmatpush1.msra.mxu0 0.0
  %524 = vmatprep.subr.mxu0 0.0
  %525 = vmatpush1.msra.mxu0 0.0
  %526 = vmatprep.subr.mxu0 0.0
  %v527 = vand.u32 %v36, 4294901760
  %v528 = vsub.f32 %v36, %v527
  %v529 = vand.u32 %v528, 4294901760
  %v530 = vsub.f32 %v528, %v529
  %v531 = vand.u32 %v530, 4294901760
  %532 = vmatpush1.msra.mxu0 %v531
  %533 = vmatprep.subr.mxu0 0.0
  %v534 = vand.u32 %v35, 4294901760
  %v535 = vsub.f32 %v35, %v534
  %v536 = vand.u32 %v535, 4294901760
  %v537 = vsub.f32 %v535, %v536
  %v538 = vand.u32 %v537, 4294901760
  %539 = vmatpush1.msra.mxu0 %v538
  %540 = vmatprep.subr.mxu0 0.0
  %v541 = vand.u32 %v34, 4294901760
  %v542 = vsub.f32 %v34, %v541
  %v543 = vand.u32 %v542, 4294901760
  %v544 = vsub.f32 %v542, %v543
  %v545 = vand.u32 %v544, 4294901760
  %546 = vmatpush1.msra.mxu0 %v545
  %547 = vmatprep.subr.mxu0 0.0
  %v548 = vand.u32 %v33, 4294901760
  %v549 = vsub.f32 %v33, %v548
  %v550 = vand.u32 %v549, 4294901760
  %v551 = vsub.f32 %v549, %v550
  %v552 = vand.u32 %v551, 4294901760
  %553 = vmatpush1.msra.mxu0 %v552
  %554 = vmatprep.subr.mxu0 0.0
  %555 = vmatpush2.msra.mxu0 0.0
  %556 = vmatprep.subr.mxu0 0.0
  %557 = vmatpush2.msra.mxu0 0.0
  %558 = vmatprep.subr.mxu0 0.0
  %559 = vmatpush2.msra.mxu0 0.0
  %560 = vmatprep.subr.mxu0 0.0
  %561 = vmatpush2.msra.mxu0 0.0
  %562 = vmatprep.subr.mxu0 0.0
  %563 = vmatpush2.msra.mxu0 0.0
  %564 = vmatprep.subr.mxu0 0.0
  %565 = vmatpush2.msra.mxu0 0.0
  %566 = vmatprep.subr.mxu0 0.0
  %567 = vmatpush2.msra.mxu0 0.0
  %568 = vmatprep.subr.mxu0 0.0
  %569 = vmatpush2.msra.mxu0 0.0
  %570 = vmatprep.subr.mxu0 0.0
  %571 = vmatpush2.msra.mxu0 0.0
  %572 = vmatprep.subr.mxu0 0.0
  %573 = vmatpush2.msra.mxu0 0.0
  %574 = vmatprep.subr.mxu0 0.0
  %575 = vmatpush2.msra.mxu0 0.0
  %576 = vmatprep.subr.mxu0 0.0
  %577 = vmatpush2.msra.mxu0 0.0
  %578 = vmatprep.subr.mxu0 0.0
  %579 = vmatpush2.msra.mxu0 0.0
  %580 = vmatprep.subr.mxu0 0.0
  %581 = vmatpush2.msra.mxu0 0.0
  %582 = vmatprep.subr.mxu0 0.0
  %583 = vmatpush2.msra.mxu0 0.0
  %584 = vmatprep.subr.mxu0 0.0
  %585 = vmatpush2.msra.mxu0 0.0
  %586 = vmatprep.mubr.f32.mxu0 0.0
  %v587 = vand.u32 %v382, 4294901760
  %588 = vmatmul.mubr.f32.gmra.mxu0 %v587
  %v589 = vpop.f32.mrf.mxu0
  %v590 = vadd.f32 %v469, %v589
  %v591 = vpop.f32.mrf.mxu0
  %592 = vmatprep.mubr.f32.mxu0 0.0
  %v593 = vand.u32 %v385, 4294901760
  %594 = vmatmul.mubr.f32.gmra.mxu0 %v593
  %v595 = vpop.f32.mrf.mxu0
  %v596 = vadd.f32 %v479, %v595
  %v597 = vpop.f32.mrf.mxu0
  %598 = vmatprep.mubr.f32.mxu0 0.0
  %v599 = vand.u32 %v388, 4294901760
  %600 = vmatmul.mubr.f32.gmra.mxu0 %v599
  %v601 = vpop.f32.mrf.mxu0
  %v602 = vadd.f32 %v489, %v601
  %v603 = vpop.f32.mrf.mxu0
  %604 = vmatprep.mubr.f32.mxu0 0.0
  %v605 = vand.u32 %v391, 4294901760
  %606 = vmatmul.mubr.f32.gmra.mxu0 %v605
  %v607 = vpop.f32.mrf.mxu0
  %v608 = vadd.f32 %v499, %v607
  %v609 = vpop.f32.mrf.mxu0
  %610 = vdwg.mxu0
  %611 = vmatprep.subr.mxu0 0.0
  %612 = vmatpush1.msra.mxu0 0.0
  %613 = vmatprep.subr.mxu0 0.0
  %614 = vmatpush1.msra.mxu0 0.0
  %615 = vmatprep.subr.mxu0 0.0
  %616 = vmatpush1.msra.mxu0 0.0
  %617 = vmatprep.subr.mxu0 0.0
  %618 = vmatpush1.msra.mxu0 0.0
  %619 = vmatprep.subr.mxu0 0.0
  %620 = vmatpush1.msra.mxu0 0.0
  %621 = vmatprep.subr.mxu0 0.0
  %622 = vmatpush1.msra.mxu0 0.0
  %623 = vmatprep.subr.mxu0 0.0
  %624 = vmatpush1.msra.mxu0 0.0
  %625 = vmatprep.subr.mxu0 0.0
  %626 = vmatpush1.msra.mxu0 0.0
  %627 = vmatprep.subr.mxu0 0.0
  %628 = vmatpush1.msra.mxu0 0.0
  %629 = vmatprep.subr.mxu0 0.0
  %630 = vmatpush1.msra.mxu0 0.0
  %631 = vmatprep.subr.mxu0 0.0
  %632 = vmatpush1.msra.mxu0 0.0
  %633 = vmatprep.subr.mxu0 0.0
  %634 = vmatpush1.msra.mxu0 0.0
  %635 = vmatprep.subr.mxu0 0.0
  %v636 = vand.u32 %v36, 4294901760
  %v637 = vsub.f32 %v36, %v636
  %638 = vmatpush1.msra.mxu0 %v637
  %639 = vmatprep.subr.mxu0 0.0
  %v640 = vand.u32 %v35, 4294901760
  %v641 = vsub.f32 %v35, %v640
  %642 = vmatpush1.msra.mxu0 %v641
  %643 = vmatprep.subr.mxu0 0.0
  %v644 = vand.u32 %v34, 4294901760
  %v645 = vsub.f32 %v34, %v644
  %646 = vmatpush1.msra.mxu0 %v645
  %647 = vmatprep.subr.mxu0 0.0
  %v648 = vand.u32 %v33, 4294901760
  %v649 = vsub.f32 %v33, %v648
  %650 = vmatpush1.msra.mxu0 %v649
  %651 = vmatprep.subr.mxu0 0.0
  %652 = vmatpush2.msra.mxu0 0.0
  %653 = vmatprep.subr.mxu0 0.0
  %654 = vmatpush2.msra.mxu0 0.0
  %655 = vmatprep.subr.mxu0 0.0
  %656 = vmatpush2.msra.mxu0 0.0
  %657 = vmatprep.subr.mxu0 0.0
  %658 = vmatpush2.msra.mxu0 0.0
  %659 = vmatprep.subr.mxu0 0.0
  %660 = vmatpush2.msra.mxu0 0.0
  %661 = vmatprep.subr.mxu0 0.0
  %662 = vmatpush2.msra.mxu0 0.0
  %663 = vmatprep.subr.mxu0 0.0
  %664 = vmatpush2.msra.mxu0 0.0
  %665 = vmatprep.subr.mxu0 0.0
  %666 = vmatpush2.msra.mxu0 0.0
  %667 = vmatprep.subr.mxu0 0.0
  %668 = vmatpush2.msra.mxu0 0.0
  %669 = vmatprep.subr.mxu0 0.0
  %670 = vmatpush2.msra.mxu0 0.0
  %671 = vmatprep.subr.mxu0 0.0
  %672 = vmatpush2.msra.mxu0 0.0
  %673 = vmatprep.subr.mxu0 0.0
  %674 = vmatpush2.msra.mxu0 0.0
  %675 = vmatprep.subr.mxu0 0.0
  %676 = vmatpush2.msra.mxu0 0.0
  %677 = vmatprep.subr.mxu0 0.0
  %678 = vmatpush2.msra.mxu0 0.0
  %679 = vmatprep.subr.mxu0 0.0
  %680 = vmatpush2.msra.mxu0 0.0
  %681 = vmatprep.subr.mxu0 0.0
  %682 = vmatpush2.msra.mxu0 0.0
  %683 = vmatprep.mubr.f32.mxu0 0.0
  %v684 = vand.u32 %v382, 4294901760
  %v685 = vsub.f32 %v382, %v684
  %686 = vmatmul.mubr.f32.gmra.mxu0 %v685
  %v687 = vpop.f32.mrf.mxu0
  %v688 = vadd.f32 %v590, %v687
  %v689 = vpop.f32.mrf.mxu0
  %690 = vmatprep.mubr.f32.mxu0 0.0
  %v691 = vand.u32 %v385, 4294901760
  %v692 = vsub.f32 %v385, %v691
  %693 = vmatmul.mubr.f32.gmra.mxu0 %v692
  %v694 = vpop.f32.mrf.mxu0
  %v695 = vadd.f32 %v596, %v694
  %v696 = vpop.f32.mrf.mxu0
  %697 = vmatprep.mubr.f32.mxu0 0.0
  %v698 = vand.u32 %v388, 4294901760
  %v699 = vsub.f32 %v388, %v698
  %700 = vmatmul.mubr.f32.gmra.mxu0 %v699
  %v701 = vpop.f32.mrf.mxu0
  %v702 = vadd.f32 %v602, %v701
  %v703 = vpop.f32.mrf.mxu0
  %704 = vmatprep.mubr.f32.mxu0 0.0
  %v705 = vand.u32 %v391, 4294901760
  %v706 = vsub.f32 %v391, %v705
  %707 = vmatmul.mubr.f32.gmra.mxu0 %v706
  %v708 = vpop.f32.mrf.mxu0
  %v709 = vadd.f32 %v608, %v708
  %v710 = vpop.f32.mrf.mxu0
  %711 = vdwg.mxu0
  %712 = vmatprep.subr.mxu0 0.0
  %713 = vmatpush1.msra.mxu0 0.0
  %714 = vmatprep.subr.mxu0 0.0
  %715 = vmatpush1.msra.mxu0 0.0
  %716 = vmatprep.subr.mxu0 0.0
  %717 = vmatpush1.msra.mxu0 0.0
  %718 = vmatprep.subr.mxu0 0.0
  %719 = vmatpush1.msra.mxu0 0.0
  %720 = vmatprep.subr.mxu0 0.0
  %721 = vmatpush1.msra.mxu0 0.0
  %722 = vmatprep.subr.mxu0 0.0
  %723 = vmatpush1.msra.mxu0 0.0
  %724 = vmatprep.subr.mxu0 0.0
  %725 = vmatpush1.msra.mxu0 0.0
  %726 = vmatprep.subr.mxu0 0.0
  %727 = vmatpush1.msra.mxu0 0.0
  %728 = vmatprep.subr.mxu0 0.0
  %729 = vmatpush1.msra.mxu0 0.0
  %730 = vmatprep.subr.mxu0 0.0
  %731 = vmatpush1.msra.mxu0 0.0
  %732 = vmatprep.subr.mxu0 0.0
  %733 = vmatpush1.msra.mxu0 0.0
  %734 = vmatprep.subr.mxu0 0.0
  %735 = vmatpush1.msra.mxu0 0.0
  %736 = vmatprep.subr.mxu0 0.0
  %v737 = vand.u32 %v36, 4294901760
  %738 = vmatpush1.msra.mxu0 %v737
  %739 = vmatprep.subr.mxu0 0.0
  %v740 = vand.u32 %v35, 4294901760
  %741 = vmatpush1.msra.mxu0 %v740
  %742 = vmatprep.subr.mxu0 0.0
  %v743 = vand.u32 %v34, 4294901760
  %744 = vmatpush1.msra.mxu0 %v743
  %745 = vmatprep.subr.mxu0 0.0
  %v746 = vand.u32 %v33, 4294901760
  %747 = vmatpush1.msra.mxu0 %v746
  %748 = vmatprep.subr.mxu0 0.0
  %749 = vmatpush2.msra.mxu0 0.0
  %750 = vmatprep.subr.mxu0 0.0
  %751 = vmatpush2.msra.mxu0 0.0
  %752 = vmatprep.subr.mxu0 0.0
  %753 = vmatpush2.msra.mxu0 0.0
  %754 = vmatprep.subr.mxu0 0.0
  %755 = vmatpush2.msra.mxu0 0.0
  %756 = vmatprep.subr.mxu0 0.0
  %757 = vmatpush2.msra.mxu0 0.0
  %758 = vmatprep.subr.mxu0 0.0
  %759 = vmatpush2.msra.mxu0 0.0
  %760 = vmatprep.subr.mxu0 0.0
  %761 = vmatpush2.msra.mxu0 0.0
  %762 = vmatprep.subr.mxu0 0.0
  %763 = vmatpush2.msra.mxu0 0.0
  %764 = vmatprep.subr.mxu0 0.0
  %765 = vmatpush2.msra.mxu0 0.0
  %766 = vmatprep.subr.mxu0 0.0
  %767 = vmatpush2.msra.mxu0 0.0
  %768 = vmatprep.subr.mxu0 0.0
  %769 = vmatpush2.msra.mxu0 0.0
  %770 = vmatprep.subr.mxu0 0.0
  %771 = vmatpush2.msra.mxu0 0.0
  %772 = vmatprep.subr.mxu0 0.0
  %773 = vmatpush2.msra.mxu0 0.0
  %774 = vmatprep.subr.mxu0 0.0
  %775 = vmatpush2.msra.mxu0 0.0
  %776 = vmatprep.subr.mxu0 0.0
  %777 = vmatpush2.msra.mxu0 0.0
  %778 = vmatprep.subr.mxu0 0.0
  %779 = vmatpush2.msra.mxu0 0.0
  %780 = vmatprep.mubr.f32.mxu0 0.0
  %v781 = vand.u32 %v382, 4294901760
  %v782 = vsub.f32 %v382, %v781
  %v783 = vand.u32 %v782, 4294901760
  %784 = vmatmul.mubr.f32.gmra.mxu0 %v783
  %v785 = vpop.f32.mrf.mxu0
  %v786 = vadd.f32 %v688, %v785
  %v787 = vpop.f32.mrf.mxu0
  %788 = vmatprep.mubr.f32.mxu0 0.0
  %v789 = vand.u32 %v385, 4294901760
  %v790 = vsub.f32 %v385, %v789
  %v791 = vand.u32 %v790, 4294901760
  %792 = vmatmul.mubr.f32.gmra.mxu0 %v791
  %v793 = vpop.f32.mrf.mxu0
  %v794 = vadd.f32 %v695, %v793
  %v795 = vpop.f32.mrf.mxu0
  %796 = vmatprep.mubr.f32.mxu0 0.0
  %v797 = vand.u32 %v388, 4294901760
  %v798 = vsub.f32 %v388, %v797
  %v799 = vand.u32 %v798, 4294901760
  %800 = vmatmul.mubr.f32.gmra.mxu0 %v799
  %v801 = vpop.f32.mrf.mxu0
  %v802 = vadd.f32 %v702, %v801
  %v803 = vpop.f32.mrf.mxu0
  %804 = vmatprep.mubr.f32.mxu0 0.0
  %v805 = vand.u32 %v391, 4294901760
  %v806 = vsub.f32 %v391, %v805
  %v807 = vand.u32 %v806, 4294901760
  %808 = vmatmul.mubr.f32.gmra.mxu0 %v807
  %v809 = vpop.f32.mrf.mxu0
  %v810 = vadd.f32 %v709, %v809
  %v811 = vpop.f32.mrf.mxu0
  %812 = vdwg.mxu0
  %813 = vmatprep.subr.mxu0 0.0
  %814 = vmatpush1.msra.mxu0 0.0
  %815 = vmatprep.subr.mxu0 0.0
  %816 = vmatpush1.msra.mxu0 0.0
  %817 = vmatprep.subr.mxu0 0.0
  %818 = vmatpush1.msra.mxu0 0.0
  %819 = vmatprep.subr.mxu0 0.0
  %820 = vmatpush1.msra.mxu0 0.0
  %821 = vmatprep.subr.mxu0 0.0
  %822 = vmatpush1.msra.mxu0 0.0
  %823 = vmatprep.subr.mxu0 0.0
  %824 = vmatpush1.msra.mxu0 0.0
  %825 = vmatprep.subr.mxu0 0.0
  %826 = vmatpush1.msra.mxu0 0.0
  %827 = vmatprep.subr.mxu0 0.0
  %828 = vmatpush1.msra.mxu0 0.0
  %829 = vmatprep.subr.mxu0 0.0
  %830 = vmatpush1.msra.mxu0 0.0
  %831 = vmatprep.subr.mxu0 0.0
  %832 = vmatpush1.msra.mxu0 0.0
  %833 = vmatprep.subr.mxu0 0.0
  %834 = vmatpush1.msra.mxu0 0.0
  %835 = vmatprep.subr.mxu0 0.0
  %836 = vmatpush1.msra.mxu0 0.0
  %837 = vmatprep.subr.mxu0 0.0
  %v838 = vand.u32 %v36, 4294901760
  %v839 = vsub.f32 %v36, %v838
  %v840 = vand.u32 %v839, 4294901760
  %841 = vmatpush1.msra.mxu0 %v840
  %842 = vmatprep.subr.mxu0 0.0
  %v843 = vand.u32 %v35, 4294901760
  %v844 = vsub.f32 %v35, %v843
  %v845 = vand.u32 %v844, 4294901760
  %846 = vmatpush1.msra.mxu0 %v845
  %847 = vmatprep.subr.mxu0 0.0
  %v848 = vand.u32 %v34, 4294901760
  %v849 = vsub.f32 %v34, %v848
  %v850 = vand.u32 %v849, 4294901760
  %851 = vmatpush1.msra.mxu0 %v850
  %852 = vmatprep.subr.mxu0 0.0
  %v853 = vand.u32 %v33, 4294901760
  %v854 = vsub.f32 %v33, %v853
  %v855 = vand.u32 %v854, 4294901760
  %856 = vmatpush1.msra.mxu0 %v855
  %857 = vmatprep.subr.mxu0 0.0
  %858 = vmatpush2.msra.mxu0 0.0
  %859 = vmatprep.subr.mxu0 0.0
  %860 = vmatpush2.msra.mxu0 0.0
  %861 = vmatprep.subr.mxu0 0.0
  %862 = vmatpush2.msra.mxu0 0.0
  %863 = vmatprep.subr.mxu0 0.0
  %864 = vmatpush2.msra.mxu0 0.0
  %865 = vmatprep.subr.mxu0 0.0
  %866 = vmatpush2.msra.mxu0 0.0
  %867 = vmatprep.subr.mxu0 0.0
  %868 = vmatpush2.msra.mxu0 0.0
  %869 = vmatprep.subr.mxu0 0.0
  %870 = vmatpush2.msra.mxu0 0.0
  %871 = vmatprep.subr.mxu0 0.0
  %872 = vmatpush2.msra.mxu0 0.0
  %873 = vmatprep.subr.mxu0 0.0
  %874 = vmatpush2.msra.mxu0 0.0
  %875 = vmatprep.subr.mxu0 0.0
  %876 = vmatpush2.msra.mxu0 0.0
  %877 = vmatprep.subr.mxu0 0.0
  %878 = vmatpush2.msra.mxu0 0.0
  %879 = vmatprep.subr.mxu0 0.0
  %880 = vmatpush2.msra.mxu0 0.0
  %881 = vmatprep.subr.mxu0 0.0
  %882 = vmatpush2.msra.mxu0 0.0
  %883 = vmatprep.subr.mxu0 0.0
  %884 = vmatpush2.msra.mxu0 0.0
  %885 = vmatprep.subr.mxu0 0.0
  %886 = vmatpush2.msra.mxu0 0.0
  %887 = vmatprep.subr.mxu0 0.0
  %888 = vmatpush2.msra.mxu0 0.0
  %889 = vmatprep.mubr.f32.mxu0 0.0
  %v890 = vand.u32 %v382, 4294901760
  %891 = vmatmul.mubr.f32.gmra.mxu0 %v890
  %v892 = vpop.f32.mrf.mxu0
  %v893 = vadd.f32 %v786, %v892
  %v894 = vpop.f32.mrf.mxu0
  %895 = vmatprep.mubr.f32.mxu0 0.0
  %v896 = vand.u32 %v385, 4294901760
  %897 = vmatmul.mubr.f32.gmra.mxu0 %v896
  %v898 = vpop.f32.mrf.mxu0
  %v899 = vadd.f32 %v794, %v898
  %v900 = vpop.f32.mrf.mxu0
  %901 = vmatprep.mubr.f32.mxu0 0.0
  %v902 = vand.u32 %v388, 4294901760
  %903 = vmatmul.mubr.f32.gmra.mxu0 %v902
  %v904 = vpop.f32.mrf.mxu0
  %v905 = vadd.f32 %v802, %v904
  %v906 = vpop.f32.mrf.mxu0
  %907 = vmatprep.mubr.f32.mxu0 0.0
  %v908 = vand.u32 %v391, 4294901760
  %909 = vmatmul.mubr.f32.gmra.mxu0 %v908
  %v910 = vpop.f32.mrf.mxu0
  %v911 = vadd.f32 %v810, %v910
  %v912 = vpop.f32.mrf.mxu0
  %913 = vdwg.mxu0
  %914 = vmatprep.subr.mxu0 0.0
  %915 = vmatpush1.msra.mxu0 0.0
  %916 = vmatprep.subr.mxu0 0.0
  %917 = vmatpush1.msra.mxu0 0.0
  %918 = vmatprep.subr.mxu0 0.0
  %919 = vmatpush1.msra.mxu0 0.0
  %920 = vmatprep.subr.mxu0 0.0
  %921 = vmatpush1.msra.mxu0 0.0
  %922 = vmatprep.subr.mxu0 0.0
  %923 = vmatpush1.msra.mxu0 0.0
  %924 = vmatprep.subr.mxu0 0.0
  %925 = vmatpush1.msra.mxu0 0.0
  %926 = vmatprep.subr.mxu0 0.0
  %927 = vmatpush1.msra.mxu0 0.0
  %928 = vmatprep.subr.mxu0 0.0
  %929 = vmatpush1.msra.mxu0 0.0
  %930 = vmatprep.subr.mxu0 0.0
  %931 = vmatpush1.msra.mxu0 0.0
  %932 = vmatprep.subr.mxu0 0.0
  %933 = vmatpush1.msra.mxu0 0.0
  %934 = vmatprep.subr.mxu0 0.0
  %935 = vmatpush1.msra.mxu0 0.0
  %936 = vmatprep.subr.mxu0 0.0
  %937 = vmatpush1.msra.mxu0 0.0
  %938 = vmatprep.subr.mxu0 0.0
  %v939 = vand.u32 %v36, 4294901760
  %940 = vmatpush1.msra.mxu0 %v939
  %941 = vmatprep.subr.mxu0 0.0
  %v942 = vand.u32 %v35, 4294901760
  %943 = vmatpush1.msra.mxu0 %v942
  %944 = vmatprep.subr.mxu0 0.0
  %v945 = vand.u32 %v34, 4294901760
  %946 = vmatpush1.msra.mxu0 %v945
  %947 = vmatprep.subr.mxu0 0.0
  %v948 = vand.u32 %v33, 4294901760
  %949 = vmatpush1.msra.mxu0 %v948
  %950 = vmatprep.subr.mxu0 0.0
  %951 = vmatpush2.msra.mxu0 0.0
  %952 = vmatprep.subr.mxu0 0.0
  %953 = vmatpush2.msra.mxu0 0.0
  %954 = vmatprep.subr.mxu0 0.0
  %955 = vmatpush2.msra.mxu0 0.0
  %956 = vmatprep.subr.mxu0 0.0
  %957 = vmatpush2.msra.mxu0 0.0
  %958 = vmatprep.subr.mxu0 0.0
  %959 = vmatpush2.msra.mxu0 0.0
  %960 = vmatprep.subr.mxu0 0.0
  %961 = vmatpush2.msra.mxu0 0.0
  %962 = vmatprep.subr.mxu0 0.0
  %963 = vmatpush2.msra.mxu0 0.0
  %964 = vmatprep.subr.mxu0 0.0
  %965 = vmatpush2.msra.mxu0 0.0
  %966 = vmatprep.subr.mxu0 0.0
  %967 = vmatpush2.msra.mxu0 0.0
  %968 = vmatprep.subr.mxu0 0.0
  %969 = vmatpush2.msra.mxu0 0.0
  %970 = vmatprep.subr.mxu0 0.0
  %971 = vmatpush2.msra.mxu0 0.0
  %972 = vmatprep.subr.mxu0 0.0
  %973 = vmatpush2.msra.mxu0 0.0
  %974 = vmatprep.subr.mxu0 0.0
  %975 = vmatpush2.msra.mxu0 0.0
  %976 = vmatprep.subr.mxu0 0.0
  %977 = vmatpush2.msra.mxu0 0.0
  %978 = vmatprep.subr.mxu0 0.0
  %979 = vmatpush2.msra.mxu0 0.0
  %980 = vmatprep.subr.mxu0 0.0
  %981 = vmatpush2.msra.mxu0 0.0
  %982 = vmatprep.mubr.f32.mxu0 0.0
  %v983 = vand.u32 %v382, 4294901760
  %984 = vmatmul.mubr.f32.gmra.mxu0 %v983
  %v985 = vpop.f32.mrf.mxu0
  %v986 = vadd.f32 %v893, %v985
  %v987 = vpop.f32.mrf.mxu0
  %988 = vmatprep.mubr.f32.mxu0 0.0
  %v989 = vand.u32 %v385, 4294901760
  %990 = vmatmul.mubr.f32.gmra.mxu0 %v989
  %v991 = vpop.f32.mrf.mxu0
  %v992 = vadd.f32 %v899, %v991
  %v993 = vpop.f32.mrf.mxu0
  %994 = vmatprep.mubr.f32.mxu0 0.0
  %v995 = vand.u32 %v388, 4294901760
  %996 = vmatmul.mubr.f32.gmra.mxu0 %v995
  %v997 = vpop.f32.mrf.mxu0
  %v998 = vadd.f32 %v905, %v997
  %v999 = vpop.f32.mrf.mxu0
  %1000 = vmatprep.mubr.f32.mxu0 0.0
  %v1001 = vand.u32 %v391, 4294901760
  %1002 = vmatmul.mubr.f32.gmra.mxu0 %v1001
  %v1003 = vpop.f32.mrf.mxu0
  %v1004 = vadd.f32 %v911, %v1003
  %v1005 = vpop.f32.mrf.mxu0
  %1006 = vdwg.mxu0
  %v1007 = vadd.f32 %v986, %v343
  %v1008 = vadd.f32 %v992, %v344
  %v1009 = vadd.f32 %v998, %v345
  %v1010 = vadd.f32 %v1004, %v346
  %v1011 = vmax.f32 %v1007, 0.0
  %v1012 = vmax.f32 %v1008, 0.0
  %v1013 = vmax.f32 %v1009, 0.0
  %v1014 = vmax.f32 %v1010, 0.0
  %v1015 = vld [vmem:[%s0] sm:$0xff]
  %v1016 = vld [vmem:[%s0 + $0x8] sm:$0xff]
  %v1017 = vld [vmem:[%s0 + $0x10] sm:$0xff]
  %v1018 = vld [vmem:[%s0 + $0x18] sm:$0xff]
  %v1019 = vmul.f32 %v1015, %v1011
  %v1020 = vmul.f32 %v1016, %v1012
  %v1021 = vmul.f32 %v1017, %v1013
  %v1022 = vmul.f32 %v1018, %v1014
  %v1023 = vadd.f32 %v1019, %v1020
  %v1024 = vadd.f32 %v1023, %v1021
  %v1025 = vadd.f32 %v1024, %v1022
  %v1026 = vrot.slane %v1025, 4
  %v1027 = vadd.f32 %v1025, %v1026
  %v1028 = vrot.slane %v1027, 2
  %v1029 = vadd.f32 %v1027, %v1028
  %v1030 = vrot.slane %v1029, 1
  %v1031 = vadd.f32 %v1029, %v1030
  %v1032 = vld [vmem:[%s54] sm:$0xff]
  %v1033 = vld [vmem:[%s54 + $0x8] sm:$0xff]
  %v1034 = vld [vmem:[%s54 + $0x10] sm:$0xff]
  %v1035 = vld [vmem:[%s54 + $0x18] sm:$0xff]
  %v1036 = vmul.f32 %v1032, %v1011
  %v1037 = vmul.f32 %v1033, %v1012
  %v1038 = vmul.f32 %v1034, %v1013
  %v1039 = vmul.f32 %v1035, %v1014
  %v1040 = vadd.f32 %v1036, %v1037
  %v1041 = vadd.f32 %v1040, %v1038
  %v1042 = vadd.f32 %v1041, %v1039
  %v1043 = vrot.slane %v1042, 4
  %v1044 = vadd.f32 %v1042, %v1043
  %v1045 = vrot.slane %v1044, 2
  %v1046 = vadd.f32 %v1044, %v1045
  %v1047 = vrot.slane %v1046, 1
  %v1048 = vadd.f32 %v1046, %v1047
  %v1049 = vld [vmem:[%s72] sm:$0xff]
  %v1050 = vld [vmem:[%s72 + $0x8] sm:$0xff]
  %v1051 = vld [vmem:[%s72 + $0x10] sm:$0xff]
  %v1052 = vld [vmem:[%s72 + $0x18] sm:$0xff]
  %v1053 = vmul.f32 %v1049, %v1011
  %v1054 = vmul.f32 %v1050, %v1012
  %v1055 = vmul.f32 %v1051, %v1013
  %v1056 = vmul.f32 %v1052, %v1014
  %v1057 = vadd.f32 %v1053, %v1054
  %v1058 = vadd.f32 %v1057, %v1055
  %v1059 = vadd.f32 %v1058, %v1056
  %v1060 = vrot.slane %v1059, 4
  %v1061 = vadd.f32 %v1059, %v1060
  %v1062 = vrot.slane %v1061, 2
  %v1063 = vadd.f32 %v1061, %v1062
  %v1064 = vrot.slane %v1063, 1
  %v1065 = vadd.f32 %v1063, %v1064
  %v1066 = vld [vmem:[%s90] sm:$0xff]
  %v1067 = vld [vmem:[%s90 + $0x8] sm:$0xff]
  %v1068 = vld [vmem:[%s90 + $0x10] sm:$0xff]
  %v1069 = vld [vmem:[%s90 + $0x18] sm:$0xff]
  %v1070 = vmul.f32 %v1066, %v1011
  %v1071 = vmul.f32 %v1067, %v1012
  %v1072 = vmul.f32 %v1068, %v1013
  %v1073 = vmul.f32 %v1069, %v1014
  %v1074 = vadd.f32 %v1070, %v1071
  %v1075 = vadd.f32 %v1074, %v1072
  %v1076 = vadd.f32 %v1075, %v1073
  %v1077 = vrot.slane %v1076, 4
  %v1078 = vadd.f32 %v1076, %v1077
  %v1079 = vrot.slane %v1078, 2
  %v1080 = vadd.f32 %v1078, %v1079
  %v1081 = vrot.slane %v1080, 1
  %v1082 = vadd.f32 %v1080, %v1081
  %v1083 = vld [vmem:[%s108] sm:$0xff]
  %v1084 = vld [vmem:[%s108 + $0x8] sm:$0xff]
  %v1085 = vld [vmem:[%s108 + $0x10] sm:$0xff]
  %v1086 = vld [vmem:[%s108 + $0x18] sm:$0xff]
  %v1087 = vmul.f32 %v1083, %v1011
  %v1088 = vmul.f32 %v1084, %v1012
  %v1089 = vmul.f32 %v1085, %v1013
  %v1090 = vmul.f32 %v1086, %v1014
  %v1091 = vadd.f32 %v1087, %v1088
  %v1092 = vadd.f32 %v1091, %v1089
  %v1093 = vadd.f32 %v1092, %v1090
  %v1094 = vrot.slane %v1093, 4
  %v1095 = vadd.f32 %v1093, %v1094
  %v1096 = vrot.slane %v1095, 2
  %v1097 = vadd.f32 %v1095, %v1096
  %v1098 = vrot.slane %v1097, 1
  %v1099 = vadd.f32 %v1097, %v1098
  %v1100 = vld [vmem:[%s126] sm:$0xff]
  %v1101 = vld [vmem:[%s126 + $0x8] sm:$0xff]
  %v1102 = vld [vmem:[%s126 + $0x10] sm:$0xff]
  %v1103 = vld [vmem:[%s126 + $0x18] sm:$0xff]
  %v1104 = vmul.f32 %v1100, %v1011
  %v1105 = vmul.f32 %v1101, %v1012
  %v1106 = vmul.f32 %v1102, %v1013
  %v1107 = vmul.f32 %v1103, %v1014
  %v1108 = vadd.f32 %v1104, %v1105
  %v1109 = vadd.f32 %v1108, %v1106
  %v1110 = vadd.f32 %v1109, %v1107
  %v1111 = vrot.slane %v1110, 4
  %v1112 = vadd.f32 %v1110, %v1111
  %v1113 = vrot.slane %v1112, 2
  %v1114 = vadd.f32 %v1112, %v1113
  %v1115 = vrot.slane %v1114, 1
  %v1116 = vadd.f32 %v1114, %v1115
  %v1117 = vld [vmem:[%s144] sm:$0xff]
  %v1118 = vld [vmem:[%s144 + $0x8] sm:$0xff]
  %v1119 = vld [vmem:[%s144 + $0x10] sm:$0xff]
  %v1120 = vld [vmem:[%s144 + $0x18] sm:$0xff]
  %v1121 = vmul.f32 %v1117, %v1011
  %v1122 = vmul.f32 %v1118, %v1012
  %v1123 = vmul.f32 %v1119, %v1013
  %v1124 = vmul.f32 %v1120, %v1014
  %v1125 = vadd.f32 %v1121, %v1122
  %v1126 = vadd.f32 %v1125, %v1123
  %v1127 = vadd.f32 %v1126, %v1124
  %v1128 = vrot.slane %v1127, 4
  %v1129 = vadd.f32 %v1127, %v1128
  %v1130 = vrot.slane %v1129, 2
  %v1131 = vadd.f32 %v1129, %v1130
  %v1132 = vrot.slane %v1131, 1
  %v1133 = vadd.f32 %v1131, %v1132
  %v1134 = vld [vmem:[%s162] sm:$0xff]
  %v1135 = vld [vmem:[%s162 + $0x8] sm:$0xff]
  %v1136 = vld [vmem:[%s162 + $0x10] sm:$0xff]
  %v1137 = vld [vmem:[%s162 + $0x18] sm:$0xff]
  %v1138 = vmul.f32 %v1134, %v1011
  %v1139 = vmul.f32 %v1135, %v1012
  %v1140 = vmul.f32 %v1136, %v1013
  %v1141 = vmul.f32 %v1137, %v1014
  %v1142 = vadd.f32 %v1138, %v1139
  %v1143 = vadd.f32 %v1142, %v1140
  %v1144 = vadd.f32 %v1143, %v1141
  %v1145 = vrot.slane %v1144, 4
  %v1146 = vadd.f32 %v1144, %v1145
  %v1147 = vrot.slane %v1146, 2
  %v1148 = vadd.f32 %v1146, %v1147
  %v1149 = vrot.slane %v1148, 1
  %v1150 = vadd.f32 %v1148, %v1149
  %v1151 = vsel %vm180, %v1031, %v1048
  %v1152 = vsel %vm182, %v1151, %v1065
  %v1153 = vsel %vm184, %v1152, %v1082
  %v1154 = vsel %vm186, %v1153, %v1099
  %v1155 = vsel %vm188, %v1154, %v1116
  %v1156 = vsel %vm190, %v1155, %v1133
  %v1157 = vsel %vm192, %v1156, %v1150
  %v1158 = vsel %vm32, %v1157, -3.4028235e+38
  %v1159 = vrot.slane %v1158, 4
  %v1160 = vmax.f32 %v1158, %v1159
  %v1161 = vrot.slane %v1160, 2
  %v1162 = vmax.f32 %v1160, %v1161
  %v1163 = vrot.slane %v1162, 1
  %v1164 = vmax.f32 %v1162, %v1163
  %v1165 = vsub.f32 %v1158, %v1164
  %v1166 = vmul.f32 %v1165, 1.442695
  %v1167 = vpow.pop %v1166
  %v1168 = vrot.slane %v1167, 4
  %v1169 = vadd.f32 %v1167, %v1168
  %v1170 = vrot.slane %v1169, 2
  %v1171 = vadd.f32 %v1169, %v1170
  %v1172 = vrot.slane %v1171, 1
  %v1173 = vadd.f32 %v1171, %v1172
  %v1174 = vrcp.pop %v1173
  %v1175 = vmul.f32 %v1167, %v1174
  %v1176 = vld [vmem:[%s1] sm:$0xff]
  %v1177 = vld [vmem:[%s1 + $0x8] sm:$0xff]
  %v1178 = vld [vmem:[%s1 + $0x10] sm:$0xff]
  %v1179 = vld [vmem:[%s1 + $0x18] sm:$0xff]
  %v1180 = vlaneseq
  %v1181 = vshrl.u32 %v1180, 7
  %v1182 = vsub.s32 0, %v1181
  %v1183 = vrot.slane %v1175, %v1182
  %v1184 = vmul.f32 %v1176, %v1183
  %v1185 = vmul.f32 %v1177, %v1183
  %v1186 = vmul.f32 %v1178, %v1183
  %v1187 = vmul.f32 %v1179, %v1183
  %v1188 = vadd.f32 %v1184, 0.0
  %v1189 = vadd.f32 %v1185, 0.0
  %v1190 = vadd.f32 %v1186, 0.0
  %v1191 = vadd.f32 %v1187, 0.0
  %v1192 = vld [vmem:[%s228] sm:$0xff]
  %v1193 = vld [vmem:[%s228 + $0x8] sm:$0xff]
  %v1194 = vld [vmem:[%s228 + $0x10] sm:$0xff]
  %v1195 = vld [vmem:[%s228 + $0x18] sm:$0xff]
  %v1196 = vlaneseq
  %v1197 = vshrl.u32 %v1196, 7
  %v1198 = vsub.s32 1, %v1197
  %v1199 = vrot.slane %v1175, %v1198
  %v1200 = vmul.f32 %v1192, %v1199
  %v1201 = vmul.f32 %v1193, %v1199
  %v1202 = vmul.f32 %v1194, %v1199
  %v1203 = vmul.f32 %v1195, %v1199
  %v1204 = vadd.f32 %v1188, %v1200
  %v1205 = vadd.f32 %v1189, %v1201
  %v1206 = vadd.f32 %v1190, %v1202
  %v1207 = vadd.f32 %v1191, %v1203
  %v1208 = vld [vmem:[%s245] sm:$0xff]
  %v1209 = vld [vmem:[%s245 + $0x8] sm:$0xff]
  %v1210 = vld [vmem:[%s245 + $0x10] sm:$0xff]
  %v1211 = vld [vmem:[%s245 + $0x18] sm:$0xff]
  %v1212 = vlaneseq
  %v1213 = vshrl.u32 %v1212, 7
  %v1214 = vsub.s32 2, %v1213
  %v1215 = vrot.slane %v1175, %v1214
  %v1216 = vmul.f32 %v1208, %v1215
  %v1217 = vmul.f32 %v1209, %v1215
  %v1218 = vmul.f32 %v1210, %v1215
  %v1219 = vmul.f32 %v1211, %v1215
  %v1220 = vadd.f32 %v1204, %v1216
  %v1221 = vadd.f32 %v1205, %v1217
  %v1222 = vadd.f32 %v1206, %v1218
  %v1223 = vadd.f32 %v1207, %v1219
  %v1224 = vld [vmem:[%s262] sm:$0xff]
  %v1225 = vld [vmem:[%s262 + $0x8] sm:$0xff]
  %v1226 = vld [vmem:[%s262 + $0x10] sm:$0xff]
  %v1227 = vld [vmem:[%s262 + $0x18] sm:$0xff]
  %v1228 = vlaneseq
  %v1229 = vshrl.u32 %v1228, 7
  %v1230 = vsub.s32 3, %v1229
  %v1231 = vrot.slane %v1175, %v1230
  %v1232 = vmul.f32 %v1224, %v1231
  %v1233 = vmul.f32 %v1225, %v1231
  %v1234 = vmul.f32 %v1226, %v1231
  %v1235 = vmul.f32 %v1227, %v1231
  %v1236 = vadd.f32 %v1220, %v1232
  %v1237 = vadd.f32 %v1221, %v1233
  %v1238 = vadd.f32 %v1222, %v1234
  %v1239 = vadd.f32 %v1223, %v1235
  %v1240 = vld [vmem:[%s279] sm:$0xff]
  %v1241 = vld [vmem:[%s279 + $0x8] sm:$0xff]
  %v1242 = vld [vmem:[%s279 + $0x10] sm:$0xff]
  %v1243 = vld [vmem:[%s279 + $0x18] sm:$0xff]
  %v1244 = vlaneseq
  %v1245 = vshrl.u32 %v1244, 7
  %v1246 = vsub.s32 4, %v1245
  %v1247 = vrot.slane %v1175, %v1246
  %v1248 = vmul.f32 %v1240, %v1247
  %v1249 = vmul.f32 %v1241, %v1247
  %v1250 = vmul.f32 %v1242, %v1247
  %v1251 = vmul.f32 %v1243, %v1247
  %v1252 = vadd.f32 %v1236, %v1248
  %v1253 = vadd.f32 %v1237, %v1249
  %v1254 = vadd.f32 %v1238, %v1250
  %v1255 = vadd.f32 %v1239, %v1251
  %v1256 = vld [vmem:[%s296] sm:$0xff]
  %v1257 = vld [vmem:[%s296 + $0x8] sm:$0xff]
  %v1258 = vld [vmem:[%s296 + $0x10] sm:$0xff]
  %v1259 = vld [vmem:[%s296 + $0x18] sm:$0xff]
  %v1260 = vlaneseq
  %v1261 = vshrl.u32 %v1260, 7
  %v1262 = vsub.s32 5, %v1261
  %v1263 = vrot.slane %v1175, %v1262
  %v1264 = vmul.f32 %v1256, %v1263
  %v1265 = vmul.f32 %v1257, %v1263
  %v1266 = vmul.f32 %v1258, %v1263
  %v1267 = vmul.f32 %v1259, %v1263
  %v1268 = vadd.f32 %v1252, %v1264
  %v1269 = vadd.f32 %v1253, %v1265
  %v1270 = vadd.f32 %v1254, %v1266
  %v1271 = vadd.f32 %v1255, %v1267
  %v1272 = vld [vmem:[%s313] sm:$0xff]
  %v1273 = vld [vmem:[%s313 + $0x8] sm:$0xff]
  %v1274 = vld [vmem:[%s313 + $0x10] sm:$0xff]
  %v1275 = vld [vmem:[%s313 + $0x18] sm:$0xff]
  %v1276 = vlaneseq
  %v1277 = vshrl.u32 %v1276, 7
  %v1278 = vsub.s32 6, %v1277
  %v1279 = vrot.slane %v1175, %v1278
  %v1280 = vmul.f32 %v1272, %v1279
  %v1281 = vmul.f32 %v1273, %v1279
  %v1282 = vmul.f32 %v1274, %v1279
  %v1283 = vmul.f32 %v1275, %v1279
  %v1284 = vadd.f32 %v1268, %v1280
  %v1285 = vadd.f32 %v1269, %v1281
  %v1286 = vadd.f32 %v1270, %v1282
  %v1287 = vadd.f32 %v1271, %v1283
  %v1288 = vld [vmem:[%s330] sm:$0xff]
  %v1289 = vld [vmem:[%s330 + $0x8] sm:$0xff]
  %v1290 = vld [vmem:[%s330 + $0x10] sm:$0xff]
  %v1291 = vld [vmem:[%s330 + $0x18] sm:$0xff]
  %v1292 = vlaneseq
  %v1293 = vshrl.u32 %v1292, 7
  %v1294 = vsub.s32 7, %v1293
  %v1295 = vrot.slane %v1175, %v1294
  %v1296 = vmul.f32 %v1288, %v1295
  %v1297 = vmul.f32 %v1289, %v1295
  %v1298 = vmul.f32 %v1290, %v1295
  %v1299 = vmul.f32 %v1291, %v1295
  %v1300 = vadd.f32 %v1284, %v1296
  %v1301 = vadd.f32 %v1285, %v1297
  %v1302 = vadd.f32 %v1286, %v1298
  %v1303 = vadd.f32 %v1287, %v1299
  %s1304 = scalar_lea.vmem %s6, 8
  %1305 = vst [vmem:[%s1304] sm:$0xff] %v1175
  %s1306 = scalar_lea.vmem %s7, 32
  %1307 = vst [vmem:[%s1306] sm:$0xff] %v1300
  %1308 = vst [vmem:[%s1306 + $0x8] sm:$0xff] %v1301
  %1309 = vst [vmem:[%s1306 + $0x10] sm:$0xff] %v1302
  %1310 = vst [vmem:[%s1306 + $0x18] sm:$0xff] %v1303
  %s1311 = scalar_lea.vmem %s4, 32
  %v1312 = vld [vmem:[%s1311] sm:$0xff]
  %v1313 = vld [vmem:[%s1311 + $0x8] sm:$0xff]
  %v1314 = vld [vmem:[%s1311 + $0x10] sm:$0xff]
  %v1315 = vld [vmem:[%s1311 + $0x18] sm:$0xff]
  %s1316 = scalar_lea.vmem %s5, 32
  %v1317 = vld [vmem:[%s1316] sm:$0xff]
  %v1318 = vld [vmem:[%s1316 + $0x8] sm:$0xff]
  %v1319 = vld [vmem:[%s1316 + $0x10] sm:$0xff]
  %v1320 = vld [vmem:[%s1316 + $0x18] sm:$0xff]
  %1322 = vset.pattern.permute.xlu0 0
  %1323 = vperm.xlu0 %1322, %v1317
  %v1324 = vpop.permute.xlu0 %1323
  %1327 = vset.pattern.permute.xlu0 0
  %1328 = vperm.xlu0 %1327, %v1318
  %v1329 = vpop.permute.xlu0 %1328
  %1332 = vset.pattern.permute.xlu0 0
  %1333 = vperm.xlu0 %1332, %v1319
  %v1334 = vpop.permute.xlu0 %1333
  %1337 = vset.pattern.permute.xlu0 0
  %1338 = vperm.xlu0 %1337, %v1320
  %v1339 = vpop.permute.xlu0 %1338
  %v1342 = vsel %vm380, %v1312, 0
  %v1345 = vsel %vm380, %v1313, 0
  %v1348 = vsel %vm380, %v1314, 0
  %v1351 = vsel %vm380, %v1315, 0
  %1353 = vmatprep.subr.mxu0 0.0
  %1354 = vmatpush1.msra.mxu0 0.0
  %1355 = vmatprep.subr.mxu0 0.0
  %1356 = vmatpush1.msra.mxu0 0.0
  %1357 = vmatprep.subr.mxu0 0.0
  %1358 = vmatpush1.msra.mxu0 0.0
  %1359 = vmatprep.subr.mxu0 0.0
  %1360 = vmatpush1.msra.mxu0 0.0
  %1361 = vmatprep.subr.mxu0 0.0
  %1362 = vmatpush1.msra.mxu0 0.0
  %1363 = vmatprep.subr.mxu0 0.0
  %1364 = vmatpush1.msra.mxu0 0.0
  %1365 = vmatprep.subr.mxu0 0.0
  %1366 = vmatpush1.msra.mxu0 0.0
  %1367 = vmatprep.subr.mxu0 0.0
  %1368 = vmatpush1.msra.mxu0 0.0
  %1369 = vmatprep.subr.mxu0 0.0
  %1370 = vmatpush1.msra.mxu0 0.0
  %1371 = vmatprep.subr.mxu0 0.0
  %1372 = vmatpush1.msra.mxu0 0.0
  %1373 = vmatprep.subr.mxu0 0.0
  %1374 = vmatpush1.msra.mxu0 0.0
  %1375 = vmatprep.subr.mxu0 0.0
  %1376 = vmatpush1.msra.mxu0 0.0
  %1377 = vmatprep.subr.mxu0 0.0
  %v1378 = vand.u32 %v1014, 4294901760
  %1379 = vmatpush1.msra.mxu0 %v1378
  %1380 = vmatprep.subr.mxu0 0.0
  %v1381 = vand.u32 %v1013, 4294901760
  %1382 = vmatpush1.msra.mxu0 %v1381
  %1383 = vmatprep.subr.mxu0 0.0
  %v1384 = vand.u32 %v1012, 4294901760
  %1385 = vmatpush1.msra.mxu0 %v1384
  %1386 = vmatprep.subr.mxu0 0.0
  %v1387 = vand.u32 %v1011, 4294901760
  %1388 = vmatpush1.msra.mxu0 %v1387
  %1389 = vmatprep.subr.mxu0 0.0
  %1390 = vmatpush2.msra.mxu0 0.0
  %1391 = vmatprep.subr.mxu0 0.0
  %1392 = vmatpush2.msra.mxu0 0.0
  %1393 = vmatprep.subr.mxu0 0.0
  %1394 = vmatpush2.msra.mxu0 0.0
  %1395 = vmatprep.subr.mxu0 0.0
  %1396 = vmatpush2.msra.mxu0 0.0
  %1397 = vmatprep.subr.mxu0 0.0
  %1398 = vmatpush2.msra.mxu0 0.0
  %1399 = vmatprep.subr.mxu0 0.0
  %1400 = vmatpush2.msra.mxu0 0.0
  %1401 = vmatprep.subr.mxu0 0.0
  %1402 = vmatpush2.msra.mxu0 0.0
  %1403 = vmatprep.subr.mxu0 0.0
  %1404 = vmatpush2.msra.mxu0 0.0
  %1405 = vmatprep.subr.mxu0 0.0
  %1406 = vmatpush2.msra.mxu0 0.0
  %1407 = vmatprep.subr.mxu0 0.0
  %1408 = vmatpush2.msra.mxu0 0.0
  %1409 = vmatprep.subr.mxu0 0.0
  %1410 = vmatpush2.msra.mxu0 0.0
  %1411 = vmatprep.subr.mxu0 0.0
  %1412 = vmatpush2.msra.mxu0 0.0
  %1413 = vmatprep.subr.mxu0 0.0
  %1414 = vmatpush2.msra.mxu0 0.0
  %1415 = vmatprep.subr.mxu0 0.0
  %1416 = vmatpush2.msra.mxu0 0.0
  %1417 = vmatprep.subr.mxu0 0.0
  %1418 = vmatpush2.msra.mxu0 0.0
  %1419 = vmatprep.subr.mxu0 0.0
  %1420 = vmatpush2.msra.mxu0 0.0
  %1421 = vmatprep.mubr.f32.mxu0 0.0
  %v1422 = vand.u32 %v1342, 4294901760
  %v1423 = vsub.f32 %v1342, %v1422
  %v1424 = vand.u32 %v1423, 4294901760
  %v1425 = vsub.f32 %v1423, %v1424
  %v1426 = vand.u32 %v1425, 4294901760
  %1427 = vmatmul.mubr.f32.gmra.mxu0 %v1426
  %v1428 = vpop.f32.mrf.mxu0
  %v1429 = vadd.f32 %v1324, %v1428
  %v1430 = vpop.f32.mrf.mxu0
  %1431 = vmatprep.mubr.f32.mxu0 0.0
  %v1432 = vand.u32 %v1345, 4294901760
  %v1433 = vsub.f32 %v1345, %v1432
  %v1434 = vand.u32 %v1433, 4294901760
  %v1435 = vsub.f32 %v1433, %v1434
  %v1436 = vand.u32 %v1435, 4294901760
  %1437 = vmatmul.mubr.f32.gmra.mxu0 %v1436
  %v1438 = vpop.f32.mrf.mxu0
  %v1439 = vadd.f32 %v1329, %v1438
  %v1440 = vpop.f32.mrf.mxu0
  %1441 = vmatprep.mubr.f32.mxu0 0.0
  %v1442 = vand.u32 %v1348, 4294901760
  %v1443 = vsub.f32 %v1348, %v1442
  %v1444 = vand.u32 %v1443, 4294901760
  %v1445 = vsub.f32 %v1443, %v1444
  %v1446 = vand.u32 %v1445, 4294901760
  %1447 = vmatmul.mubr.f32.gmra.mxu0 %v1446
  %v1448 = vpop.f32.mrf.mxu0
  %v1449 = vadd.f32 %v1334, %v1448
  %v1450 = vpop.f32.mrf.mxu0
  %1451 = vmatprep.mubr.f32.mxu0 0.0
  %v1452 = vand.u32 %v1351, 4294901760
  %v1453 = vsub.f32 %v1351, %v1452
  %v1454 = vand.u32 %v1453, 4294901760
  %v1455 = vsub.f32 %v1453, %v1454
  %v1456 = vand.u32 %v1455, 4294901760
  %1457 = vmatmul.mubr.f32.gmra.mxu0 %v1456
  %v1458 = vpop.f32.mrf.mxu0
  %v1459 = vadd.f32 %v1339, %v1458
  %v1460 = vpop.f32.mrf.mxu0
  %1461 = vdwg.mxu0
  %1462 = vmatprep.subr.mxu0 0.0
  %1463 = vmatpush1.msra.mxu0 0.0
  %1464 = vmatprep.subr.mxu0 0.0
  %1465 = vmatpush1.msra.mxu0 0.0
  %1466 = vmatprep.subr.mxu0 0.0
  %1467 = vmatpush1.msra.mxu0 0.0
  %1468 = vmatprep.subr.mxu0 0.0
  %1469 = vmatpush1.msra.mxu0 0.0
  %1470 = vmatprep.subr.mxu0 0.0
  %1471 = vmatpush1.msra.mxu0 0.0
  %1472 = vmatprep.subr.mxu0 0.0
  %1473 = vmatpush1.msra.mxu0 0.0
  %1474 = vmatprep.subr.mxu0 0.0
  %1475 = vmatpush1.msra.mxu0 0.0
  %1476 = vmatprep.subr.mxu0 0.0
  %1477 = vmatpush1.msra.mxu0 0.0
  %1478 = vmatprep.subr.mxu0 0.0
  %1479 = vmatpush1.msra.mxu0 0.0
  %1480 = vmatprep.subr.mxu0 0.0
  %1481 = vmatpush1.msra.mxu0 0.0
  %1482 = vmatprep.subr.mxu0 0.0
  %1483 = vmatpush1.msra.mxu0 0.0
  %1484 = vmatprep.subr.mxu0 0.0
  %1485 = vmatpush1.msra.mxu0 0.0
  %1486 = vmatprep.subr.mxu0 0.0
  %v1487 = vand.u32 %v1014, 4294901760
  %v1488 = vsub.f32 %v1014, %v1487
  %v1489 = vand.u32 %v1488, 4294901760
  %v1490 = vsub.f32 %v1488, %v1489
  %v1491 = vand.u32 %v1490, 4294901760
  %1492 = vmatpush1.msra.mxu0 %v1491
  %1493 = vmatprep.subr.mxu0 0.0
  %v1494 = vand.u32 %v1013, 4294901760
  %v1495 = vsub.f32 %v1013, %v1494
  %v1496 = vand.u32 %v1495, 4294901760
  %v1497 = vsub.f32 %v1495, %v1496
  %v1498 = vand.u32 %v1497, 4294901760
  %1499 = vmatpush1.msra.mxu0 %v1498
  %1500 = vmatprep.subr.mxu0 0.0
  %v1501 = vand.u32 %v1012, 4294901760
  %v1502 = vsub.f32 %v1012, %v1501
  %v1503 = vand.u32 %v1502, 4294901760
  %v1504 = vsub.f32 %v1502, %v1503
  %v1505 = vand.u32 %v1504, 4294901760
  %1506 = vmatpush1.msra.mxu0 %v1505
  %1507 = vmatprep.subr.mxu0 0.0
  %v1508 = vand.u32 %v1011, 4294901760
  %v1509 = vsub.f32 %v1011, %v1508
  %v1510 = vand.u32 %v1509, 4294901760
  %v1511 = vsub.f32 %v1509, %v1510
  %v1512 = vand.u32 %v1511, 4294901760
  %1513 = vmatpush1.msra.mxu0 %v1512
  %1514 = vmatprep.subr.mxu0 0.0
  %1515 = vmatpush2.msra.mxu0 0.0
  %1516 = vmatprep.subr.mxu0 0.0
  %1517 = vmatpush2.msra.mxu0 0.0
  %1518 = vmatprep.subr.mxu0 0.0
  %1519 = vmatpush2.msra.mxu0 0.0
  %1520 = vmatprep.subr.mxu0 0.0
  %1521 = vmatpush2.msra.mxu0 0.0
  %1522 = vmatprep.subr.mxu0 0.0
  %1523 = vmatpush2.msra.mxu0 0.0
  %1524 = vmatprep.subr.mxu0 0.0
  %1525 = vmatpush2.msra.mxu0 0.0
  %1526 = vmatprep.subr.mxu0 0.0
  %1527 = vmatpush2.msra.mxu0 0.0
  %1528 = vmatprep.subr.mxu0 0.0
  %1529 = vmatpush2.msra.mxu0 0.0
  %1530 = vmatprep.subr.mxu0 0.0
  %1531 = vmatpush2.msra.mxu0 0.0
  %1532 = vmatprep.subr.mxu0 0.0
  %1533 = vmatpush2.msra.mxu0 0.0
  %1534 = vmatprep.subr.mxu0 0.0
  %1535 = vmatpush2.msra.mxu0 0.0
  %1536 = vmatprep.subr.mxu0 0.0
  %1537 = vmatpush2.msra.mxu0 0.0
  %1538 = vmatprep.subr.mxu0 0.0
  %1539 = vmatpush2.msra.mxu0 0.0
  %1540 = vmatprep.subr.mxu0 0.0
  %1541 = vmatpush2.msra.mxu0 0.0
  %1542 = vmatprep.subr.mxu0 0.0
  %1543 = vmatpush2.msra.mxu0 0.0
  %1544 = vmatprep.subr.mxu0 0.0
  %1545 = vmatpush2.msra.mxu0 0.0
  %1546 = vmatprep.mubr.f32.mxu0 0.0
  %v1547 = vand.u32 %v1342, 4294901760
  %1548 = vmatmul.mubr.f32.gmra.mxu0 %v1547
  %v1549 = vpop.f32.mrf.mxu0
  %v1550 = vadd.f32 %v1429, %v1549
  %v1551 = vpop.f32.mrf.mxu0
  %1552 = vmatprep.mubr.f32.mxu0 0.0
  %v1553 = vand.u32 %v1345, 4294901760
  %1554 = vmatmul.mubr.f32.gmra.mxu0 %v1553
  %v1555 = vpop.f32.mrf.mxu0
  %v1556 = vadd.f32 %v1439, %v1555
  %v1557 = vpop.f32.mrf.mxu0
  %1558 = vmatprep.mubr.f32.mxu0 0.0
  %v1559 = vand.u32 %v1348, 4294901760
  %1560 = vmatmul.mubr.f32.gmra.mxu0 %v1559
  %v1561 = vpop.f32.mrf.mxu0
  %v1562 = vadd.f32 %v1449, %v1561
  %v1563 = vpop.f32.mrf.mxu0
  %1564 = vmatprep.mubr.f32.mxu0 0.0
  %v1565 = vand.u32 %v1351, 4294901760
  %1566 = vmatmul.mubr.f32.gmra.mxu0 %v1565
  %v1567 = vpop.f32.mrf.mxu0
  %v1568 = vadd.f32 %v1459, %v1567
  %v1569 = vpop.f32.mrf.mxu0
  %1570 = vdwg.mxu0
  %1571 = vmatprep.subr.mxu0 0.0
  %1572 = vmatpush1.msra.mxu0 0.0
  %1573 = vmatprep.subr.mxu0 0.0
  %1574 = vmatpush1.msra.mxu0 0.0
  %1575 = vmatprep.subr.mxu0 0.0
  %1576 = vmatpush1.msra.mxu0 0.0
  %1577 = vmatprep.subr.mxu0 0.0
  %1578 = vmatpush1.msra.mxu0 0.0
  %1579 = vmatprep.subr.mxu0 0.0
  %1580 = vmatpush1.msra.mxu0 0.0
  %1581 = vmatprep.subr.mxu0 0.0
  %1582 = vmatpush1.msra.mxu0 0.0
  %1583 = vmatprep.subr.mxu0 0.0
  %1584 = vmatpush1.msra.mxu0 0.0
  %1585 = vmatprep.subr.mxu0 0.0
  %1586 = vmatpush1.msra.mxu0 0.0
  %1587 = vmatprep.subr.mxu0 0.0
  %1588 = vmatpush1.msra.mxu0 0.0
  %1589 = vmatprep.subr.mxu0 0.0
  %1590 = vmatpush1.msra.mxu0 0.0
  %1591 = vmatprep.subr.mxu0 0.0
  %1592 = vmatpush1.msra.mxu0 0.0
  %1593 = vmatprep.subr.mxu0 0.0
  %1594 = vmatpush1.msra.mxu0 0.0
  %1595 = vmatprep.subr.mxu0 0.0
  %v1596 = vand.u32 %v1014, 4294901760
  %v1597 = vsub.f32 %v1014, %v1596
  %1598 = vmatpush1.msra.mxu0 %v1597
  %1599 = vmatprep.subr.mxu0 0.0
  %v1600 = vand.u32 %v1013, 4294901760
  %v1601 = vsub.f32 %v1013, %v1600
  %1602 = vmatpush1.msra.mxu0 %v1601
  %1603 = vmatprep.subr.mxu0 0.0
  %v1604 = vand.u32 %v1012, 4294901760
  %v1605 = vsub.f32 %v1012, %v1604
  %1606 = vmatpush1.msra.mxu0 %v1605
  %1607 = vmatprep.subr.mxu0 0.0
  %v1608 = vand.u32 %v1011, 4294901760
  %v1609 = vsub.f32 %v1011, %v1608
  %1610 = vmatpush1.msra.mxu0 %v1609
  %1611 = vmatprep.subr.mxu0 0.0
  %1612 = vmatpush2.msra.mxu0 0.0
  %1613 = vmatprep.subr.mxu0 0.0
  %1614 = vmatpush2.msra.mxu0 0.0
  %1615 = vmatprep.subr.mxu0 0.0
  %1616 = vmatpush2.msra.mxu0 0.0
  %1617 = vmatprep.subr.mxu0 0.0
  %1618 = vmatpush2.msra.mxu0 0.0
  %1619 = vmatprep.subr.mxu0 0.0
  %1620 = vmatpush2.msra.mxu0 0.0
  %1621 = vmatprep.subr.mxu0 0.0
  %1622 = vmatpush2.msra.mxu0 0.0
  %1623 = vmatprep.subr.mxu0 0.0
  %1624 = vmatpush2.msra.mxu0 0.0
  %1625 = vmatprep.subr.mxu0 0.0
  %1626 = vmatpush2.msra.mxu0 0.0
  %1627 = vmatprep.subr.mxu0 0.0
  %1628 = vmatpush2.msra.mxu0 0.0
  %1629 = vmatprep.subr.mxu0 0.0
  %1630 = vmatpush2.msra.mxu0 0.0
  %1631 = vmatprep.subr.mxu0 0.0
  %1632 = vmatpush2.msra.mxu0 0.0
  %1633 = vmatprep.subr.mxu0 0.0
  %1634 = vmatpush2.msra.mxu0 0.0
  %1635 = vmatprep.subr.mxu0 0.0
  %1636 = vmatpush2.msra.mxu0 0.0
  %1637 = vmatprep.subr.mxu0 0.0
  %1638 = vmatpush2.msra.mxu0 0.0
  %1639 = vmatprep.subr.mxu0 0.0
  %1640 = vmatpush2.msra.mxu0 0.0
  %1641 = vmatprep.subr.mxu0 0.0
  %1642 = vmatpush2.msra.mxu0 0.0
  %1643 = vmatprep.mubr.f32.mxu0 0.0
  %v1644 = vand.u32 %v1342, 4294901760
  %v1645 = vsub.f32 %v1342, %v1644
  %1646 = vmatmul.mubr.f32.gmra.mxu0 %v1645
  %v1647 = vpop.f32.mrf.mxu0
  %v1648 = vadd.f32 %v1550, %v1647
  %v1649 = vpop.f32.mrf.mxu0
  %1650 = vmatprep.mubr.f32.mxu0 0.0
  %v1651 = vand.u32 %v1345, 4294901760
  %v1652 = vsub.f32 %v1345, %v1651
  %1653 = vmatmul.mubr.f32.gmra.mxu0 %v1652
  %v1654 = vpop.f32.mrf.mxu0
  %v1655 = vadd.f32 %v1556, %v1654
  %v1656 = vpop.f32.mrf.mxu0
  %1657 = vmatprep.mubr.f32.mxu0 0.0
  %v1658 = vand.u32 %v1348, 4294901760
  %v1659 = vsub.f32 %v1348, %v1658
  %1660 = vmatmul.mubr.f32.gmra.mxu0 %v1659
  %v1661 = vpop.f32.mrf.mxu0
  %v1662 = vadd.f32 %v1562, %v1661
  %v1663 = vpop.f32.mrf.mxu0
  %1664 = vmatprep.mubr.f32.mxu0 0.0
  %v1665 = vand.u32 %v1351, 4294901760
  %v1666 = vsub.f32 %v1351, %v1665
  %1667 = vmatmul.mubr.f32.gmra.mxu0 %v1666
  %v1668 = vpop.f32.mrf.mxu0
  %v1669 = vadd.f32 %v1568, %v1668
  %v1670 = vpop.f32.mrf.mxu0
  %1671 = vdwg.mxu0
  %1672 = vmatprep.subr.mxu0 0.0
  %1673 = vmatpush1.msra.mxu0 0.0
  %1674 = vmatprep.subr.mxu0 0.0
  %1675 = vmatpush1.msra.mxu0 0.0
  %1676 = vmatprep.subr.mxu0 0.0
  %1677 = vmatpush1.msra.mxu0 0.0
  %1678 = vmatprep.subr.mxu0 0.0
  %1679 = vmatpush1.msra.mxu0 0.0
  %1680 = vmatprep.subr.mxu0 0.0
  %1681 = vmatpush1.msra.mxu0 0.0
  %1682 = vmatprep.subr.mxu0 0.0
  %1683 = vmatpush1.msra.mxu0 0.0
  %1684 = vmatprep.subr.mxu0 0.0
  %1685 = vmatpush1.msra.mxu0 0.0
  %1686 = vmatprep.subr.mxu0 0.0
  %1687 = vmatpush1.msra.mxu0 0.0
  %1688 = vmatprep.subr.mxu0 0.0
  %1689 = vmatpush1.msra.mxu0 0.0
  %1690 = vmatprep.subr.mxu0 0.0
  %1691 = vmatpush1.msra.mxu0 0.0
  %1692 = vmatprep.subr.mxu0 0.0
  %1693 = vmatpush1.msra.mxu0 0.0
  %1694 = vmatprep.subr.mxu0 0.0
  %1695 = vmatpush1.msra.mxu0 0.0
  %1696 = vmatprep.subr.mxu0 0.0
  %v1697 = vand.u32 %v1014, 4294901760
  %1698 = vmatpush1.msra.mxu0 %v1697
  %1699 = vmatprep.subr.mxu0 0.0
  %v1700 = vand.u32 %v1013, 4294901760
  %1701 = vmatpush1.msra.mxu0 %v1700
  %1702 = vmatprep.subr.mxu0 0.0
  %v1703 = vand.u32 %v1012, 4294901760
  %1704 = vmatpush1.msra.mxu0 %v1703
  %1705 = vmatprep.subr.mxu0 0.0
  %v1706 = vand.u32 %v1011, 4294901760
  %1707 = vmatpush1.msra.mxu0 %v1706
  %1708 = vmatprep.subr.mxu0 0.0
  %1709 = vmatpush2.msra.mxu0 0.0
  %1710 = vmatprep.subr.mxu0 0.0
  %1711 = vmatpush2.msra.mxu0 0.0
  %1712 = vmatprep.subr.mxu0 0.0
  %1713 = vmatpush2.msra.mxu0 0.0
  %1714 = vmatprep.subr.mxu0 0.0
  %1715 = vmatpush2.msra.mxu0 0.0
  %1716 = vmatprep.subr.mxu0 0.0
  %1717 = vmatpush2.msra.mxu0 0.0
  %1718 = vmatprep.subr.mxu0 0.0
  %1719 = vmatpush2.msra.mxu0 0.0
  %1720 = vmatprep.subr.mxu0 0.0
  %1721 = vmatpush2.msra.mxu0 0.0
  %1722 = vmatprep.subr.mxu0 0.0
  %1723 = vmatpush2.msra.mxu0 0.0
  %1724 = vmatprep.subr.mxu0 0.0
  %1725 = vmatpush2.msra.mxu0 0.0
  %1726 = vmatprep.subr.mxu0 0.0
  %1727 = vmatpush2.msra.mxu0 0.0
  %1728 = vmatprep.subr.mxu0 0.0
  %1729 = vmatpush2.msra.mxu0 0.0
  %1730 = vmatprep.subr.mxu0 0.0
  %1731 = vmatpush2.msra.mxu0 0.0
  %1732 = vmatprep.subr.mxu0 0.0
  %1733 = vmatpush2.msra.mxu0 0.0
  %1734 = vmatprep.subr.mxu0 0.0
  %1735 = vmatpush2.msra.mxu0 0.0
  %1736 = vmatprep.subr.mxu0 0.0
  %1737 = vmatpush2.msra.mxu0 0.0
  %1738 = vmatprep.subr.mxu0 0.0
  %1739 = vmatpush2.msra.mxu0 0.0
  %1740 = vmatprep.mubr.f32.mxu0 0.0
  %v1741 = vand.u32 %v1342, 4294901760
  %v1742 = vsub.f32 %v1342, %v1741
  %v1743 = vand.u32 %v1742, 4294901760
  %1744 = vmatmul.mubr.f32.gmra.mxu0 %v1743
  %v1745 = vpop.f32.mrf.mxu0
  %v1746 = vadd.f32 %v1648, %v1745
  %v1747 = vpop.f32.mrf.mxu0
  %1748 = vmatprep.mubr.f32.mxu0 0.0
  %v1749 = vand.u32 %v1345, 4294901760
  %v1750 = vsub.f32 %v1345, %v1749
  %v1751 = vand.u32 %v1750, 4294901760
  %1752 = vmatmul.mubr.f32.gmra.mxu0 %v1751
  %v1753 = vpop.f32.mrf.mxu0
  %v1754 = vadd.f32 %v1655, %v1753
  %v1755 = vpop.f32.mrf.mxu0
  %1756 = vmatprep.mubr.f32.mxu0 0.0
  %v1757 = vand.u32 %v1348, 4294901760
  %v1758 = vsub.f32 %v1348, %v1757
  %v1759 = vand.u32 %v1758, 4294901760
  %1760 = vmatmul.mubr.f32.gmra.mxu0 %v1759
  %v1761 = vpop.f32.mrf.mxu0
  %v1762 = vadd.f32 %v1662, %v1761
  %v1763 = vpop.f32.mrf.mxu0
  %1764 = vmatprep.mubr.f32.mxu0 0.0
  %v1765 = vand.u32 %v1351, 4294901760
  %v1766 = vsub.f32 %v1351, %v1765
  %v1767 = vand.u32 %v1766, 4294901760
  %1768 = vmatmul.mubr.f32.gmra.mxu0 %v1767
  %v1769 = vpop.f32.mrf.mxu0
  %v1770 = vadd.f32 %v1669, %v1769
  %v1771 = vpop.f32.mrf.mxu0
  %1772 = vdwg.mxu0
  %1773 = vmatprep.subr.mxu0 0.0
  %1774 = vmatpush1.msra.mxu0 0.0
  %1775 = vmatprep.subr.mxu0 0.0
  %1776 = vmatpush1.msra.mxu0 0.0
  %1777 = vmatprep.subr.mxu0 0.0
  %1778 = vmatpush1.msra.mxu0 0.0
  %1779 = vmatprep.subr.mxu0 0.0
  %1780 = vmatpush1.msra.mxu0 0.0
  %1781 = vmatprep.subr.mxu0 0.0
  %1782 = vmatpush1.msra.mxu0 0.0
  %1783 = vmatprep.subr.mxu0 0.0
  %1784 = vmatpush1.msra.mxu0 0.0
  %1785 = vmatprep.subr.mxu0 0.0
  %1786 = vmatpush1.msra.mxu0 0.0
  %1787 = vmatprep.subr.mxu0 0.0
  %1788 = vmatpush1.msra.mxu0 0.0
  %1789 = vmatprep.subr.mxu0 0.0
  %1790 = vmatpush1.msra.mxu0 0.0
  %1791 = vmatprep.subr.mxu0 0.0
  %1792 = vmatpush1.msra.mxu0 0.0
  %1793 = vmatprep.subr.mxu0 0.0
  %1794 = vmatpush1.msra.mxu0 0.0
  %1795 = vmatprep.subr.mxu0 0.0
  %1796 = vmatpush1.msra.mxu0 0.0
  %1797 = vmatprep.subr.mxu0 0.0
  %v1798 = vand.u32 %v1014, 4294901760
  %v1799 = vsub.f32 %v1014, %v1798
  %v1800 = vand.u32 %v1799, 4294901760
  %1801 = vmatpush1.msra.mxu0 %v1800
  %1802 = vmatprep.subr.mxu0 0.0
  %v1803 = vand.u32 %v1013, 4294901760
  %v1804 = vsub.f32 %v1013, %v1803
  %v1805 = vand.u32 %v1804, 4294901760
  %1806 = vmatpush1.msra.mxu0 %v1805
  %1807 = vmatprep.subr.mxu0 0.0
  %v1808 = vand.u32 %v1012, 4294901760
  %v1809 = vsub.f32 %v1012, %v1808
  %v1810 = vand.u32 %v1809, 4294901760
  %1811 = vmatpush1.msra.mxu0 %v1810
  %1812 = vmatprep.subr.mxu0 0.0
  %v1813 = vand.u32 %v1011, 4294901760
  %v1814 = vsub.f32 %v1011, %v1813
  %v1815 = vand.u32 %v1814, 4294901760
  %1816 = vmatpush1.msra.mxu0 %v1815
  %1817 = vmatprep.subr.mxu0 0.0
  %1818 = vmatpush2.msra.mxu0 0.0
  %1819 = vmatprep.subr.mxu0 0.0
  %1820 = vmatpush2.msra.mxu0 0.0
  %1821 = vmatprep.subr.mxu0 0.0
  %1822 = vmatpush2.msra.mxu0 0.0
  %1823 = vmatprep.subr.mxu0 0.0
  %1824 = vmatpush2.msra.mxu0 0.0
  %1825 = vmatprep.subr.mxu0 0.0
  %1826 = vmatpush2.msra.mxu0 0.0
  %1827 = vmatprep.subr.mxu0 0.0
  %1828 = vmatpush2.msra.mxu0 0.0
  %1829 = vmatprep.subr.mxu0 0.0
  %1830 = vmatpush2.msra.mxu0 0.0
  %1831 = vmatprep.subr.mxu0 0.0
  %1832 = vmatpush2.msra.mxu0 0.0
  %1833 = vmatprep.subr.mxu0 0.0
  %1834 = vmatpush2.msra.mxu0 0.0
  %1835 = vmatprep.subr.mxu0 0.0
  %1836 = vmatpush2.msra.mxu0 0.0
  %1837 = vmatprep.subr.mxu0 0.0
  %1838 = vmatpush2.msra.mxu0 0.0
  %1839 = vmatprep.subr.mxu0 0.0
  %1840 = vmatpush2.msra.mxu0 0.0
  %1841 = vmatprep.subr.mxu0 0.0
  %1842 = vmatpush2.msra.mxu0 0.0
  %1843 = vmatprep.subr.mxu0 0.0
  %1844 = vmatpush2.msra.mxu0 0.0
  %1845 = vmatprep.subr.mxu0 0.0
  %1846 = vmatpush2.msra.mxu0 0.0
  %1847 = vmatprep.subr.mxu0 0.0
  %1848 = vmatpush2.msra.mxu0 0.0
  %1849 = vmatprep.mubr.f32.mxu0 0.0
  %v1850 = vand.u32 %v1342, 4294901760
  %1851 = vmatmul.mubr.f32.gmra.mxu0 %v1850
  %v1852 = vpop.f32.mrf.mxu0
  %v1853 = vadd.f32 %v1746, %v1852
  %v1854 = vpop.f32.mrf.mxu0
  %1855 = vmatprep.mubr.f32.mxu0 0.0
  %v1856 = vand.u32 %v1345, 4294901760
  %1857 = vmatmul.mubr.f32.gmra.mxu0 %v1856
  %v1858 = vpop.f32.mrf.mxu0
  %v1859 = vadd.f32 %v1754, %v1858
  %v1860 = vpop.f32.mrf.mxu0
  %1861 = vmatprep.mubr.f32.mxu0 0.0
  %v1862 = vand.u32 %v1348, 4294901760
  %1863 = vmatmul.mubr.f32.gmra.mxu0 %v1862
  %v1864 = vpop.f32.mrf.mxu0
  %v1865 = vadd.f32 %v1762, %v1864
  %v1866 = vpop.f32.mrf.mxu0
  %1867 = vmatprep.mubr.f32.mxu0 0.0
  %v1868 = vand.u32 %v1351, 4294901760
  %1869 = vmatmul.mubr.f32.gmra.mxu0 %v1868
  %v1870 = vpop.f32.mrf.mxu0
  %v1871 = vadd.f32 %v1770, %v1870
  %v1872 = vpop.f32.mrf.mxu0
  %1873 = vdwg.mxu0
  %1874 = vmatprep.subr.mxu0 0.0
  %1875 = vmatpush1.msra.mxu0 0.0
  %1876 = vmatprep.subr.mxu0 0.0
  %1877 = vmatpush1.msra.mxu0 0.0
  %1878 = vmatprep.subr.mxu0 0.0
  %1879 = vmatpush1.msra.mxu0 0.0
  %1880 = vmatprep.subr.mxu0 0.0
  %1881 = vmatpush1.msra.mxu0 0.0
  %1882 = vmatprep.subr.mxu0 0.0
  %1883 = vmatpush1.msra.mxu0 0.0
  %1884 = vmatprep.subr.mxu0 0.0
  %1885 = vmatpush1.msra.mxu0 0.0
  %1886 = vmatprep.subr.mxu0 0.0
  %1887 = vmatpush1.msra.mxu0 0.0
  %1888 = vmatprep.subr.mxu0 0.0
  %1889 = vmatpush1.msra.mxu0 0.0
  %1890 = vmatprep.subr.mxu0 0.0
  %1891 = vmatpush1.msra.mxu0 0.0
  %1892 = vmatprep.subr.mxu0 0.0
  %1893 = vmatpush1.msra.mxu0 0.0
  %1894 = vmatprep.subr.mxu0 0.0
  %1895 = vmatpush1.msra.mxu0 0.0
  %1896 = vmatprep.subr.mxu0 0.0
  %1897 = vmatpush1.msra.mxu0 0.0
  %1898 = vmatprep.subr.mxu0 0.0
  %v1899 = vand.u32 %v1014, 4294901760
  %1900 = vmatpush1.msra.mxu0 %v1899
  %1901 = vmatprep.subr.mxu0 0.0
  %v1902 = vand.u32 %v1013, 4294901760
  %1903 = vmatpush1.msra.mxu0 %v1902
  %1904 = vmatprep.subr.mxu0 0.0
  %v1905 = vand.u32 %v1012, 4294901760
  %1906 = vmatpush1.msra.mxu0 %v1905
  %1907 = vmatprep.subr.mxu0 0.0
  %v1908 = vand.u32 %v1011, 4294901760
  %1909 = vmatpush1.msra.mxu0 %v1908
  %1910 = vmatprep.subr.mxu0 0.0
  %1911 = vmatpush2.msra.mxu0 0.0
  %1912 = vmatprep.subr.mxu0 0.0
  %1913 = vmatpush2.msra.mxu0 0.0
  %1914 = vmatprep.subr.mxu0 0.0
  %1915 = vmatpush2.msra.mxu0 0.0
  %1916 = vmatprep.subr.mxu0 0.0
  %1917 = vmatpush2.msra.mxu0 0.0
  %1918 = vmatprep.subr.mxu0 0.0
  %1919 = vmatpush2.msra.mxu0 0.0
  %1920 = vmatprep.subr.mxu0 0.0
  %1921 = vmatpush2.msra.mxu0 0.0
  %1922 = vmatprep.subr.mxu0 0.0
  %1923 = vmatpush2.msra.mxu0 0.0
  %1924 = vmatprep.subr.mxu0 0.0
  %1925 = vmatpush2.msra.mxu0 0.0
  %1926 = vmatprep.subr.mxu0 0.0
  %1927 = vmatpush2.msra.mxu0 0.0
  %1928 = vmatprep.subr.mxu0 0.0
  %1929 = vmatpush2.msra.mxu0 0.0
  %1930 = vmatprep.subr.mxu0 0.0
  %1931 = vmatpush2.msra.mxu0 0.0
  %1932 = vmatprep.subr.mxu0 0.0
  %1933 = vmatpush2.msra.mxu0 0.0
  %1934 = vmatprep.subr.mxu0 0.0
  %1935 = vmatpush2.msra.mxu0 0.0
  %1936 = vmatprep.subr.mxu0 0.0
  %1937 = vmatpush2.msra.mxu0 0.0
  %1938 = vmatprep.subr.mxu0 0.0
  %1939 = vmatpush2.msra.mxu0 0.0
  %1940 = vmatprep.subr.mxu0 0.0
  %1941 = vmatpush2.msra.mxu0 0.0
  %1942 = vmatprep.mubr.f32.mxu0 0.0
  %v1943 = vand.u32 %v1342, 4294901760
  %1944 = vmatmul.mubr.f32.gmra.mxu0 %v1943
  %v1945 = vpop.f32.mrf.mxu0
  %v1946 = vadd.f32 %v1853, %v1945
  %v1947 = vpop.f32.mrf.mxu0
  %1948 = vmatprep.mubr.f32.mxu0 0.0
  %v1949 = vand.u32 %v1345, 4294901760
  %1950 = vmatmul.mubr.f32.gmra.mxu0 %v1949
  %v1951 = vpop.f32.mrf.mxu0
  %v1952 = vadd.f32 %v1859, %v1951
  %v1953 = vpop.f32.mrf.mxu0
  %1954 = vmatprep.mubr.f32.mxu0 0.0
  %v1955 = vand.u32 %v1348, 4294901760
  %1956 = vmatmul.mubr.f32.gmra.mxu0 %v1955
  %v1957 = vpop.f32.mrf.mxu0
  %v1958 = vadd.f32 %v1865, %v1957
  %v1959 = vpop.f32.mrf.mxu0
  %1960 = vmatprep.mubr.f32.mxu0 0.0
  %v1961 = vand.u32 %v1351, 4294901760
  %1962 = vmatmul.mubr.f32.gmra.mxu0 %v1961
  %v1963 = vpop.f32.mrf.mxu0
  %v1964 = vadd.f32 %v1871, %v1963
  %v1965 = vpop.f32.mrf.mxu0
  %1966 = vdwg.mxu0
  %v1967 = vadd.f32 %v1946, %v1300
  %v1968 = vadd.f32 %v1952, %v1301
  %v1969 = vadd.f32 %v1958, %v1302
  %v1970 = vadd.f32 %v1964, %v1303
  %v1971 = vmax.f32 %v1967, 0.0
  %v1972 = vmax.f32 %v1968, 0.0
  %v1973 = vmax.f32 %v1969, 0.0
  %v1974 = vmax.f32 %v1970, 0.0
  %v1975 = vld [vmem:[%s0] sm:$0xff]
  %v1976 = vld [vmem:[%s0 + $0x8] sm:$0xff]
  %v1977 = vld [vmem:[%s0 + $0x10] sm:$0xff]
  %v1978 = vld [vmem:[%s0 + $0x18] sm:$0xff]
  %v1979 = vmul.f32 %v1975, %v1971
  %v1980 = vmul.f32 %v1976, %v1972
  %v1981 = vmul.f32 %v1977, %v1973
  %v1982 = vmul.f32 %v1978, %v1974
  %v1983 = vadd.f32 %v1979, %v1980
  %v1984 = vadd.f32 %v1983, %v1981
  %v1985 = vadd.f32 %v1984, %v1982
  %v1986 = vrot.slane %v1985, 4
  %v1987 = vadd.f32 %v1985, %v1986
  %v1988 = vrot.slane %v1987, 2
  %v1989 = vadd.f32 %v1987, %v1988
  %v1990 = vrot.slane %v1989, 1
  %v1991 = vadd.f32 %v1989, %v1990
  %v1992 = vld [vmem:[%s54] sm:$0xff]
  %v1993 = vld [vmem:[%s54 + $0x8] sm:$0xff]
  %v1994 = vld [vmem:[%s54 + $0x10] sm:$0xff]
  %v1995 = vld [vmem:[%s54 + $0x18] sm:$0xff]
  %v1996 = vmul.f32 %v1992, %v1971
  %v1997 = vmul.f32 %v1993, %v1972
  %v1998 = vmul.f32 %v1994, %v1973
  %v1999 = vmul.f32 %v1995, %v1974
  %v2000 = vadd.f32 %v1996, %v1997
  %v2001 = vadd.f32 %v2000, %v1998
  %v2002 = vadd.f32 %v2001, %v1999
  %v2003 = vrot.slane %v2002, 4
  %v2004 = vadd.f32 %v2002, %v2003
  %v2005 = vrot.slane %v2004, 2
  %v2006 = vadd.f32 %v2004, %v2005
  %v2007 = vrot.slane %v2006, 1
  %v2008 = vadd.f32 %v2006, %v2007
  %v2009 = vld [vmem:[%s72] sm:$0xff]
  %v2010 = vld [vmem:[%s72 + $0x8] sm:$0xff]
  %v2011 = vld [vmem:[%s72 + $0x10] sm:$0xff]
  %v2012 = vld [vmem:[%s72 + $0x18] sm:$0xff]
  %v2013 = vmul.f32 %v2009, %v1971
  %v2014 = vmul.f32 %v2010, %v1972
  %v2015 = vmul.f32 %v2011, %v1973
  %v2016 = vmul.f32 %v2012, %v1974
  %v2017 = vadd.f32 %v2013, %v2014
  %v2018 = vadd.f32 %v2017, %v2015
  %v2019 = vadd.f32 %v2018, %v2016
  %v2020 = vrot.slane %v2019, 4
  %v2021 = vadd.f32 %v2019, %v2020
  %v2022 = vrot.slane %v2021, 2
  %v2023 = vadd.f32 %v2021, %v2022
  %v2024 = vrot.slane %v2023, 1
  %v2025 = vadd.f32 %v2023, %v2024
  %v2026 = vld [vmem:[%s90] sm:$0xff]
  %v2027 = vld [vmem:[%s90 + $0x8] sm:$0xff]
  %v2028 = vld [vmem:[%s90 + $0x10] sm:$0xff]
  %v2029 = vld [vmem:[%s90 + $0x18] sm:$0xff]
  %v2030 = vmul.f32 %v2026, %v1971
  %v2031 = vmul.f32 %v2027, %v1972
  %v2032 = vmul.f32 %v2028, %v1973
  %v2033 = vmul.f32 %v2029, %v1974
  %v2034 = vadd.f32 %v2030, %v2031
  %v2035 = vadd.f32 %v2034, %v2032
  %v2036 = vadd.f32 %v2035, %v2033
  %v2037 = vrot.slane %v2036, 4
  %v2038 = vadd.f32 %v2036, %v2037
  %v2039 = vrot.slane %v2038, 2
  %v2040 = vadd.f32 %v2038, %v2039
  %v2041 = vrot.slane %v2040, 1
  %v2042 = vadd.f32 %v2040, %v2041
  %v2043 = vld [vmem:[%s108] sm:$0xff]
  %v2044 = vld [vmem:[%s108 + $0x8] sm:$0xff]
  %v2045 = vld [vmem:[%s108 + $0x10] sm:$0xff]
  %v2046 = vld [vmem:[%s108 + $0x18] sm:$0xff]
  %v2047 = vmul.f32 %v2043, %v1971
  %v2048 = vmul.f32 %v2044, %v1972
  %v2049 = vmul.f32 %v2045, %v1973
  %v2050 = vmul.f32 %v2046, %v1974
  %v2051 = vadd.f32 %v2047, %v2048
  %v2052 = vadd.f32 %v2051, %v2049
  %v2053 = vadd.f32 %v2052, %v2050
  %v2054 = vrot.slane %v2053, 4
  %v2055 = vadd.f32 %v2053, %v2054
  %v2056 = vrot.slane %v2055, 2
  %v2057 = vadd.f32 %v2055, %v2056
  %v2058 = vrot.slane %v2057, 1
  %v2059 = vadd.f32 %v2057, %v2058
  %v2060 = vld [vmem:[%s126] sm:$0xff]
  %v2061 = vld [vmem:[%s126 + $0x8] sm:$0xff]
  %v2062 = vld [vmem:[%s126 + $0x10] sm:$0xff]
  %v2063 = vld [vmem:[%s126 + $0x18] sm:$0xff]
  %v2064 = vmul.f32 %v2060, %v1971
  %v2065 = vmul.f32 %v2061, %v1972
  %v2066 = vmul.f32 %v2062, %v1973
  %v2067 = vmul.f32 %v2063, %v1974
  %v2068 = vadd.f32 %v2064, %v2065
  %v2069 = vadd.f32 %v2068, %v2066
  %v2070 = vadd.f32 %v2069, %v2067
  %v2071 = vrot.slane %v2070, 4
  %v2072 = vadd.f32 %v2070, %v2071
  %v2073 = vrot.slane %v2072, 2
  %v2074 = vadd.f32 %v2072, %v2073
  %v2075 = vrot.slane %v2074, 1
  %v2076 = vadd.f32 %v2074, %v2075
  %v2077 = vld [vmem:[%s144] sm:$0xff]
  %v2078 = vld [vmem:[%s144 + $0x8] sm:$0xff]
  %v2079 = vld [vmem:[%s144 + $0x10] sm:$0xff]
  %v2080 = vld [vmem:[%s144 + $0x18] sm:$0xff]
  %v2081 = vmul.f32 %v2077, %v1971
  %v2082 = vmul.f32 %v2078, %v1972
  %v2083 = vmul.f32 %v2079, %v1973
  %v2084 = vmul.f32 %v2080, %v1974
  %v2085 = vadd.f32 %v2081, %v2082
  %v2086 = vadd.f32 %v2085, %v2083
  %v2087 = vadd.f32 %v2086, %v2084
  %v2088 = vrot.slane %v2087, 4
  %v2089 = vadd.f32 %v2087, %v2088
  %v2090 = vrot.slane %v2089, 2
  %v2091 = vadd.f32 %v2089, %v2090
  %v2092 = vrot.slane %v2091, 1
  %v2093 = vadd.f32 %v2091, %v2092
  %v2094 = vld [vmem:[%s162] sm:$0xff]
  %v2095 = vld [vmem:[%s162 + $0x8] sm:$0xff]
  %v2096 = vld [vmem:[%s162 + $0x10] sm:$0xff]
  %v2097 = vld [vmem:[%s162 + $0x18] sm:$0xff]
  %v2098 = vmul.f32 %v2094, %v1971
  %v2099 = vmul.f32 %v2095, %v1972
  %v2100 = vmul.f32 %v2096, %v1973
  %v2101 = vmul.f32 %v2097, %v1974
  %v2102 = vadd.f32 %v2098, %v2099
  %v2103 = vadd.f32 %v2102, %v2100
  %v2104 = vadd.f32 %v2103, %v2101
  %v2105 = vrot.slane %v2104, 4
  %v2106 = vadd.f32 %v2104, %v2105
  %v2107 = vrot.slane %v2106, 2
  %v2108 = vadd.f32 %v2106, %v2107
  %v2109 = vrot.slane %v2108, 1
  %v2110 = vadd.f32 %v2108, %v2109
  %v2111 = vsel %vm180, %v1991, %v2008
  %v2112 = vsel %vm182, %v2111, %v2025
  %v2113 = vsel %vm184, %v2112, %v2042
  %v2114 = vsel %vm186, %v2113, %v2059
  %v2115 = vsel %vm188, %v2114, %v2076
  %v2116 = vsel %vm190, %v2115, %v2093
  %v2117 = vsel %vm192, %v2116, %v2110
  %v2118 = vsel %vm32, %v2117, -3.4028235e+38
  %v2119 = vrot.slane %v2118, 4
  %v2120 = vmax.f32 %v2118, %v2119
  %v2121 = vrot.slane %v2120, 2
  %v2122 = vmax.f32 %v2120, %v2121
  %v2123 = vrot.slane %v2122, 1
  %v2124 = vmax.f32 %v2122, %v2123
  %v2125 = vsub.f32 %v2118, %v2124
  %v2126 = vmul.f32 %v2125, 1.442695
  %v2127 = vpow.pop %v2126
  %v2128 = vrot.slane %v2127, 4
  %v2129 = vadd.f32 %v2127, %v2128
  %v2130 = vrot.slane %v2129, 2
  %v2131 = vadd.f32 %v2129, %v2130
  %v2132 = vrot.slane %v2131, 1
  %v2133 = vadd.f32 %v2131, %v2132
  %v2134 = vrcp.pop %v2133
  %v2135 = vmul.f32 %v2127, %v2134
  %v2136 = vld [vmem:[%s1] sm:$0xff]
  %v2137 = vld [vmem:[%s1 + $0x8] sm:$0xff]
  %v2138 = vld [vmem:[%s1 + $0x10] sm:$0xff]
  %v2139 = vld [vmem:[%s1 + $0x18] sm:$0xff]
  %v2140 = vlaneseq
  %v2141 = vshrl.u32 %v2140, 7
  %v2142 = vsub.s32 0, %v2141
  %v2143 = vrot.slane %v2135, %v2142
  %v2144 = vmul.f32 %v2136, %v2143
  %v2145 = vmul.f32 %v2137, %v2143
  %v2146 = vmul.f32 %v2138, %v2143
  %v2147 = vmul.f32 %v2139, %v2143
  %v2148 = vadd.f32 %v2144, 0.0
  %v2149 = vadd.f32 %v2145, 0.0
  %v2150 = vadd.f32 %v2146, 0.0
  %v2151 = vadd.f32 %v2147, 0.0
  %v2152 = vld [vmem:[%s228] sm:$0xff]
  %v2153 = vld [vmem:[%s228 + $0x8] sm:$0xff]
  %v2154 = vld [vmem:[%s228 + $0x10] sm:$0xff]
  %v2155 = vld [vmem:[%s228 + $0x18] sm:$0xff]
  %v2156 = vlaneseq
  %v2157 = vshrl.u32 %v2156, 7
  %v2158 = vsub.s32 1, %v2157
  %v2159 = vrot.slane %v2135, %v2158
  %v2160 = vmul.f32 %v2152, %v2159
  %v2161 = vmul.f32 %v2153, %v2159
  %v2162 = vmul.f32 %v2154, %v2159
  %v2163 = vmul.f32 %v2155, %v2159
  %v2164 = vadd.f32 %v2148, %v2160
  %v2165 = vadd.f32 %v2149, %v2161
  %v2166 = vadd.f32 %v2150, %v2162
  %v2167 = vadd.f32 %v2151, %v2163
  %v2168 = vld [vmem:[%s245] sm:$0xff]
  %v2169 = vld [vmem:[%s245 + $0x8] sm:$0xff]
  %v2170 = vld [vmem:[%s245 + $0x10] sm:$0xff]
  %v2171 = vld [vmem:[%s245 + $0x18] sm:$0xff]
  %v2172 = vlaneseq
  %v2173 = vshrl.u32 %v2172, 7
  %v2174 = vsub.s32 2, %v2173
  %v2175 = vrot.slane %v2135, %v2174
  %v2176 = vmul.f32 %v2168, %v2175
  %v2177 = vmul.f32 %v2169, %v2175
  %v2178 = vmul.f32 %v2170, %v2175
  %v2179 = vmul.f32 %v2171, %v2175
  %v2180 = vadd.f32 %v2164, %v2176
  %v2181 = vadd.f32 %v2165, %v2177
  %v2182 = vadd.f32 %v2166, %v2178
  %v2183 = vadd.f32 %v2167, %v2179
  %v2184 = vld [vmem:[%s262] sm:$0xff]
  %v2185 = vld [vmem:[%s262 + $0x8] sm:$0xff]
  %v2186 = vld [vmem:[%s262 + $0x10] sm:$0xff]
  %v2187 = vld [vmem:[%s262 + $0x18] sm:$0xff]
  %v2188 = vlaneseq
  %v2189 = vshrl.u32 %v2188, 7
  %v2190 = vsub.s32 3, %v2189
  %v2191 = vrot.slane %v2135, %v2190
  %v2192 = vmul.f32 %v2184, %v2191
  %v2193 = vmul.f32 %v2185, %v2191
  %v2194 = vmul.f32 %v2186, %v2191
  %v2195 = vmul.f32 %v2187, %v2191
  %v2196 = vadd.f32 %v2180, %v2192
  %v2197 = vadd.f32 %v2181, %v2193
  %v2198 = vadd.f32 %v2182, %v2194
  %v2199 = vadd.f32 %v2183, %v2195
  %v2200 = vld [vmem:[%s279] sm:$0xff]
  %v2201 = vld [vmem:[%s279 + $0x8] sm:$0xff]
  %v2202 = vld [vmem:[%s279 + $0x10] sm:$0xff]
  %v2203 = vld [vmem:[%s279 + $0x18] sm:$0xff]
  %v2204 = vlaneseq
  %v2205 = vshrl.u32 %v2204, 7
  %v2206 = vsub.s32 4, %v2205
  %v2207 = vrot.slane %v2135, %v2206
  %v2208 = vmul.f32 %v2200, %v2207
  %v2209 = vmul.f32 %v2201, %v2207
  %v2210 = vmul.f32 %v2202, %v2207
  %v2211 = vmul.f32 %v2203, %v2207
  %v2212 = vadd.f32 %v2196, %v2208
  %v2213 = vadd.f32 %v2197, %v2209
  %v2214 = vadd.f32 %v2198, %v2210
  %v2215 = vadd.f32 %v2199, %v2211
  %v2216 = vld [vmem:[%s296] sm:$0xff]
  %v2217 = vld [vmem:[%s296 + $0x8] sm:$0xff]
  %v2218 = vld [vmem:[%s296 + $0x10] sm:$0xff]
  %v2219 = vld [vmem:[%s296 + $0x18] sm:$0xff]
  %v2220 = vlaneseq
  %v2221 = vshrl.u32 %v2220, 7
  %v2222 = vsub.s32 5, %v2221
  %v2223 = vrot.slane %v2135, %v2222
  %v2224 = vmul.f32 %v2216, %v2223
  %v2225 = vmul.f32 %v2217, %v2223
  %v2226 = vmul.f32 %v2218, %v2223
  %v2227 = vmul.f32 %v2219, %v2223
  %v2228 = vadd.f32 %v2212, %v2224
  %v2229 = vadd.f32 %v2213, %v2225
  %v2230 = vadd.f32 %v2214, %v2226
  %v2231 = vadd.f32 %v2215, %v2227
  %v2232 = vld [vmem:[%s313] sm:$0xff]
  %v2233 = vld [vmem:[%s313 + $0x8] sm:$0xff]
  %v2234 = vld [vmem:[%s313 + $0x10] sm:$0xff]
  %v2235 = vld [vmem:[%s313 + $0x18] sm:$0xff]
  %v2236 = vlaneseq
  %v2237 = vshrl.u32 %v2236, 7
  %v2238 = vsub.s32 6, %v2237
  %v2239 = vrot.slane %v2135, %v2238
  %v2240 = vmul.f32 %v2232, %v2239
  %v2241 = vmul.f32 %v2233, %v2239
  %v2242 = vmul.f32 %v2234, %v2239
  %v2243 = vmul.f32 %v2235, %v2239
  %v2244 = vadd.f32 %v2228, %v2240
  %v2245 = vadd.f32 %v2229, %v2241
  %v2246 = vadd.f32 %v2230, %v2242
  %v2247 = vadd.f32 %v2231, %v2243
  %v2248 = vld [vmem:[%s330] sm:$0xff]
  %v2249 = vld [vmem:[%s330 + $0x8] sm:$0xff]
  %v2250 = vld [vmem:[%s330 + $0x10] sm:$0xff]
  %v2251 = vld [vmem:[%s330 + $0x18] sm:$0xff]
  %v2252 = vlaneseq
  %v2253 = vshrl.u32 %v2252, 7
  %v2254 = vsub.s32 7, %v2253
  %v2255 = vrot.slane %v2135, %v2254
  %v2256 = vmul.f32 %v2248, %v2255
  %v2257 = vmul.f32 %v2249, %v2255
  %v2258 = vmul.f32 %v2250, %v2255
  %v2259 = vmul.f32 %v2251, %v2255
  %v2260 = vadd.f32 %v2244, %v2256
  %v2261 = vadd.f32 %v2245, %v2257
  %v2262 = vadd.f32 %v2246, %v2258
  %v2263 = vadd.f32 %v2247, %v2259
  %s2264 = scalar_lea.vmem %s6, 16
  %2265 = vst [vmem:[%s2264] sm:$0xff] %v2135
  %s2266 = scalar_lea.vmem %s7, 64
  %2267 = vst [vmem:[%s2266] sm:$0xff] %v2260
  %2268 = vst [vmem:[%s2266 + $0x8] sm:$0xff] %v2261
  %2269 = vst [vmem:[%s2266 + $0x10] sm:$0xff] %v2262
  %2270 = vst [vmem:[%s2266 + $0x18] sm:$0xff] %v2263
  // Predicated region
  $region26: #{vlml_forward.1} parent=0 // pred_check
    _
  $region27: #{vlml_forward.1} parent=0 // pred_check_branch
    %2272 = sbr.rel (0) target = $region29
  $region28: #{vlml_forward.1} parent=0 // pred_region
    _
  $region29: #{vlml_forward.1} parent=0 // pred_fallthru
    _
  // Predicated region
  $region30: #{vlml_forward.1} parent=0 // pred_check
    _
  $region31: #{vlml_forward.1} parent=0 // pred_check_branch
    %2274 = sbr.rel (0) target = $region33
  $region32: #{vlml_forward.1} parent=0 // pred_region
    _
  $region33: #{vlml_forward.1} parent=0 // pred_fallthru
    _
  // Predicated region
  $region34: #{vlml_forward.1} parent=0 // pred_check
    _
  $region35: #{vlml_forward.1} parent=0 // pred_check_branch
    %2276 = sbr.rel (0) target = $region37
  $region36: #{vlml_forward.1} parent=0 // pred_region
    _
  $region37: #{vlml_forward.1} parent=0 // pred_fallthru
    _
  // Predicated region
  $region38: #{vlml_forward.1} parent=0 // pred_check
    _
  $region39: #{vlml_forward.1} parent=0 // pred_check_branch
    %2278 = sbr.rel (0) target = $region41
  $region40: #{vlml_forward.1} parent=0 // pred_region
    _
  $region41: #{vlml_forward.1} parent=0 // pred_fallthru
    _

// kernel: vlml_forward.1
$region0: #{vlml_forward.1}
  #allocation0 [shape = 'u32[]', space=smem, size = 0x4, offset = 0x4, fixed_abs, tag = 'smem constant byte address 0x4 - core index']
  #allocation1 [shape = 'u32[144,128]{1,0:T(1,128)}', space=vmem, size = 0x12000, scoped, tag = 'internal scratch']
  %s0 = inlined_call_operand.vmem [shape: f32[8,32,128], index: 0, kind: input, shape index: {}]
  %s1 = inlined_call_operand.vmem [shape: f32[8,32,128], index: 1, kind: input, shape index: {}]
  %s2 = inlined_call_operand.vmem [shape: f32[32,128], index: 2, kind: input, shape index: {}]
  %s3 = inlined_call_operand.vmem [shape: s32[1,128], index: 3, kind: input, shape index: {}]
  %s4 = inlined_call_operand.vmem [shape: f32[2,32,32], index: 4, kind: input, shape index: {}]
  %s5 = inlined_call_operand.vmem [shape: f32[2,32,1], index: 5, kind: input, shape index: {}]
  %s6 = inlined_call_operand.vmem [shape: f32[3,8,128], index: 6, kind: output, shape index: {0}]
  %s7 = inlined_call_operand.vmem [shape: f32[3,32,128], index: 7, kind: output, shape index: {1}]
  %8 = xla_tuple %s6, %s7
  %s9 = sld [smem:[#allocation0]]
  $region42: #{vlml_forward.1} parent=0
    _
  %s11 = ssub.s32 1, %s9
  %s12 = scalar_select 0, %s11, %s9
  // Predicated region
  $region2: #{vlml_forward.1} parent=0 // pred_check
    _
  $region3: #{vlml_forward.1} parent=0 // pred_check_branch
    %14 = sbr.rel (0) target = $region5
  $region4: #{vlml_forward.1} parent=0 // pred_region
    _
  $region5: #{vlml_forward.1} parent=0 // pred_fallthru
    _
  // Predicated region
  $region6: #{vlml_forward.1} parent=0 // pred_check
    _
  $region7: #{vlml_forward.1} parent=0 // pred_check_branch
    %16 = sbr.rel (0) target = $region9
  $region8: #{vlml_forward.1} parent=0 // pred_region
    _
  $region9: #{vlml_forward.1} parent=0 // pred_fallthru
    _
  // Predicated region
  $region10: #{vlml_forward.1} parent=0 // pred_check
    _
  $region11: #{vlml_forward.1} parent=0 // pred_check_branch
    %18 = sbr.rel (0) target = $region13
  $region12: #{vlml_forward.1} parent=0 // pred_region
    _
  $region13: #{vlml_forward.1} parent=0 // pred_fallthru
    _
  // Predicated region
  $region14: #{vlml_forward.1} parent=0 // pred_check
    _
  $region15: #{vlml_forward.1} parent=0 // pred_check_branch
    %20 = sbr.rel (0) target = $region17
  $region16: #{vlml_forward.1} parent=0 // pred_region
    _
  $region17: #{vlml_forward.1} parent=0 // pred_fallthru
    _
  // Predicated region
  $region18: #{vlml_forward.1} parent=0 // pred_check
    _
  $region19: #{vlml_forward.1} parent=0 // pred_check_branch
    %22 = sbr.rel (0) target = $region21
  $region20: #{vlml_forward.1} parent=0 // pred_region
    _
  $region21: #{vlml_forward.1} parent=0 // pred_fallthru
    _
  // Predicated region
  $region22: #{vlml_forward.1} parent=0 // pred_check
    _
  $region23: #{vlml_forward.1} parent=0 // pred_check_branch
    %24 = sbr.rel (0) target = $region25
  $region24: #{vlml_forward.1} parent=0 // pred_region
    _
  $region25: #{vlml_forward.1} parent=0 // pred_fallthru
    _
  %v25 = vlaneseq
  %v26 = vshrl.u32 %v25, 7
  %v27 = vld [vmem:[%s3] sm:$0x1]
  %v28 = vlaneseq
  %v29 = vshrl.u32 %v28, 7
  %v30 = vsub.s32 0, %v29
  %v31 = vrot.slane %v27, %v30
  %vm32 = vcmp.lt.s32.totalorder %v26, %v31
  %v33 = vld [vmem:[%s2] sm:$0xff]
  %v34 = vld [vmem:[%s2 + $0x8] sm:$0xff]
  %v35 = vld [vmem:[%s2 + $0x10] sm:$0xff]
  %v36 = vld [vmem:[%s2 + $0x18] sm:$0xff]
  %v37 = vld [vmem:[%s0] sm:$0xff]
  %v38 = vld [vmem:[%s0 + $0x8] sm:$0xff]
  %v39 = vld [vmem:[%s0 + $0x10] sm:$0xff]
  %v40 = vld [vmem:[%s0 + $0x18] sm:$0xff]
  %v41 = vmul.f32 %v37, %v33
  %v42 = vmul.f32 %v38, %v34
  %v43 = vmul.f32 %v39, %v35
  %v44 = vmul.f32 %v40, %v36
  %v45 = vadd.f32 %v41, %v42
  %v46 = vadd.f32 %v45, %v43
  %v47 = vadd.f32 %v46, %v44
  %v48 = vrot.slane %v47, 4
  %v49 = vadd.f32 %v47, %v48
  %v50 = vrot.slane %v49, 2
  %v51 = vadd.f32 %v49, %v50
  %v52 = vrot.slane %v51, 1
  %v53 = vadd.f32 %v51, %v52
  %s54 = scalar_lea.vmem %s0, 32
  %v55 = vld [vmem:[%s54] sm:$0xff]
  %v56 = vld [vmem:[%s54 + $0x8] sm:$0xff]
  %v57 = vld [vmem:[%s54 + $0x10] sm:$0xff]
  %v58 = vld [vmem:[%s54 + $0x18] sm:$0xff]
  %v59 = vmul.f32 %v55, %v33
  %v60 = vmul.f32 %v56, %v34
  %v61 = vmul.f32 %v57, %v35
  %v62 = vmul.f32 %v58, %v36
  %v63 = vadd.f32 %v59, %v60
  %v64 = vadd.f32 %v63, %v61
  %v65 = vadd.f32 %v64, %v62
  %v66 = vrot.slane %v65, 4
  %v67 = vadd.f32 %v65, %v66
  %v68 = vrot.slane %v67, 2
  %v69 = vadd.f32 %v67, %v68
  %v70 = vrot.slane %v69, 1
  %v71 = vadd.f32 %v69, %v70
  %s72 = scalar_lea.vmem %s0, 64
  %v73 = vld [vmem:[%s72] sm:$0xff]
  %v74 = vld [vmem:[%s72 + $0x8] sm:$0xff]
  %v75 = vld [vmem:[%s72 + $0x10] sm:$0xff]
  %v76 = vld [vmem:[%s72 + $0x18] sm:$0xff]
  %v77 = vmul.f32 %v73, %v33
  %v78 = vmul.f32 %v74, %v34
  %v79 = vmul.f32 %v75, %v35
  %v80 = vmul.f32 %v76, %v36
  %v81 = vadd.f32 %v77, %v78
  %v82 = vadd.f32 %v81, %v79
  %v83 = vadd.f32 %v82, %v80
  %v84 = vrot.slane %v83, 4
  %v85 = vadd.f32 %v83, %v84
  %v86 = vrot.slane %v85, 2
  %v87 = vadd.f32 %v85, %v86
  %v88 = vrot.slane %v87, 1
  %v89 = vadd.f32 %v87, %v88
  %s90 = scalar_lea.vmem %s0, 96
  %v91 = vld [vmem:[%s90] sm:$0xff]
  %v92 = vld [vmem:[%s90 + $0x8] sm:$0xff]
  %v93 = vld [vmem:[%s90 + $0x10] sm:$0xff]
  %v94 = vld [vmem:[%s90 + $0x18] sm:$0xff]
  %v95 = vmul.f32 %v91, %v33
  %v96 = vmul.f32 %v92, %v34
  %v97 = vmul.f32 %v93, %v35
  %v98 = vmul.f32 %v94, %v36
  %v99 = vadd.f32 %v95, %v96
  %v100 = vadd.f32 %v99, %v97
  %v101 = vadd.f32 %v100, %v98
  %v102 = vrot.slane %v101, 4
  %v103 = vadd.f32 %v101, %v102
  %v104 = vrot.slane %v103, 2
  %v105 = vadd.f32 %v103, %v104
  %v106 = vrot.slane %v105, 1
  %v107 = vadd.f32 %v105, %v106
  %s108 = scalar_lea.vmem %s0, 128
  %v109 = vld [vmem:[%s108] sm:$0xff]
  %v110 = vld [vmem:[%s108 + $0x8] sm:$0xff]
  %v111 = vld [vmem:[%s108 + $0x10] sm:$0xff]
  %v112 = vld [vmem:[%s108 + $0x18] sm:$0xff]
  %v113 = vmul.f32 %v109, %v33
  %v114 = vmul.f32 %v110, %v34
  %v115 = vmul.f32 %v111, %v35
  %v116 = vmul.f32 %v112, %v36
  %v117 = vadd.f32 %v113, %v114
  %v118 = vadd.f32 %v117, %v115
  %v119 = vadd.f32 %v118, %v116
  %v120 = vrot.slane %v119, 4
  %v121 = vadd.f32 %v119, %v120
  %v122 = vrot.slane %v121, 2
  %v123 = vadd.f32 %v121, %v122
  %v124 = vrot.slane %v123, 1
  %v125 = vadd.f32 %v123, %v124
  %s126 = scalar_lea.vmem %s0, 160
  %v127 = vld [vmem:[%s126] sm:$0xff]
  %v128 = vld [vmem:[%s126 + $0x8] sm:$0xff]
  %v129 = vld [vmem:[%s126 + $0x10] sm:$0xff]
  %v130 = vld [vmem:[%s126 + $0x18] sm:$0xff]
  %v131 = vmul.f32 %v127, %v33
  %v132 = vmul.f32 %v128, %v34
  %v133 = vmul.f32 %v129, %v35
  %v134 = vmul.f32 %v130, %v36
  %v135 = vadd.f32 %v131, %v132
  %v136 = vadd.f32 %v135, %v133
  %v137 = vadd.f32 %v136, %v134
  %v138 = vrot.slane %v137, 4
  %v139 = vadd.f32 %v137, %v138
  %v140 = vrot.slane %v139, 2
  %v141 = vadd.f32 %v139, %v140
  %v142 = vrot.slane %v141, 1
  %v143 = vadd.f32 %v141, %v142
  %s144 = scalar_lea.vmem %s0, 192
  %v145 = vld [vmem:[%s144] sm:$0xff]
  %v146 = vld [vmem:[%s144 + $0x8] sm:$0xff]
  %v147 = vld [vmem:[%s144 + $0x10] sm:$0xff]
  %v148 = vld [vmem:[%s144 + $0x18] sm:$0xff]
  %v149 = vmul.f32 %v145, %v33
  %v150 = vmul.f32 %v146, %v34
  %v151 = vmul.f32 %v147, %v35
  %v152 = vmul.f32 %v148, %v36
  %v153 = vadd.f32 %v149, %v150
  %v154 = vadd.f32 %v153, %v151
  %v155 = vadd.f32 %v154, %v152
  %v156 = vrot.slane %v155, 4
  %v157 = vadd.f32 %v155, %v156
  %v158 = vrot.slane %v157, 2
  %v159 = vadd.f32 %v157, %v158
  %v160 = vrot.slane %v159, 1
  %v161 = vadd.f32 %v159, %v160
  %s162 = scalar_lea.vmem %s0, 224
  %v163 = vld [vmem:[%s162] sm:$0xff]
  %v164 = vld [vmem:[%s162 + $0x8] sm:$0xff]
  %v165 = vld [vmem:[%s162 + $0x10] sm:$0xff]
  %v166 = vld [vmem:[%s162 + $0x18] sm:$0xff]
  %v167 = vmul.f32 %v163, %v33
  %v168 = vmul.f32 %v164, %v34
  %v169 = vmul.f32 %v165, %v35
  %v170 = vmul.f32 %v166, %v36
  %v171 = vadd.f32 %v167, %v168
  %v172 = vadd.f32 %v171, %v169
  %v173 = vadd.f32 %v172, %v170
  %v174 = vrot.slane %v173, 4
  %v175 = vadd.f32 %v173, %v174
  %v176 = vrot.slane %v175, 2
  %v177 = vadd.f32 %v175, %v176
  %v178 = vrot.slane %v177, 1
  %v179 = vadd.f32 %v177, %v178
  %vm180 = vcmask 1040384
  %v181 = vsel %vm180, %v53, %v71
  %vm182 = vcmask 1041408
  %v183 = vsel %vm182, %v181, %v89
  %vm184 = vcmask 1042432
  %v185 = vsel %vm184, %v183, %v107
  %vm186 = vcmask 1043456
  %v187 = vsel %vm186, %v185, %v125
  %vm188 = vcmask 1044480
  %v189 = vsel %vm188, %v187, %v143
  %vm190 = vcmask 1045504
  %v191 = vsel %vm190, %v189, %v161
  %vm192 = vcmask 1046528
  %v193 = vsel %vm192, %v191, %v179
  %v194 = vsel %vm32, %v193, -3.4028235e+38
  %v195 = vrot.slane %v194, 4
  %v196 = vmax.f32 %v194, %v195
  %v197 = vrot.slane %v196, 2
  %v198 = vmax.f32 %v196, %v197
  %v199 = vrot.slane %v198, 1
  %v200 = vmax.f32 %v198, %v199
  %v201 = vsub.f32 %v194, %v200
  %v202 = vmul.f32 %v201, 1.442695
  %v203 = vpow.pop %v202
  %v204 = vrot.slane %v203, 4
  %v205 = vadd.f32 %v203, %v204
  %v206 = vrot.slane %v205, 2
  %v207 = vadd.f32 %v205, %v206
  %v208 = vrot.slane %v207, 1
  %v209 = vadd.f32 %v207, %v208
  %v210 = vrcp.pop %v209
  %v211 = vmul.f32 %v203, %v210
  %v212 = vld [vmem:[%s1] sm:$0xff]
  %v213 = vld [vmem:[%s1 + $0x8] sm:$0xff]
  %v214 = vld [vmem:[%s1 + $0x10] sm:$0xff]
  %v215 = vld [vmem:[%s1 + $0x18] sm:$0xff]
  %v216 = vlaneseq
  %v217 = vshrl.u32 %v216, 7
  %v218 = vsub.s32 0, %v217
  %v219 = vrot.slane %v211, %v218
  %v220 = vmul.f32 %v212, %v219
  %v221 = vmul.f32 %v213, %v219
  %v222 = vmul.f32 %v214, %v219
  %v223 = vmul.f32 %v215, %v219
  %v224 = vadd.f32 %v220, 0.0
  %v225 = vadd.f32 %v221, 0.0
  %v226 = vadd.f32 %v222, 0.0
  %v227 = vadd.f32 %v223, 0.0
  %s228 = scalar_lea.vmem %s1, 32
  %v229 = vld [vmem:[%s228] sm:$0xff]
  %v230 = vld [vmem:[%s228 + $0x8] sm:$0xff]
  %v231 = vld [vmem:[%s228 + $0x10] sm:$0xff]
  %v232 = vld [vmem:[%s228 + $0x18] sm:$0xff]
  %v233 = vlaneseq
  %v234 = vshrl.u32 %v233, 7
  %v235 = vsub.s32 1, %v234
  %v236 = vrot.slane %v211, %v235
  %v237 = vmul.f32 %v229, %v236
  %v238 = vmul.f32 %v230, %v236
  %v239 = vmul.f32 %v231, %v236
  %v240 = vmul.f32 %v232, %v236
  %v241 = vadd.f32 %v224, %v237
  %v242 = vadd.f32 %v225, %v238
  %v243 = vadd.f32 %v226, %v239
  %v244 = vadd.f32 %v227, %v240
  %s245 = scalar_lea.vmem %s1, 64
  %v246 = vld [vmem:[%s245] sm:$0xff]
  %v247 = vld [vmem:[%s245 + $0x8] sm:$0xff]
  %v248 = vld [vmem:[%s245 + $0x10] sm:$0xff]
  %v249 = vld [vmem:[%s245 + $0x18] sm:$0xff]
  %v250 = vlaneseq
  %v251 = vshrl.u32 %v250, 7
  %v252 = vsub.s32 2, %v251
  %v253 = vrot.slane %v211, %v252
  %v254 = vmul.f32 %v246, %v253
  %v255 = vmul.f32 %v247, %v253
  %v256 = vmul.f32 %v248, %v253
  %v257 = vmul.f32 %v249, %v253
  %v258 = vadd.f32 %v241, %v254
  %v259 = vadd.f32 %v242, %v255
  %v260 = vadd.f32 %v243, %v256
  %v261 = vadd.f32 %v244, %v257
  %s262 = scalar_lea.vmem %s1, 96
  %v263 = vld [vmem:[%s262] sm:$0xff]
  %v264 = vld [vmem:[%s262 + $0x8] sm:$0xff]
  %v265 = vld [vmem:[%s262 + $0x10] sm:$0xff]
  %v266 = vld [vmem:[%s262 + $0x18] sm:$0xff]
  %v267 = vlaneseq
  %v268 = vshrl.u32 %v267, 7
  %v269 = vsub.s32 3, %v268
  %v270 = vrot.slane %v211, %v269
  %v271 = vmul.f32 %v263, %v270
  %v272 = vmul.f32 %v264, %v270
  %v273 = vmul.f32 %v265, %v270
  %v274 = vmul.f32 %v266, %v270
  %v275 = vadd.f32 %v258, %v271
  %v276 = vadd.f32 %v259, %v272
  %v277 = vadd.f32 %v260, %v273
  %v278 = vadd.f32 %v261, %v274
  %s279 = scalar_lea.vmem %s1, 128
  %v280 = vld [vmem:[%s279] sm:$0xff]
  %v281 = vld [vmem:[%s279 + $0x8] sm:$0xff]
  %v282 = vld [vmem:[%s279 + $0x10] sm:$0xff]
  %v283 = vld [vmem:[%s279 + $0x18] sm:$0xff]
  %v284 = vlaneseq
  %v285 = vshrl.u32 %v284, 7
  %v286 = vsub.s32 4, %v285
  %v287 = vrot.slane %v211, %v286
  %v288 = vmul.f32 %v280, %v287
  %v289 = vmul.f32 %v281, %v287
  %v290 = vmul.f32 %v282, %v287
  %v291 = vmul.f32 %v283, %v287
  %v292 = vadd.f32 %v275, %v288
  %v293 = vadd.f32 %v276, %v289
  %v294 = vadd.f32 %v277, %v290
  %v295 = vadd.f32 %v278, %v291
  %s296 = scalar_lea.vmem %s1, 160
  %v297 = vld [vmem:[%s296] sm:$0xff]
  %v298 = vld [vmem:[%s296 + $0x8] sm:$0xff]
  %v299 = vld [vmem:[%s296 + $0x10] sm:$0xff]
  %v300 = vld [vmem:[%s296 + $0x18] sm:$0xff]
  %v301 = vlaneseq
  %v302 = vshrl.u32 %v301, 7
  %v303 = vsub.s32 5, %v302
  %v304 = vrot.slane %v211, %v303
  %v305 = vmul.f32 %v297, %v304
  %v306 = vmul.f32 %v298, %v304
  %v307 = vmul.f32 %v299, %v304
  %v308 = vmul.f32 %v300, %v304
  %v309 = vadd.f32 %v292, %v305
  %v310 = vadd.f32 %v293, %v306
  %v311 = vadd.f32 %v294, %v307
  %v312 = vadd.f32 %v295, %v308
  %s313 = scalar_lea.vmem %s1, 192
  %v314 = vld [vmem:[%s313] sm:$0xff]
  %v315 = vld [vmem:[%s313 + $0x8] sm:$0xff]
  %v316 = vld [vmem:[%s313 + $0x10] sm:$0xff]
  %v317 = vld [vmem:[%s313 + $0x18] sm:$0xff]
  %v318 = vlaneseq
  %v319 = vshrl.u32 %v318, 7
  %v320 = vsub.s32 6, %v319
  %v321 = vrot.slane %v211, %v320
  %v322 = vmul.f32 %v314, %v321
  %v323 = vmul.f32 %v315, %v321
  %v324 = vmul.f32 %v316, %v321
  %v325 = vmul.f32 %v317, %v321
  %v326 = vadd.f32 %v309, %v322
  %v327 = vadd.f32 %v310, %v323
  %v328 = vadd.f32 %v311, %v324
  %v329 = vadd.f32 %v312, %v325
  %s330 = scalar_lea.vmem %s1, 224
  %v331 = vld [vmem:[%s330] sm:$0xff]
  %v332 = vld [vmem:[%s330 + $0x8] sm:$0xff]
  %v333 = vld [vmem:[%s330 + $0x10] sm:$0xff]
  %v334 = vld [vmem:[%s330 + $0x18] sm:$0xff]
  %v335 = vlaneseq
  %v336 = vshrl.u32 %v335, 7
  %v337 = vsub.s32 7, %v336
  %v338 = vrot.slane %v211, %v337
  %v339 = vmul.f32 %v331, %v338
  %v340 = vmul.f32 %v332, %v338
  %v341 = vmul.f32 %v333, %v338
  %v342 = vmul.f32 %v334, %v338
  %v343 = vadd.f32 %v326, %v339
  %v344 = vadd.f32 %v327, %v340
  %v345 = vadd.f32 %v328, %v341
  %v346 = vadd.f32 %v329, %v342
  %347 = vst [vmem:[%s6] sm:$0xff] %v211
  %348 = vst [vmem:[%s7] sm:$0xff] %v343
  %349 = vst [vmem:[%s7 + $0x8] sm:$0xff] %v344
  %350 = vst [vmem:[%s7 + $0x10] sm:$0xff] %v345
  %351 = vst [vmem:[%s7 + $0x18] sm:$0xff] %v346
  %v352 = vld [vmem:[%s4] sm:$0xff]
  %v353 = vld [vmem:[%s4 + $0x8] sm:$0xff]
  %v354 = vld [vmem:[%s4 + $0x10] sm:$0xff]
  %v355 = vld [vmem:[%s4 + $0x18] sm:$0xff]
  %v356 = vld [vmem:[%s5] sm:$0xff]
  %v357 = vld [vmem:[%s5 + $0x8] sm:$0xff]
  %v358 = vld [vmem:[%s5 + $0x10] sm:$0xff]
  %v359 = vld [vmem:[%s5 + $0x18] sm:$0xff]
  %361 = vset.pattern.permute.xlu0 0
  %362 = vperm.xlu0 %361, %v356
  %v363 = vpop.permute.xlu0 %362
  %366 = vset.pattern.permute.xlu0 0
  %367 = vperm.xlu0 %366, %v357
  %v368 = vpop.permute.xlu0 %367
  %371 = vset.pattern.permute.xlu0 0
  %372 = vperm.xlu0 %371, %v358
  %v373 = vpop.permute.xlu0 %372
  %376 = vset.pattern.permute.xlu0 0
  %377 = vperm.xlu0 %376, %v359
  %v378 = vpop.permute.xlu0 %377
  %vm380 = vcmask 261120
  %v382 = vsel %vm380, %v352, 0
  %v385 = vsel %vm380, %v353, 0
  %v388 = vsel %vm380, %v354, 0
  %v391 = vsel %vm380, %v355, 0
  %393 = vmatprep.subr.mxu0 0.0
  %394 = vmatpush1.msra.mxu0 0.0
  %395 = vmatprep.subr.mxu0 0.0
  %396 = vmatpush1.msra.mxu0 0.0
  %397 = vmatprep.subr.mxu0 0.0
  %398 = vmatpush1.msra.mxu0 0.0
  %399 = vmatprep.subr.mxu0 0.0
  %400 = vmatpush1.msra.mxu0 0.0
  %401 = vmatprep.subr.mxu0 0.0
  %402 = vmatpush1.msra.mxu0 0.0
  %403 = vmatprep.subr.mxu0 0.0
  %404 = vmatpush1.msra.mxu0 0.0
  %405 = vmatprep.subr.mxu0 0.0
  %406 = vmatpush1.msra.mxu0 0.0
  %407 = vmatprep.subr.mxu0 0.0
  %408 = vmatpush1.msra.mxu0 0.0
  %409 = vmatprep.subr.mxu0 0.0
  %410 = vmatpush1.msra.mxu0 0.0
  %411 = vmatprep.subr.mxu0 0.0
  %412 = vmatpush1.msra.mxu0 0.0
  %413 = vmatprep.subr.mxu0 0.0
  %414 = vmatpush1.msra.mxu0 0.0
  %415 = vmatprep.subr.mxu0 0.0
  %416 = vmatpush1.msra.mxu0 0.0
  %417 = vmatprep.subr.mxu0 0.0
  %418 = vmatpush1.msra.mxu0 %v36
  %419 = vmatprep.subr.mxu0 0.0
  %420 = vmatpush1.msra.mxu0 %v35
  %421 = vmatprep.subr.mxu0 0.0
  %422 = vmatpush1.msra.mxu0 %v34
  %423 = vmatprep.subr.mxu0 0.0
  %424 = vmatpush1.msra.mxu0 %v33
  %425 = vmatprep.subr.mxu0 0.0
  %426 = vmatpush2.msra.mxu0 0.0
  %427 = vmatprep.subr.mxu0 0.0
  %428 = vmatpush2.msra.mxu0 0.0
  %429 = vmatprep.subr.mxu0 0.0
  %430 = vmatpush2.msra.mxu0 0.0
  %431 = vmatprep.subr.mxu0 0.0
  %432 = vmatpush2.msra.mxu0 0.0
  %433 = vmatprep.subr.mxu0 0.0
  %434 = vmatpush2.msra.mxu0 0.0
  %435 = vmatprep.subr.mxu0 0.0
  %436 = vmatpush2.msra.mxu0 0.0
  %437 = vmatprep.subr.mxu0 0.0
  %438 = vmatpush2.msra.mxu0 0.0
  %439 = vmatprep.subr.mxu0 0.0
  %440 = vmatpush2.msra.mxu0 0.0
  %441 = vmatprep.subr.mxu0 0.0
  %442 = vmatpush2.msra.mxu0 0.0
  %443 = vmatprep.subr.mxu0 0.0
  %444 = vmatpush2.msra.mxu0 0.0
  %445 = vmatprep.subr.mxu0 0.0
  %446 = vmatpush2.msra.mxu0 0.0
  %447 = vmatprep.subr.mxu0 0.0
  %448 = vmatpush2.msra.mxu0 0.0
  %449 = vmatprep.subr.mxu0 0.0
  %450 = vmatpush2.msra.mxu0 0.0
  %451 = vmatprep.subr.mxu0 0.0
  %452 = vmatpush2.msra.mxu0 0.0
  %453 = vmatprep.subr.mxu0 0.0
  %454 = vmatpush2.msra.mxu0 0.0
  %455 = vmatprep.subr.mxu0 0.0
  %456 = vmatpush2.msra.mxu0 0.0
  %457 = vmatprep.mubr.f32.mxu0 0.0
  %458 = vmatmul.mubr.f32.gmra.mxu0 %v382
  %v459 = vpop.f32.mrf.mxu0
  %v460 = vadd.f32 %v363, %v459
  %v461 = vpop.f32.mrf.mxu0
  %462 = vmatprep.mubr.f32.mxu0 0.0
  %463 = vmatmul.mubr.f32.gmra.mxu0 %v385
  %v464 = vpop.f32.mrf.mxu0
  %v465 = vadd.f32 %v368, %v464
  %v466 = vpop.f32.mrf.mxu0
  %467 = vmatprep.mubr.f32.mxu0 0.0
  %468 = vmatmul.mubr.f32.gmra.mxu0 %v388
  %v469 = vpop.f32.mrf.mxu0
  %v470 = vadd.f32 %v373, %v469
  %v471 = vpop.f32.mrf.mxu0
  %472 = vmatprep.mubr.f32.mxu0 0.0
  %473 = vmatmul.mubr.f32.gmra.mxu0 %v391
  %v474 = vpop.f32.mrf.mxu0
  %v475 = vadd.f32 %v378, %v474
  %v476 = vpop.f32.mrf.mxu0
  %477 = vdwg.mxu0
  %v478 = vadd.f32 %v460, %v343
  %v479 = vadd.f32 %v465, %v344
  %v480 = vadd.f32 %v470, %v345
  %v481 = vadd.f32 %v475, %v346
  %v482 = vmax.f32 %v478, 0.0
  %v483 = vmax.f32 %v479, 0.0
  %v484 = vmax.f32 %v480, 0.0
  %v485 = vmax.f32 %v481, 0.0
  %v486 = vld [vmem:[%s0] sm:$0xff]
  %v487 = vld [vmem:[%s0 + $0x8] sm:$0xff]
  %v488 = vld [vmem:[%s0 + $0x10] sm:$0xff]
  %v489 = vld [vmem:[%s0 + $0x18] sm:$0xff]
  %v490 = vmul.f32 %v486, %v482
  %v491 = vmul.f32 %v487, %v483
  %v492 = vmul.f32 %v488, %v484
  %v493 = vmul.f32 %v489, %v485
  %v494 = vadd.f32 %v490, %v491
  %v495 = vadd.f32 %v494, %v492
  %v496 = vadd.f32 %v495, %v493
  %v497 = vrot.slane %v496, 4
  %v498 = vadd.f32 %v496, %v497
  %v499 = vrot.slane %v498, 2
  %v500 = vadd.f32 %v498, %v499
  %v501 = vrot.slane %v500, 1
  %v502 = vadd.f32 %v500, %v501
  %v503 = vld [vmem:[%s54] sm:$0xff]
  %v504 = vld [vmem:[%s54 + $0x8] sm:$0xff]
  %v505 = vld [vmem:[%s54 + $0x10] sm:$0xff]
  %v506 = vld [vmem:[%s54 + $0x18] sm:$0xff]
  %v507 = vmul.f32 %v503, %v482
  %v508 = vmul.f32 %v504, %v483
  %v509 = vmul.f32 %v505, %v484
  %v510 = vmul.f32 %v506, %v485
  %v511 = vadd.f32 %v507, %v508
  %v512 = vadd.f32 %v511, %v509
  %v513 = vadd.f32 %v512, %v510
  %v514 = vrot.slane %v513, 4
  %v515 = vadd.f32 %v513, %v514
  %v516 = vrot.slane %v515, 2
  %v517 = vadd.f32 %v515, %v516
  %v518 = vrot.slane %v517, 1
  %v519 = vadd.f32 %v517, %v518
  %v520 = vld [vmem:[%s72] sm:$0xff]
  %v521 = vld [vmem:[%s72 + $0x8] sm:$0xff]
  %v522 = vld [vmem:[%s72 + $0x10] sm:$0xff]
  %v523 = vld [vmem:[%s72 + $0x18] sm:$0xff]
  %v524 = vmul.f32 %v520, %v482
  %v525 = vmul.f32 %v521, %v483
  %v526 = vmul.f32 %v522, %v484
  %v527 = vmul.f32 %v523, %v485
  %v528 = vadd.f32 %v524, %v525
  %v529 = vadd.f32 %v528, %v526
  %v530 = vadd.f32 %v529, %v527
  %v531 = vrot.slane %v530, 4
  %v532 = vadd.f32 %v530, %v531
  %v533 = vrot.slane %v532, 2
  %v534 = vadd.f32 %v532, %v533
  %v535 = vrot.slane %v534, 1
  %v536 = vadd.f32 %v534, %v535
  %v537 = vld [vmem:[%s90] sm:$0xff]
  %v538 = vld [vmem:[%s90 + $0x8] sm:$0xff]
  %v539 = vld [vmem:[%s90 + $0x10] sm:$0xff]
  %v540 = vld [vmem:[%s90 + $0x18] sm:$0xff]
  %v541 = vmul.f32 %v537, %v482
  %v542 = vmul.f32 %v538, %v483
  %v543 = vmul.f32 %v539, %v484
  %v544 = vmul.f32 %v540, %v485
  %v545 = vadd.f32 %v541, %v542
  %v546 = vadd.f32 %v545, %v543
  %v547 = vadd.f32 %v546, %v544
  %v548 = vrot.slane %v547, 4
  %v549 = vadd.f32 %v547, %v548
  %v550 = vrot.slane %v549, 2
  %v551 = vadd.f32 %v549, %v550
  %v552 = vrot.slane %v551, 1
  %v553 = vadd.f32 %v551, %v552
  %v554 = vld [vmem:[%s108] sm:$0xff]
  %v555 = vld [vmem:[%s108 + $0x8] sm:$0xff]
  %v556 = vld [vmem:[%s108 + $0x10] sm:$0xff]
  %v557 = vld [vmem:[%s108 + $0x18] sm:$0xff]
  %v558 = vmul.f32 %v554, %v482
  %v559 = vmul.f32 %v555, %v483
  %v560 = vmul.f32 %v556, %v484
  %v561 = vmul.f32 %v557, %v485
  %v562 = vadd.f32 %v558, %v559
  %v563 = vadd.f32 %v562, %v560
  %v564 = vadd.f32 %v563, %v561
  %v565 = vrot.slane %v564, 4
  %v566 = vadd.f32 %v564, %v565
  %v567 = vrot.slane %v566, 2
  %v568 = vadd.f32 %v566, %v567
  %v569 = vrot.slane %v568, 1
  %v570 = vadd.f32 %v568, %v569
  %v571 = vld [vmem:[%s126] sm:$0xff]
  %v572 = vld [vmem:[%s126 + $0x8] sm:$0xff]
  %v573 = vld [vmem:[%s126 + $0x10] sm:$0xff]
  %v574 = vld [vmem:[%s126 + $0x18] sm:$0xff]
  %v575 = vmul.f32 %v571, %v482
  %v576 = vmul.f32 %v572, %v483
  %v577 = vmul.f32 %v573, %v484
  %v578 = vmul.f32 %v574, %v485
  %v579 = vadd.f32 %v575, %v576
  %v580 = vadd.f32 %v579, %v577
  %v581 = vadd.f32 %v580, %v578
  %v582 = vrot.slane %v581, 4
  %v583 = vadd.f32 %v581, %v582
  %v584 = vrot.slane %v583, 2
  %v585 = vadd.f32 %v583, %v584
  %v586 = vrot.slane %v585, 1
  %v587 = vadd.f32 %v585, %v586
  %v588 = vld [vmem:[%s144] sm:$0xff]
  %v589 = vld [vmem:[%s144 + $0x8] sm:$0xff]
  %v590 = vld [vmem:[%s144 + $0x10] sm:$0xff]
  %v591 = vld [vmem:[%s144 + $0x18] sm:$0xff]
  %v592 = vmul.f32 %v588, %v482
  %v593 = vmul.f32 %v589, %v483
  %v594 = vmul.f32 %v590, %v484
  %v595 = vmul.f32 %v591, %v485
  %v596 = vadd.f32 %v592, %v593
  %v597 = vadd.f32 %v596, %v594
  %v598 = vadd.f32 %v597, %v595
  %v599 = vrot.slane %v598, 4
  %v600 = vadd.f32 %v598, %v599
  %v601 = vrot.slane %v600, 2
  %v602 = vadd.f32 %v600, %v601
  %v603 = vrot.slane %v602, 1
  %v604 = vadd.f32 %v602, %v603
  %v605 = vld [vmem:[%s162] sm:$0xff]
  %v606 = vld [vmem:[%s162 + $0x8] sm:$0xff]
  %v607 = vld [vmem:[%s162 + $0x10] sm:$0xff]
  %v608 = vld [vmem:[%s162 + $0x18] sm:$0xff]
  %v609 = vmul.f32 %v605, %v482
  %v610 = vmul.f32 %v606, %v483
  %v611 = vmul.f32 %v607, %v484
  %v612 = vmul.f32 %v608, %v485
  %v613 = vadd.f32 %v609, %v610
  %v614 = vadd.f32 %v613, %v611
  %v615 = vadd.f32 %v614, %v612
  %v616 = vrot.slane %v615, 4
  %v617 = vadd.f32 %v615, %v616
  %v618 = vrot.slane %v617, 2
  %v619 = vadd.f32 %v617, %v618
  %v620 = vrot.slane %v619, 1
  %v621 = vadd.f32 %v619, %v620
  %v622 = vsel %vm180, %v502, %v519
  %v623 = vsel %vm182, %v622, %v536
  %v624 = vsel %vm184, %v623, %v553
  %v625 = vsel %vm186, %v624, %v570
  %v626 = vsel %vm188, %v625, %v587
  %v627 = vsel %vm190, %v626, %v604
  %v628 = vsel %vm192, %v627, %v621
  %v629 = vsel %vm32, %v628, -3.4028235e+38
  %v630 = vrot.slane %v629, 4
  %v631 = vmax.f32 %v629, %v630
  %v632 = vrot.slane %v631, 2
  %v633 = vmax.f32 %v631, %v632
  %v634 = vrot.slane %v633, 1
  %v635 = vmax.f32 %v633, %v634
  %v636 = vsub.f32 %v629, %v635
  %v637 = vmul.f32 %v636, 1.442695
  %v638 = vpow.pop %v637
  %v639 = vrot.slane %v638, 4
  %v640 = vadd.f32 %v638, %v639
  %v641 = vrot.slane %v640, 2
  %v642 = vadd.f32 %v640, %v641
  %v643 = vrot.slane %v642, 1
  %v644 = vadd.f32 %v642, %v643
  %v645 = vrcp.pop %v644
  %v646 = vmul.f32 %v638, %v645
  %v647 = vld [vmem:[%s1] sm:$0xff]
  %v648 = vld [vmem:[%s1 + $0x8] sm:$0xff]
  %v649 = vld [vmem:[%s1 + $0x10] sm:$0xff]
  %v650 = vld [vmem:[%s1 + $0x18] sm:$0xff]
  %v651 = vlaneseq
  %v652 = vshrl.u32 %v651, 7
  %v653 = vsub.s32 0, %v652
  %v654 = vrot.slane %v646, %v653
  %v655 = vmul.f32 %v647, %v654
  %v656 = vmul.f32 %v648, %v654
  %v657 = vmul.f32 %v649, %v654
  %v658 = vmul.f32 %v650, %v654
  %v659 = vadd.f32 %v655, 0.0
  %v660 = vadd.f32 %v656, 0.0
  %v661 = vadd.f32 %v657, 0.0
  %v662 = vadd.f32 %v658, 0.0
  %v663 = vld [vmem:[%s228] sm:$0xff]
  %v664 = vld [vmem:[%s228 + $0x8] sm:$0xff]
  %v665 = vld [vmem:[%s228 + $0x10] sm:$0xff]
  %v666 = vld [vmem:[%s228 + $0x18] sm:$0xff]
  %v667 = vlaneseq
  %v668 = vshrl.u32 %v667, 7
  %v669 = vsub.s32 1, %v668
  %v670 = vrot.slane %v646, %v669
  %v671 = vmul.f32 %v663, %v670
  %v672 = vmul.f32 %v664, %v670
  %v673 = vmul.f32 %v665, %v670
  %v674 = vmul.f32 %v666, %v670
  %v675 = vadd.f32 %v659, %v671
  %v676 = vadd.f32 %v660, %v672
  %v677 = vadd.f32 %v661, %v673
  %v678 = vadd.f32 %v662, %v674
  %v679 = vld [vmem:[%s245] sm:$0xff]
  %v680 = vld [vmem:[%s245 + $0x8] sm:$0xff]
  %v681 = vld [vmem:[%s245 + $0x10] sm:$0xff]
  %v682 = vld [vmem:[%s245 + $0x18] sm:$0xff]
  %v683 = vlaneseq
  %v684 = vshrl.u32 %v683, 7
  %v685 = vsub.s32 2, %v684
  %v686 = vrot.slane %v646, %v685
  %v687 = vmul.f32 %v679, %v686
  %v688 = vmul.f32 %v680, %v686
  %v689 = vmul.f32 %v681, %v686
  %v690 = vmul.f32 %v682, %v686
  %v691 = vadd.f32 %v675, %v687
  %v692 = vadd.f32 %v676, %v688
  %v693 = vadd.f32 %v677, %v689
  %v694 = vadd.f32 %v678, %v690
  %v695 = vld [vmem:[%s262] sm:$0xff]
  %v696 = vld [vmem:[%s262 + $0x8] sm:$0xff]
  %v697 = vld [vmem:[%s262 + $0x10] sm:$0xff]
  %v698 = vld [vmem:[%s262 + $0x18] sm:$0xff]
  %v699 = vlaneseq
  %v700 = vshrl.u32 %v699, 7
  %v701 = vsub.s32 3, %v700
  %v702 = vrot.slane %v646, %v701
  %v703 = vmul.f32 %v695, %v702
  %v704 = vmul.f32 %v696, %v702
  %v705 = vmul.f32 %v697, %v702
  %v706 = vmul.f32 %v698, %v702
  %v707 = vadd.f32 %v691, %v703
  %v708 = vadd.f32 %v692, %v704
  %v709 = vadd.f32 %v693, %v705
  %v710 = vadd.f32 %v694, %v706
  %v711 = vld [vmem:[%s279] sm:$0xff]
  %v712 = vld [vmem:[%s279 + $0x8] sm:$0xff]
  %v713 = vld [vmem:[%s279 + $0x10] sm:$0xff]
  %v714 = vld [vmem:[%s279 + $0x18] sm:$0xff]
  %v715 = vlaneseq
  %v716 = vshrl.u32 %v715, 7
  %v717 = vsub.s32 4, %v716
  %v718 = vrot.slane %v646, %v717
  %v719 = vmul.f32 %v711, %v718
  %v720 = vmul.f32 %v712, %v718
  %v721 = vmul.f32 %v713, %v718
  %v722 = vmul.f32 %v714, %v718
  %v723 = vadd.f32 %v707, %v719
  %v724 = vadd.f32 %v708, %v720
  %v725 = vadd.f32 %v709, %v721
  %v726 = vadd.f32 %v710, %v722
  %v727 = vld [vmem:[%s296] sm:$0xff]
  %v728 = vld [vmem:[%s296 + $0x8] sm:$0xff]
  %v729 = vld [vmem:[%s296 + $0x10] sm:$0xff]
  %v730 = vld [vmem:[%s296 + $0x18] sm:$0xff]
  %v731 = vlaneseq
  %v732 = vshrl.u32 %v731, 7
  %v733 = vsub.s32 5, %v732
  %v734 = vrot.slane %v646, %v733
  %v735 = vmul.f32 %v727, %v734
  %v736 = vmul.f32 %v728, %v734
  %v737 = vmul.f32 %v729, %v734
  %v738 = vmul.f32 %v730, %v734
  %v739 = vadd.f32 %v723, %v735
  %v740 = vadd.f32 %v724, %v736
  %v741 = vadd.f32 %v725, %v737
  %v742 = vadd.f32 %v726, %v738
  %v743 = vld [vmem:[%s313] sm:$0xff]
  %v744 = vld [vmem:[%s313 + $0x8] sm:$0xff]
  %v745 = vld [vmem:[%s313 + $0x10] sm:$0xff]
  %v746 = vld [vmem:[%s313 + $0x18] sm:$0xff]
  %v747 = vlaneseq
  %v748 = vshrl.u32 %v747, 7
  %v749 = vsub.s32 6, %v748
  %v750 = vrot.slane %v646, %v749
  %v751 = vmul.f32 %v743, %v750
  %v752 = vmul.f32 %v744, %v750
  %v753 = vmul.f32 %v745, %v750
  %v754 = vmul.f32 %v746, %v750
  %v755 = vadd.f32 %v739, %v751
  %v756 = vadd.f32 %v740, %v752
  %v757 = vadd.f32 %v741, %v753
  %v758 = vadd.f32 %v742, %v754
  %v759 = vld [vmem:[%s330] sm:$0xff]
  %v760 = vld [vmem:[%s330 + $0x8] sm:$0xff]
  %v761 = vld [vmem:[%s330 + $0x10] sm:$0xff]
  %v762 = vld [vmem:[%s330 + $0x18] sm:$0xff]
  %v763 = vlaneseq
  %v764 = vshrl.u32 %v763, 7
  %v765 = vsub.s32 7, %v764
  %v766 = vrot.slane %v646, %v765
  %v767 = vmul.f32 %v759, %v766
  %v768 = vmul.f32 %v760, %v766
  %v769 = vmul.f32 %v761, %v766
  %v770 = vmul.f32 %v762, %v766
  %v771 = vadd.f32 %v755, %v767
  %v772 = vadd.f32 %v756, %v768
  %v773 = vadd.f32 %v757, %v769
  %v774 = vadd.f32 %v758, %v770
  %s775 = scalar_lea.vmem %s6, 8
  %776 = vst [vmem:[%s775] sm:$0xff] %v646
  %s777 = scalar_lea.vmem %s7, 32
  %778 = vst [vmem:[%s777] sm:$0xff] %v771
  %779 = vst [vmem:[%s777 + $0x8] sm:$0xff] %v772
  %780 = vst [vmem:[%s777 + $0x10] sm:$0xff] %v773
  %781 = vst [vmem:[%s777 + $0x18] sm:$0xff] %v774
  %s782 = scalar_lea.vmem %s4, 32
  %v783 = vld [vmem:[%s782] sm:$0xff]
  %v784 = vld [vmem:[%s782 + $0x8] sm:$0xff]
  %v785 = vld [vmem:[%s782 + $0x10] sm:$0xff]
  %v786 = vld [vmem:[%s782 + $0x18] sm:$0xff]
  %s787 = scalar_lea.vmem %s5, 32
  %v788 = vld [vmem:[%s787] sm:$0xff]
  %v789 = vld [vmem:[%s787 + $0x8] sm:$0xff]
  %v790 = vld [vmem:[%s787 + $0x10] sm:$0xff]
  %v791 = vld [vmem:[%s787 + $0x18] sm:$0xff]
  %793 = vset.pattern.permute.xlu0 0
  %794 = vperm.xlu0 %793, %v788
  %v795 = vpop.permute.xlu0 %794
  %798 = vset.pattern.permute.xlu0 0
  %799 = vperm.xlu0 %798, %v789
  %v800 = vpop.permute.xlu0 %799
  %803 = vset.pattern.permute.xlu0 0
  %804 = vperm.xlu0 %803, %v790
  %v805 = vpop.permute.xlu0 %804
  %808 = vset.pattern.permute.xlu0 0
  %809 = vperm.xlu0 %808, %v791
  %v810 = vpop.permute.xlu0 %809
  %v813 = vsel %vm380, %v783, 0
  %v816 = vsel %vm380, %v784, 0
  %v819 = vsel %vm380, %v785, 0
  %v822 = vsel %vm380, %v786, 0
  %824 = vmatprep.subr.mxu0 0.0
  %825 = vmatpush1.msra.mxu0 0.0
  %826 = vmatprep.subr.mxu0 0.0
  %827 = vmatpush1.msra.mxu0 0.0
  %828 = vmatprep.subr.mxu0 0.0
  %829 = vmatpush1.msra.mxu0 0.0
  %830 = vmatprep.subr.mxu0 0.0
  %831 = vmatpush1.msra.mxu0 0.0
  %832 = vmatprep.subr.mxu0 0.0
  %833 = vmatpush1.msra.mxu0 0.0
  %834 = vmatprep.subr.mxu0 0.0
  %835 = vmatpush1.msra.mxu0 0.0
  %836 = vmatprep.subr.mxu0 0.0
  %837 = vmatpush1.msra.mxu0 0.0
  %838 = vmatprep.subr.mxu0 0.0
  %839 = vmatpush1.msra.mxu0 0.0
  %840 = vmatprep.subr.mxu0 0.0
  %841 = vmatpush1.msra.mxu0 0.0
  %842 = vmatprep.subr.mxu0 0.0
  %843 = vmatpush1.msra.mxu0 0.0
  %844 = vmatprep.subr.mxu0 0.0
  %845 = vmatpush1.msra.mxu0 0.0
  %846 = vmatprep.subr.mxu0 0.0
  %847 = vmatpush1.msra.mxu0 0.0
  %848 = vmatprep.subr.mxu0 0.0
  %849 = vmatpush1.msra.mxu0 %v485
  %850 = vmatprep.subr.mxu0 0.0
  %851 = vmatpush1.msra.mxu0 %v484
  %852 = vmatprep.subr.mxu0 0.0
  %853 = vmatpush1.msra.mxu0 %v483
  %854 = vmatprep.subr.mxu0 0.0
  %855 = vmatpush1.msra.mxu0 %v482
  %856 = vmatprep.subr.mxu0 0.0
  %857 = vmatpush2.msra.mxu0 0.0
  %858 = vmatprep.subr.mxu0 0.0
  %859 = vmatpush2.msra.mxu0 0.0
  %860 = vmatprep.subr.mxu0 0.0
  %861 = vmatpush2.msra.mxu0 0.0
  %862 = vmatprep.subr.mxu0 0.0
  %863 = vmatpush2.msra.mxu0 0.0
  %864 = vmatprep.subr.mxu0 0.0
  %865 = vmatpush2.msra.mxu0 0.0
  %866 = vmatprep.subr.mxu0 0.0
  %867 = vmatpush2.msra.mxu0 0.0
  %868 = vmatprep.subr.mxu0 0.0
  %869 = vmatpush2.msra.mxu0 0.0
  %870 = vmatprep.subr.mxu0 0.0
  %871 = vmatpush2.msra.mxu0 0.0
  %872 = vmatprep.subr.mxu0 0.0
  %873 = vmatpush2.msra.mxu0 0.0
  %874 = vmatprep.subr.mxu0 0.0
  %875 = vmatpush2.msra.mxu0 0.0
  %876 = vmatprep.subr.mxu0 0.0
  %877 = vmatpush2.msra.mxu0 0.0
  %878 = vmatprep.subr.mxu0 0.0
  %879 = vmatpush2.msra.mxu0 0.0
  %880 = vmatprep.subr.mxu0 0.0
  %881 = vmatpush2.msra.mxu0 0.0
  %882 = vmatprep.subr.mxu0 0.0
  %883 = vmatpush2.msra.mxu0 0.0
  %884 = vmatprep.subr.mxu0 0.0
  %885 = vmatpush2.msra.mxu0 0.0
  %886 = vmatprep.subr.mxu0 0.0
  %887 = vmatpush2.msra.mxu0 0.0
  %888 = vmatprep.mubr.f32.mxu0 0.0
  %889 = vmatmul.mubr.f32.gmra.mxu0 %v813
  %v890 = vpop.f32.mrf.mxu0
  %v891 = vadd.f32 %v795, %v890
  %v892 = vpop.f32.mrf.mxu0
  %893 = vmatprep.mubr.f32.mxu0 0.0
  %894 = vmatmul.mubr.f32.gmra.mxu0 %v816
  %v895 = vpop.f32.mrf.mxu0
  %v896 = vadd.f32 %v800, %v895
  %v897 = vpop.f32.mrf.mxu0
  %898 = vmatprep.mubr.f32.mxu0 0.0
  %899 = vmatmul.mubr.f32.gmra.mxu0 %v819
  %v900 = vpop.f32.mrf.mxu0
  %v901 = vadd.f32 %v805, %v900
  %v902 = vpop.f32.mrf.mxu0
  %903 = vmatprep.mubr.f32.mxu0 0.0
  %904 = vmatmul.mubr.f32.gmra.mxu0 %v822
  %v905 = vpop.f32.mrf.mxu0
  %v906 = vadd.f32 %v810, %v905
  %v907 = vpop.f32.mrf.mxu0
  %908 = vdwg.mxu0
  %v909 = vadd.f32 %v891, %v771
  %v910 = vadd.f32 %v896, %v772
  %v911 = vadd.f32 %v901, %v773
  %v912 = vadd.f32 %v906, %v774
  %v913 = vmax.f32 %v909, 0.0
  %v914 = vmax.f32 %v910, 0.0
  %v915 = vmax.f32 %v911, 0.0
  %v916 = vmax.f32 %v912, 0.0
  %v917 = vld [vmem:[%s0] sm:$0xff]
  %v918 = vld [vmem:[%s0 + $0x8] sm:$0xff]
  %v919 = vld [vmem:[%s0 + $0x10] sm:$0xff]
  %v920 = vld [vmem:[%s0 + $0x18] sm:$0xff]
  %v921 = vmul.f32 %v917, %v913
  %v922 = vmul.f32 %v918, %v914
  %v923 = vmul.f32 %v919, %v915
  %v924 = vmul.f32 %v920, %v916
  %v925 = vadd.f32 %v921, %v922
  %v926 = vadd.f32 %v925, %v923
  %v927 = vadd.f32 %v926, %v924
  %v928 = vrot.slane %v927, 4
  %v929 = vadd.f32 %v927, %v928
  %v930 = vrot.slane %v929, 2
  %v931 = vadd.f32 %v929, %v930
  %v932 = vrot.slane %v931, 1
  %v933 = vadd.f32 %v931, %v932
  %v934 = vld [vmem:[%s54] sm:$0xff]
  %v935 = vld [vmem:[%s54 + $0x8] sm:$0xff]
  %v936 = vld [vmem:[%s54 + $0x10] sm:$0xff]
  %v937 = vld [vmem:[%s54 + $0x18] sm:$0xff]
  %v938 = vmul.f32 %v934, %v913
  %v939 = vmul.f32 %v935, %v914
  %v940 = vmul.f32 %v936, %v915
  %v941 = vmul.f32 %v937, %v916
  %v942 = vadd.f32 %v938, %v939
  %v943 = vadd.f32 %v942, %v940
  %v944 = vadd.f32 %v943, %v941
  %v945 = vrot.slane %v944, 4
  %v946 = vadd.f32 %v944, %v945
  %v947 = vrot.slane %v946, 2
  %v948 = vadd.f32 %v946, %v947
  %v949 = vrot.slane %v948, 1
  %v950 = vadd.f32 %v948, %v949
  %v951 = vld [vmem:[%s72] sm:$0xff]
  %v952 = vld [vmem:[%s72 + $0x8] sm:$0xff]
  %v953 = vld [vmem:[%s72 + $0x10] sm:$0xff]
  %v954 = vld [vmem:[%s72 + $0x18] sm:$0xff]
  %v955 = vmul.f32 %v951, %v913
  %v956 = vmul.f32 %v952, %v914
  %v957 = vmul.f32 %v953, %v915
  %v958 = vmul.f32 %v954, %v916
  %v959 = vadd.f32 %v955, %v956
  %v960 = vadd.f32 %v959, %v957
  %v961 = vadd.f32 %v960, %v958
  %v962 = vrot.slane %v961, 4
  %v963 = vadd.f32 %v961, %v962
  %v964 = vrot.slane %v963, 2
  %v965 = vadd.f32 %v963, %v964
  %v966 = vrot.slane %v965, 1
  %v967 = vadd.f32 %v965, %v966
  %v968 = vld [vmem:[%s90] sm:$0xff]
  %v969 = vld [vmem:[%s90 + $0x8] sm:$0xff]
  %v970 = vld [vmem:[%s90 + $0x10] sm:$0xff]
  %v971 = vld [vmem:[%s90 + $0x18] sm:$0xff]
  %v972 = vmul.f32 %v968, %v913
  %v973 = vmul.f32 %v969, %v914
  %v974 = vmul.f32 %v970, %v915
  %v975 = vmul.f32 %v971, %v916
  %v976 = vadd.f32 %v972, %v973
  %v977 = vadd.f32 %v976, %v974
  %v978 = vadd.f32 %v977, %v975
  %v979 = vrot.slane %v978, 4
  %v980 = vadd.f32 %v978, %v979
  %v981 = vrot.slane %v980, 2
  %v982 = vadd.f32 %v980, %v981
  %v983 = vrot.slane %v982, 1
  %v984 = vadd.f32 %v982, %v983
  %v985 = vld [vmem:[%s108] sm:$0xff]
  %v986 = vld [vmem:[%s108 + $0x8] sm:$0xff]
  %v987 = vld [vmem:[%s108 + $0x10] sm:$0xff]
  %v988 = vld [vmem:[%s108 + $0x18] sm:$0xff]
  %v989 = vmul.f32 %v985, %v913
  %v990 = vmul.f32 %v986, %v914
  %v991 = vmul.f32 %v987, %v915
  %v992 = vmul.f32 %v988, %v916
  %v993 = vadd.f32 %v989, %v990
  %v994 = vadd.f32 %v993, %v991
  %v995 = vadd.f32 %v994, %v992
  %v996 = vrot.slane %v995, 4
  %v997 = vadd.f32 %v995, %v996
  %v998 = vrot.slane %v997, 2
  %v999 = vadd.f32 %v997, %v998
  %v1000 = vrot.slane %v999, 1
  %v1001 = vadd.f32 %v999, %v1000
  %v1002 = vld [vmem:[%s126] sm:$0xff]
  %v1003 = vld [vmem:[%s126 + $0x8] sm:$0xff]
  %v1004 = vld [vmem:[%s126 + $0x10] sm:$0xff]
  %v1005 = vld [vmem:[%s126 + $0x18] sm:$0xff]
  %v1006 = vmul.f32 %v1002, %v913
  %v1007 = vmul.f32 %v1003, %v914
  %v1008 = vmul.f32 %v1004, %v915
  %v1009 = vmul.f32 %v1005, %v916
  %v1010 = vadd.f32 %v1006, %v1007
  %v1011 = vadd.f32 %v1010, %v1008
  %v1012 = vadd.f32 %v1011, %v1009
  %v1013 = vrot.slane %v1012, 4
  %v1014 = vadd.f32 %v1012, %v1013
  %v1015 = vrot.slane %v1014, 2
  %v1016 = vadd.f32 %v1014, %v1015
  %v1017 = vrot.slane %v1016, 1
  %v1018 = vadd.f32 %v1016, %v1017
  %v1019 = vld [vmem:[%s144] sm:$0xff]
  %v1020 = vld [vmem:[%s144 + $0x8] sm:$0xff]
  %v1021 = vld [vmem:[%s144 + $0x10] sm:$0xff]
  %v1022 = vld [vmem:[%s144 + $0x18] sm:$0xff]
  %v1023 = vmul.f32 %v1019, %v913
  %v1024 = vmul.f32 %v1020, %v914
  %v1025 = vmul.f32 %v1021, %v915
  %v1026 = vmul.f32 %v1022, %v916
  %v1027 = vadd.f32 %v1023, %v1024
  %v1028 = vadd.f32 %v1027, %v1025
  %v1029 = vadd.f32 %v1028, %v1026
  %v1030 = vrot.slane %v1029, 4
  %v1031 = vadd.f32 %v1029, %v1030
  %v1032 = vrot.slane %v1031, 2
  %v1033 = vadd.f32 %v1031, %v1032
  %v1034 = vrot.slane %v1033, 1
  %v1035 = vadd.f32 %v1033, %v1034
  %v1036 = vld [vmem:[%s162] sm:$0xff]
  %v1037 = vld [vmem:[%s162 + $0x8] sm:$0xff]
  %v1038 = vld [vmem:[%s162 + $0x10] sm:$0xff]
  %v1039 = vld [vmem:[%s162 + $0x18] sm:$0xff]
  %v1040 = vmul.f32 %v1036, %v913
  %v1041 = vmul.f32 %v1037, %v914
  %v1042 = vmul.f32 %v1038, %v915
  %v1043 = vmul.f32 %v1039, %v916
  %v1044 = vadd.f32 %v1040, %v1041
  %v1045 = vadd.f32 %v1044, %v1042
  %v1046 = vadd.f32 %v1045, %v1043
  %v1047 = vrot.slane %v1046, 4
  %v1048 = vadd.f32 %v1046, %v1047
  %v1049 = vrot.slane %v1048, 2
  %v1050 = vadd.f32 %v1048, %v1049
  %v1051 = vrot.slane %v1050, 1
  %v1052 = vadd.f32 %v1050, %v1051
  %v1053 = vsel %vm180, %v933, %v950
  %v1054 = vsel %vm182, %v1053, %v967
  %v1055 = vsel %vm184, %v1054, %v984
  %v1056 = vsel %vm186, %v1055, %v1001
  %v1057 = vsel %vm188, %v1056, %v1018
  %v1058 = vsel %vm190, %v1057, %v1035
  %v1059 = vsel %vm192, %v1058, %v1052
  %v1060 = vsel %vm32, %v1059, -3.4028235e+38
  %v1061 = vrot.slane %v1060, 4
  %v1062 = vmax.f32 %v1060, %v1061
  %v1063 = vrot.slane %v1062, 2
  %v1064 = vmax.f32 %v1062, %v1063
  %v1065 = vrot.slane %v1064, 1
  %v1066 = vmax.f32 %v1064, %v1065
  %v1067 = vsub.f32 %v1060, %v1066
  %v1068 = vmul.f32 %v1067, 1.442695
  %v1069 = vpow.pop %v1068
  %v1070 = vrot.slane %v1069, 4
  %v1071 = vadd.f32 %v1069, %v1070
  %v1072 = vrot.slane %v1071, 2
  %v1073 = vadd.f32 %v1071, %v1072
  %v1074 = vrot.slane %v1073, 1
  %v1075 = vadd.f32 %v1073, %v1074
  %v1076 = vrcp.pop %v1075
  %v1077 = vmul.f32 %v1069, %v1076
  %v1078 = vld [vmem:[%s1] sm:$0xff]
  %v1079 = vld [vmem:[%s1 + $0x8] sm:$0xff]
  %v1080 = vld [vmem:[%s1 + $0x10] sm:$0xff]
  %v1081 = vld [vmem:[%s1 + $0x18] sm:$0xff]
  %v1082 = vlaneseq
  %v1083 = vshrl.u32 %v1082, 7
  %v1084 = vsub.s32 0, %v1083
  %v1085 = vrot.slane %v1077, %v1084
  %v1086 = vmul.f32 %v1078, %v1085
  %v1087 = vmul.f32 %v1079, %v1085
  %v1088 = vmul.f32 %v1080, %v1085
  %v1089 = vmul.f32 %v1081, %v1085
  %v1090 = vadd.f32 %v1086, 0.0
  %v1091 = vadd.f32 %v1087, 0.0
  %v1092 = vadd.f32 %v1088, 0.0
  %v1093 = vadd.f32 %v1089, 0.0
  %v1094 = vld [vmem:[%s228] sm:$0xff]
  %v1095 = vld [vmem:[%s228 + $0x8] sm:$0xff]
  %v1096 = vld [vmem:[%s228 + $0x10] sm:$0xff]
  %v1097 = vld [vmem:[%s228 + $0x18] sm:$0xff]
  %v1098 = vlaneseq
  %v1099 = vshrl.u32 %v1098, 7
  %v1100 = vsub.s32 1, %v1099
  %v1101 = vrot.slane %v1077, %v1100
  %v1102 = vmul.f32 %v1094, %v1101
  %v1103 = vmul.f32 %v1095, %v1101
  %v1104 = vmul.f32 %v1096, %v1101
  %v1105 = vmul.f32 %v1097, %v1101
  %v1106 = vadd.f32 %v1090, %v1102
  %v1107 = vadd.f32 %v1091, %v1103
  %v1108 = vadd.f32 %v1092, %v1104
  %v1109 = vadd.f32 %v1093, %v1105
  %v1110 = vld [vmem:[%s245] sm:$0xff]
  %v1111 = vld [vmem:[%s245 + $0x8] sm:$0xff]
  %v1112 = vld [vmem:[%s245 + $0x10] sm:$0xff]
  %v1113 = vld [vmem:[%s245 + $0x18] sm:$0xff]
  %v1114 = vlaneseq
  %v1115 = vshrl.u32 %v1114, 7
  %v1116 = vsub.s32 2, %v1115
  %v1117 = vrot.slane %v1077, %v1116
  %v1118 = vmul.f32 %v1110, %v1117
  %v1119 = vmul.f32 %v1111, %v1117
  %v1120 = vmul.f32 %v1112, %v1117
  %v1121 = vmul.f32 %v1113, %v1117
  %v1122 = vadd.f32 %v1106, %v1118
  %v1123 = vadd.f32 %v1107, %v1119
  %v1124 = vadd.f32 %v1108, %v1120
  %v1125 = vadd.f32 %v1109, %v1121
  %v1126 = vld [vmem:[%s262] sm:$0xff]
  %v1127 = vld [vmem:[%s262 + $0x8] sm:$0xff]
  %v1128 = vld [vmem:[%s262 + $0x10] sm:$0xff]
  %v1129 = vld [vmem:[%s262 + $0x18] sm:$0xff]
  %v1130 = vlaneseq
  %v1131 = vshrl.u32 %v1130, 7
  %v1132 = vsub.s32 3, %v1131
  %v1133 = vrot.slane %v1077, %v1132
  %v1134 = vmul.f32 %v1126, %v1133
  %v1135 = vmul.f32 %v1127, %v1133
  %v1136 = vmul.f32 %v1128, %v1133
  %v1137 = vmul.f32 %v1129, %v1133
  %v1138 = vadd.f32 %v1122, %v1134
  %v1139 = vadd.f32 %v1123, %v1135
  %v1140 = vadd.f32 %v1124, %v1136
  %v1141 = vadd.f32 %v1125, %v1137
  %v1142 = vld [vmem:[%s279] sm:$0xff]
  %v1143 = vld [vmem:[%s279 + $0x8] sm:$0xff]
  %v1144 = vld [vmem:[%s279 + $0x10] sm:$0xff]
  %v1145 = vld [vmem:[%s279 + $0x18] sm:$0xff]
  %v1146 = vlaneseq
  %v1147 = vshrl.u32 %v1146, 7
  %v1148 = vsub.s32 4, %v1147
  %v1149 = vrot.slane %v1077, %v1148
  %v1150 = vmul.f32 %v1142, %v1149
  %v1151 = vmul.f32 %v1143, %v1149
  %v1152 = vmul.f32 %v1144, %v1149
  %v1153 = vmul.f32 %v1145, %v1149
  %v1154 = vadd.f32 %v1138, %v1150
  %v1155 = vadd.f32 %v1139, %v1151
  %v1156 = vadd.f32 %v1140, %v1152
  %v1157 = vadd.f32 %v1141, %v1153
  %v1158 = vld [vmem:[%s296] sm:$0xff]
  %v1159 = vld [vmem:[%s296 + $0x8] sm:$0xff]
  %v1160 = vld [vmem:[%s296 + $0x10] sm:$0xff]
  %v1161 = vld [vmem:[%s296 + $0x18] sm:$0xff]
  %v1162 = vlaneseq
  %v1163 = vshrl.u32 %v1162, 7
  %v1164 = vsub.s32 5, %v1163
  %v1165 = vrot.slane %v1077, %v1164
  %v1166 = vmul.f32 %v1158, %v1165
  %v1167 = vmul.f32 %v1159, %v1165
  %v1168 = vmul.f32 %v1160, %v1165
  %v1169 = vmul.f32 %v1161, %v1165
  %v1170 = vadd.f32 %v1154, %v1166
  %v1171 = vadd.f32 %v1155, %v1167
  %v1172 = vadd.f32 %v1156, %v1168
  %v1173 = vadd.f32 %v1157, %v1169
  %v1174 = vld [vmem:[%s313] sm:$0xff]
  %v1175 = vld [vmem:[%s313 + $0x8] sm:$0xff]
  %v1176 = vld [vmem:[%s313 + $0x10] sm:$0xff]
  %v1177 = vld [vmem:[%s313 + $0x18] sm:$0xff]
  %v1178 = vlaneseq
  %v1179 = vshrl.u32 %v1178, 7
  %v1180 = vsub.s32 6, %v1179
  %v1181 = vrot.slane %v1077, %v1180
  %v1182 = vmul.f32 %v1174, %v1181
  %v1183 = vmul.f32 %v1175, %v1181
  %v1184 = vmul.f32 %v1176, %v1181
  %v1185 = vmul.f32 %v1177, %v1181
  %v1186 = vadd.f32 %v1170, %v1182
  %v1187 = vadd.f32 %v1171, %v1183
  %v1188 = vadd.f32 %v1172, %v1184
  %v1189 = vadd.f32 %v1173, %v1185
  %v1190 = vld [vmem:[%s330] sm:$0xff]
  %v1191 = vld [vmem:[%s330 + $0x8] sm:$0xff]
  %v1192 = vld [vmem:[%s330 + $0x10] sm:$0xff]
  %v1193 = vld [vmem:[%s330 + $0x18] sm:$0xff]
  %v1194 = vlaneseq
  %v1195 = vshrl.u32 %v1194, 7
  %v1196 = vsub.s32 7, %v1195
  %v1197 = vrot.slane %v1077, %v1196
  %v1198 = vmul.f32 %v1190, %v1197
  %v1199 = vmul.f32 %v1191, %v1197
  %v1200 = vmul.f32 %v1192, %v1197
  %v1201 = vmul.f32 %v1193, %v1197
  %v1202 = vadd.f32 %v1186, %v1198
  %v1203 = vadd.f32 %v1187, %v1199
  %v1204 = vadd.f32 %v1188, %v1200
  %v1205 = vadd.f32 %v1189, %v1201
  %s1206 = scalar_lea.vmem %s6, 16
  %1207 = vst [vmem:[%s1206] sm:$0xff] %v1077
  %s1208 = scalar_lea.vmem %s7, 64
  %1209 = vst [vmem:[%s1208] sm:$0xff] %v1202
  %1210 = vst [vmem:[%s1208 + $0x8] sm:$0xff] %v1203
  %1211 = vst [vmem:[%s1208 + $0x10] sm:$0xff] %v1204
  %1212 = vst [vmem:[%s1208 + $0x18] sm:$0xff] %v1205
  // Predicated region
  $region26: #{vlml_forward.1} parent=0 // pred_check
    _
  $region27: #{vlml_forward.1} parent=0 // pred_check_branch
    %1214 = sbr.rel (0) target = $region29
  $region28: #{vlml_forward.1} parent=0 // pred_region
    _
  $region29: #{vlml_forward.1} parent=0 // pred_fallthru
    _
  // Predicated region
  $region30: #{vlml_forward.1} parent=0 // pred_check
    _
  $region31: #{vlml_forward.1} parent=0 // pred_check_branch
    %1216 = sbr.rel (0) target = $region33
  $region32: #{vlml_forward.1} parent=0 // pred_region
    _
  $region33: #{vlml_forward.1} parent=0 // pred_fallthru
    _
  // Predicated region
  $region34: #{vlml_forward.1} parent=0 // pred_check
    _
  $region35: #{vlml_forward.1} parent=0 // pred_check_branch
    %1218 = sbr.rel (0) target = $region37
  $region36: #{vlml_forward.1} parent=0 // pred_region
    _
  $region37: #{vlml_forward.1} parent=0 // pred_fallthru
    _
  // Predicated region
  $region38: #{vlml_forward.1} parent=0 // pred_check
    _
  $region39: #{vlml_forward.1} parent=0 // pred_check_branch
    %1220 = sbr.rel (0) target = $region41
  $region40: #{vlml_forward.1} parent=0 // pred_region
    _
  $region41: #{vlml_forward.1} parent=0 // pred_fallthru
    _

</llo_original>
